<compile_context>
chip_gen: v7x
topology: tpu7x:2x2x1
jax: 0.10.0
libtpu: 0.0.40
codegen_flags: <defaults>
</compile_context>

<pallas_src>
import functools
import math

import jax
import jax.numpy as jnp
from jax.experimental import pallas as pl
from jax.experimental.pallas import tpu as pltpu

_MASK_NEG = -1e30  # finite "masked" additive score (avoids -inf -> NaN rows)


# ----------------------------- in-kernel helpers ---------------------------------
def _rms_norm(x, w, eps):
    # CPM-Live rms_layernorm (fp32 statistics)
    var = jnp.mean(x * x, axis=-1, keepdims=True)
    return x * jax.lax.rsqrt(var + eps) * w


def _gelu(x):
    # TODO(synk): torch.nn.GELU() is the exact erf-GELU; tanh approximation used because
    # erf lowering availability on Mosaic is version dependent (max dev ~1e-3).
    c = 0.7978845608028654  # sqrt(2/pi)
    return 0.5 * x * (1.0 + jnp.tanh(c * (x + 0.044715 * x * x * x)))


# -------------------- kernel A: RMSNorm + fused QKV projection --------------------
def qkv_proj_kernel(h_ref, ln_ref, w_ref, q_ref, k_ref, v_ref, *,
                    heads_per_blk, dim_head, eps):
    dh = dim_head
    x = _rms_norm(h_ref[0], ln_ref[...], eps).astype(jnp.bfloat16)            # (ts, D)
    qkv = jnp.dot(x, w_ref[...], preferred_element_type=jnp.float32)          # (ts, hg*3*dh)
    # per-head split is off the attention hot path (once per token tile, not per kv step)
    for h in range(heads_per_blk):
        base = 3 * dh * h
        q_ref[0, h] = qkv[:, base:base + dh].astype(jnp.bfloat16)
        k_ref[0, h] = qkv[:, base + dh:base + 2 * dh].astype(jnp.bfloat16)
        v_ref[0, h] = qkv[:, base + 2 * dh:base + 3 * dh].astype(jnp.bfloat16)


# ----------------------- kernel B: flash attention (per head) ---------------------
def flash_attn_kernel(kvmap_ref, q_ref, k_ref, v_ref, pb_ref, mb_ref, ctx_ref,
                      m_sc, l_sc, acc_sc):
    b = pl.program_id(0)
    qi = pl.program_id(1)
    ki = pl.program_id(2)
    nq = pl.num_programs(1)
    nk = pl.num_programs(2)

    @pl.when(ki == 0)
    def _init():
        m_sc[...] = jnp.full(m_sc.shape, _MASK_NEG, m_sc.dtype)
        l_sc[...] = jnp.zeros_like(l_sc)
        acc_sc[...] = jnp.zeros_like(acc_sc)

    # skip kv tiles that contain no valid key for this q tile (causal: ~2x fewer tiles)
    @pl.when(kvmap_ref[(b * nq + qi) * nk + ki] > 0)
    def _step():
        s = jnp.einsum("hqd,hkd->hqk", q_ref[0], k_ref[0],
                       preferred_element_type=jnp.float32)                    # (H, tq, tk)
        # biases are precomputed bf16 additive terms (no compare/select in the hot loop)
        s = s + pb_ref[...].astype(jnp.float32) + mb_ref[...].astype(jnp.float32)
        m_prev = m_sc[...]
        m_new = jnp.maximum(m_prev, jnp.max(s, axis=-1, keepdims=True))
        alpha = jnp.exp(m_prev - m_new)
        p = jnp.exp(s - m_new)            # masked entries underflow to exactly 0
        l_sc[...] = alpha * l_sc[...] + jnp.sum(p, axis=-1, keepdims=True)
        acc_sc[...] = alpha * acc_sc[...] + jnp.einsum(
            "hqk,hkd->hqd", p.astype(jnp.bfloat16), v_ref[0],
            preferred_element_type=jnp.float32)
        m_sc[...] = m_new

    @pl.when(ki == nk - 1)
    def _finalize():
        l = l_sc[...]
        # rows with no valid key anywhere have l == 0 -> output exactly 0 (torch NaN->0)
        inv_l = pl.reciprocal(jnp.where(l > 0.0, l, 1.0), approx=True)        # EUP
        ctx_ref[0] = (acc_sc[...] * inv_l).astype(ctx_ref.dtype)


# ------------- kernel C: attn out-proj + residual + streamed FFN ------------------
def out_ffn_kernel(h_ref, ctx_ref, wo_ref, ln_ref, w0_ref, w1_ref, wout_ref, out_ref,
                   hmid_sc, x2_sc, acc_sc, *, eps):
    fi = pl.program_id(2)
    nf = pl.num_programs(2)

    @pl.when(fi == 0)
    def _init():
        # single K=H*dh MXU matmul for the attention output projection
        att = jnp.dot(ctx_ref[0], wo_ref[...], preferred_element_type=jnp.float32)
        h_mid = h_ref[0] + att
        hmid_sc[...] = h_mid
        x2_sc[...] = _rms_norm(h_mid, ln_ref[...], eps).astype(jnp.bfloat16)
        acc_sc[...] = jnp.zeros_like(acc_sc)

    # FFN streamed over dim_ff: (D, tf) gate/up slices and (tf, D) down slice per step
    x2 = x2_sc[...]
    g = jnp.dot(x2, w0_ref[...], preferred_element_type=jnp.float32)          # (tq, tf)
    u = jnp.dot(x2, w1_ref[...], preferred_element_type=jnp.float32)          # (tq, tf)
    act = (_gelu(g) * u).astype(jnp.bfloat16)
    acc_sc[...] += jnp.dot(act, wout_ref[...], preferred_element_type=jnp.float32)

    @pl.when(fi == nf - 1)
    def _fin():
        out_ref[0] = (hmid_sc[...] + acc_sc[...]).astype(out_ref.dtype)


# ------------------------- weight packing (wrapper + ref share math) ---------------
def _pack_params(params, num_heads, dim_head):
    """torch-layout (out, in) fp32 weights -> pre-transposed, pre-scaled, fused bf16."""
    H, dh = num_heads, dim_head
    HD = H * dh
    D = params["wq"].shape[1]
    F = params["w0"].shape[0]
    s_in = 1.0 / math.sqrt(D)

    # head-major fused QKV: columns [h*3dh : (h+1)*3dh] = [q_h | k_h | v_h]
    wq = (params["wq"] * s_in).reshape(H, dh, D)
    wk = (params["wk"] * s_in).reshape(H, dh, D)
    wv = (params["wv"] * s_in).reshape(H, dh, D)
    wqkv = jnp.concatenate([wq, wk, wv], axis=1)                    # (H, 3*dh, D)
    wqkv = jnp.transpose(wqkv, (2, 0, 1)).reshape(D, H * 3 * dh)    # (D, 3*HD)

    return {
        "ln_att": params["ln_att"].reshape(1, D).astype(jnp.float32),
        "ln_ffn": params["ln_ffn"].reshape(1, D).astype(jnp.float32),
        "wqkv": wqkv.astype(jnp.bfloat16),                                          # (D, 3HD)
        "wo":   (params["wo"].T * (1.0 / math.sqrt(HD))).astype(jnp.bfloat16),      # (HD, D)
        "w0":   (params["w0"].T * s_in).astype(jnp.bfloat16),                       # (D, F)
        "w1":   (params["w1"].T * s_in).astype(jnp.bfloat16),                       # (D, F)
        "wout": (params["wout"].T * (1.0 / math.sqrt(F))).astype(jnp.bfloat16),     # (F, D)
    }


def _vmem_limit_bytes():
    # per-generation VMEM budget with headroom for Mosaic internal scratch
    try:
        cap = int(pltpu.get_tpu_info().vmem_capacity_bytes)
    except Exception:
        cap = 64 * 1024 * 1024  # conservative (v7x-sized) fallback
    return int(max(32 * 1024 * 1024, min(cap - 8 * 1024 * 1024, 112 * 1024 * 1024)))


# ------------------------------------ wrapper -------------------------------------
def transformer_block(hidden, mask, pos_bias, params, *, num_heads, dim_head, eps=1e-6,
                      block_q=256, block_k=256, block_f=512, qkv_head_block=4):
    B, S, D = hidden.shape
    H, dh = num_heads, dim_head
    HD = H * dh
    pk = _pack_params(params, H, dh)
    F = pk["w0"].shape[1]

    tq = min(block_q, S)
    tk = min(block_k, S)
    tf = min(block_f, F)
    hg = min(qkv_head_block, H)
    assert S % tq == 0 and S % tk == 0 and F % tf == 0 and H % hg == 0
    nq, nk, nf = S // tq, S // tk, F // tf
    vmem_limit = _vmem_limit_bytes()

    # bf16 additive biases built once in the wrapper (halves bias HBM stream)
    pb_bf = pos_bias.astype(jnp.bfloat16)                                    # (H, S, S)
    mask_bias = jnp.where(mask > 0, 0.0, _MASK_NEG).astype(jnp.bfloat16)     # (B, S, S)
    # per-(b, q-tile, kv-tile) "has any valid key" flag (scalar-prefetched, SMEM)
    kv_any = (mask.reshape(B, nq, tq, nk, tk).max(axis=(2, 4)) > 0
              ).astype(jnp.int32).reshape(-1)

    # ---- kernel A: RMSNorm + fused QKV projection -> Q/K/V (B, H, S, dh) bf16 ----
    q, k, v = pl.pallas_call(
        functools.partial(qkv_proj_kernel, heads_per_blk=hg, dim_head=dh, eps=eps),
        out_shape=[jax.ShapeDtypeStruct((B, H, S, dh), jnp.bfloat16)] * 3,
        grid=(B, nq, H // hg),
        in_specs=[
            pl.BlockSpec((1, tq, D), lambda b, si, g: (b, si, 0)),
            pl.BlockSpec((1, D), lambda b, si, g: (0, 0)),
            pl.BlockSpec((D, hg * 3 * dh), lambda b, si, g: (0, g)),  # streamed weight slice
        ],
        out_specs=[pl.BlockSpec((1, hg, tq, dh), lambda b, si, g: (b, g, si, 0))] * 3,
        compiler_params=pltpu.CompilerParams(
            dimension_semantics=("parallel", "parallel", "parallel"),
            vmem_limit_bytes=vmem_limit),
    )(hidden, pk["ln_att"], pk["wqkv"])

    # ---- kernel B: flash attention -> per-head context (B, H, S, dh) bf16 ----
    ctx = pl.pallas_call(
        flash_attn_kernel,
        out_shape=jax.ShapeDtypeStruct((B, H, S, dh), jnp.bfloat16),
        grid_spec=pltpu.PrefetchScalarGridSpec(
            num_scalar_prefetch=1,
            grid=(B, nq, nk),
            in_specs=[
                pl.BlockSpec((1, H, tq, dh), lambda b, qi, ki, kvm: (b, 0, qi, 0)),
                pl.BlockSpec((1, H, tk, dh), lambda b, qi, ki, kvm: (b, 0, ki, 0)),
                pl.BlockSpec((1, H, tk, dh), lambda b, qi, ki, kvm: (b, 0, ki, 0)),
                pl.BlockSpec((H, tq, tk), lambda b, qi, ki, kvm: (0, qi, ki)),
                pl.BlockSpec((1, tq, tk), lambda b, qi, ki, kvm: (b, qi, ki)),
            ],
            out_specs=pl.BlockSpec((1, H, tq, dh), lambda b, qi, ki, kvm: (b, 0, qi, 0)),
            scratch_shapes=[
                pltpu.VMEM((H, tq, 1), jnp.float32),    # running max
                pltpu.VMEM((H, tq, 1), jnp.float32),    # running denominator
                pltpu.VMEM((H, tq, dh), jnp.float32),   # fp32 attention accumulator
            ]),
        compiler_params=pltpu.CompilerParams(
            dimension_semantics=("parallel", "parallel", "arbitrary"),
            vmem_limit_bytes=vmem_limit),
    )(kv_any, q, k, v, pb_bf, mask_bias)

    # (B, H, S, dh) -> (B, S, H*dh): cheap XLA relayout between kernels so kernel C's
    # output projection is a single full-K MXU matmul (no per-head matmuls / concat).
    ctx_flat = ctx.transpose(0, 2, 1, 3).reshape(B, S, HD)

    # ---- kernel C: attention out-proj + residual + RMSNorm + streamed FFN ----
    def run_out_ffn(single_buffer_wo):
        if single_buffer_wo:
            # constant-index weight -> single-buffered (halves its VMEM residency on v7x)
            wo_spec = pl.BlockSpec((HD, D), lambda b, qi, fi: (0, 0),
                                   pipeline_mode=pl.Buffered(1))
        else:
            wo_spec = pl.BlockSpec((HD, D), lambda b, qi, fi: (0, 0))
        return pl.pallas_call(
            functools.partial(out_ffn_kernel, eps=eps),
            out_shape=jax.ShapeDtypeStruct((B, S, D), hidden.dtype),
            grid=(B, nq, nf),
            in_specs=[
                pl.BlockSpec((1, tq, D), lambda b, qi, fi: (b, qi, 0)),   # residual input
                pl.BlockSpec((1, tq, HD), lambda b, qi, fi: (b, qi, 0)),  # attention context
                wo_spec,                                                  # (HD, D)
                pl.BlockSpec((1, D), lambda b, qi, fi: (0, 0)),           # ln_ffn
                pl.BlockSpec((D, tf), lambda b, qi, fi: (0, fi)),         # w0 slice (gate)
                pl.BlockSpec((D, tf), lambda b, qi, fi: (0, fi)),         # w1 slice (up)
                pl.BlockSpec((tf, D), lambda b, qi, fi: (fi, 0)),         # wout slice (down)
            ],
            out_specs=pl.BlockSpec((1, tq, D), lambda b, qi, fi: (b, qi, 0)),
            scratch_shapes=[
                pltpu.VMEM((tq, D), jnp.float32),    # h_mid (attention residual)
                pltpu.VMEM((tq, D), jnp.bfloat16),   # ln_ffn(h_mid)
                pltpu.VMEM((tq, D), jnp.float32),    # fp32 FFN accumulator
            ],
            compiler_params=pltpu.CompilerParams(
                dimension_semantics=("parallel", "parallel", "arbitrary"),
                vmem_limit_bytes=vmem_limit),
        )(hidden, ctx_flat, pk["wo"], pk["ln_ffn"], pk["w0"], pk["w1"], pk["wout"])

    try:
        return jax.block_until_ready(run_out_ffn(True))
    except Exception:
        # pipeline_mode=pl.Buffered(1) not supported by this JAX build -> default buffering
        return run_out_ffn(False)


# ------------------------------ pure-JAX reference --------------------------------
def transformer_block_ref(hidden, mask, pos_bias, params, *, num_heads, dim_head, eps=1e-6):
    """Same math as the torch module, with the same bf16-input / fp32-accum matmuls."""
    B, S, D = hidden.shape
    H, dh = num_heads, dim_head
    HD = H * dh
    F = params["w0"].shape[0]
    bf = jnp.bfloat16
    s_in = 1.0 / math.sqrt(D)

    wq = (params["wq"].T * s_in).astype(bf)
    wk = (params["wk"].T * s_in).astype(bf)
    wv = (params["wv"].T * s_in).astype(bf)
    wo = (params["wo"].T * (1.0 / math.sqrt(HD))).astype(bf)
    w0 = (params["w0"].T * s_in).astype(bf)
    w1 = (params["w1"].T * s_in).astype(bf)
    wout = (params["wout"].T * (1.0 / math.sqrt(F))).astype(bf)
    ln_att = params["ln_att"].astype(jnp.float32)
    ln_ffn = params["ln_ffn"].astype(jnp.float32)

    def rms(x, w):
        var = jnp.mean(x * x, axis=-1, keepdims=True)
        return x * jax.lax.rsqrt(var + eps) * w

    def mm(x, w):  # bf16 operands, fp32 accumulation (scale already folded into w)
        return jnp.einsum("...k,kn->...n", x.astype(bf), w,
                          preferred_element_type=jnp.float32)

    x = rms(hidden, ln_att)
    q = mm(x, wq).reshape(B, S, H, dh).transpose(0, 2, 1, 3).astype(bf)
    k = mm(x, wk).reshape(B, S, H, dh).transpose(0, 2, 1, 3).astype(bf)
    v = mm(x, wv).reshape(B, S, H, dh).transpose(0, 2, 1, 3).astype(bf)
    sc = jnp.einsum("bhqd,bhkd->bhqk", q, k, preferred_element_type=jnp.float32)
    sc = sc + pos_bias.astype(bf).astype(jnp.float32)[None]
    sc = sc + jnp.where(mask > 0, 0.0, _MASK_NEG).astype(bf).astype(jnp.float32)[:, None]
    p = jax.nn.softmax(sc, axis=-1)
    ctx = jnp.einsum("bhqk,bhkd->bhqd", p.astype(bf), v,
                     preferred_element_type=jnp.float32)
    ctx = ctx.astype(bf).transpose(0, 2, 1, 3).reshape(B, S, HD)
    h_mid = hidden + mm(ctx, wo)

    x2 = rms(h_mid, ln_ffn)
    g = mm(x2, w0)
    u = mm(x2, w1)
    act = _gelu(g) * u
    return h_mid + mm(act, wout)


# --------------------------------------- main --------------------------------------
if __name__ == "__main__":
    batch, seq = 2, 256          # seq=256 with 128-blocks exercises the flash loop + tile skip
    dim_model, dim_ff = 32, 64
    num_heads, dim_head = 4, 8
    eps = 1e-6

    key = jax.random.PRNGKey(0)
    keys = jax.random.split(key, 10)
    std = 0.02  # CPM-Live Linear init_std

    def w(k, dim_out, dim_in):  # torch Linear weight layout: (dim_out, dim_in)
        return jax.random.normal(k, (dim_out, dim_in), jnp.float32) * std

    params = {
        "ln_att": jnp.ones((dim_model,), jnp.float32),   # LayerNorm init_var = 1.0
        "ln_ffn": jnp.ones((dim_model,), jnp.float32),
        "wq":   w(keys[0], num_heads * dim_head, dim_model),
        "wk":   w(keys[1], num_heads * dim_head, dim_model),
        "wv":   w(keys[2], num_heads * dim_head, dim_model),
        "wo":   w(keys[3], dim_model, num_heads * dim_head),
        "w0":   w(keys[4], dim_ff, dim_model),
        "w1":   w(keys[5], dim_ff, dim_model),
        "wout": w(keys[6], dim_model, dim_ff),
    }

    hidden = jax.random.normal(keys[7], (batch, seq, dim_model), jnp.float32)
    causal = (jnp.arange(seq)[:, None] >= jnp.arange(seq)[None, :]).astype(jnp.float32)
    mask = jnp.broadcast_to(causal, (batch, seq, seq))
    pos_bias = jax.random.normal(keys[8], (num_heads, seq, seq), jnp.float32) * 0.1

    out = transformer_block(hidden, mask, pos_bias, params,
                            num_heads=num_heads, dim_head=dim_head, eps=eps,
                            block_q=128, block_k=128)
    out = jax.block_until_ready(out)

    ref = transformer_block_ref(hidden, mask, pos_bias, params,
                                num_heads=num_heads, dim_head=dim_head, eps=eps)
    ref = jax.block_until_ready(ref)

    assert out.shape == (batch, seq, dim_model)
    max_diff = float(jnp.max(jnp.abs(out - ref)))
    assert jnp.allclose(out, ref, rtol=3e-3, atol=3e-3), f"max |diff| = {max_diff}"
    print("KERNEL_OK")
</pallas_src>

<mosaic_0001>
module attributes {stable_mosaic.version = 11 : i64} {
  func.func @qkv_proj_kernel(%arg0: i32, %arg1: i32, %arg2: i32, %arg3: memref<1x128x32xf32, #tpu.memory_space<vmem>>, %arg4: memref<1x32xf32, #tpu.memory_space<vmem>>, %arg5: memref<32x96xbf16, #tpu.memory_space<vmem>>, %arg6: memref<1x4x128x8xbf16, #tpu.memory_space<vmem>>, %arg7: memref<1x4x128x8xbf16, #tpu.memory_space<vmem>>, %arg8: memref<1x4x128x8xbf16, #tpu.memory_space<vmem>>) attributes {dimension_semantics = [#tpu.dimension_semantics<parallel>, #tpu.dimension_semantics<parallel>, #tpu.dimension_semantics<parallel>], iteration_bounds = array<i64: 2, 2, 1>, scalar_prefetch = 0 : i64, scratch_operands = 0 : i64, tpu.core_type = #tpu.core_type<tc>, window_params = [{transform_indices = @transform_0, window_bounds = array<i64: 1, 128, 32>}, {pipeline_mode = #tpu.pipeline_mode<synchronous>, transform_indices = @transform_1, window_bounds = array<i64: 1, 32>}, {transform_indices = @transform_2, window_bounds = array<i64: 32, 96>}, {transform_indices = @transform_3, window_bounds = array<i64: 1, 4, 128, 8>}, {transform_indices = @transform_4, window_bounds = array<i64: 1, 4, 128, 8>}, {transform_indices = @transform_5, window_bounds = array<i64: 1, 4, 128, 8>}]} {
    %c0 = arith.constant 0 : index
    %c0_0 = arith.constant 0 : index
    %c0_1 = arith.constant 0 : index
    %0 = vector.load %arg3[%c0, %c0_0, %c0_1] : memref<1x128x32xf32, #tpu.memory_space<vmem>>, vector<1x128x32xf32>
    %1 = vector.shape_cast %0 : vector<1x128x32xf32> to vector<128x32xf32>
    %c0_2 = arith.constant 0 : index
    %c0_3 = arith.constant 0 : index
    %2 = vector.load %arg4[%c0_2, %c0_3] : memref<1x32xf32, #tpu.memory_space<vmem>>, vector<1x32xf32>
    %3 = arith.mulf %1, %1 : vector<128x32xf32>
    %cst = arith.constant dense<0.000000e+00> : vector<128xf32>
    %4 = vector.multi_reduction <add>, %3, %cst [1] : vector<128x32xf32> to vector<128xf32>
    %5 = vector.shape_cast %4 : vector<128xf32> to vector<128x1xf32>
    %cst_4 = arith.constant 3.200000e+01 : f32
    %6 = vector.broadcast %cst_4 : f32 to vector<128x1xf32>
    %7 = arith.divf %5, %6 : vector<128x1xf32>
    %cst_5 = arith.constant 9.99999997E-7 : f32
    %8 = vector.broadcast %cst_5 : f32 to vector<128x1xf32>
    %9 = arith.addf %7, %8 : vector<128x1xf32>
    %10 = math.rsqrt %9 : vector<128x1xf32>
    %11 = vector.broadcast %10 : vector<128x1xf32> to vector<128x32xf32>
    %12 = arith.mulf %1, %11 : vector<128x32xf32>
    %13 = vector.broadcast %2 : vector<1x32xf32> to vector<128x32xf32>
    %14 = arith.mulf %12, %13 : vector<128x32xf32>
    %15 = arith.truncf %14 : vector<128x32xf32> to vector<128x32xbf16>
    %c0_6 = arith.constant 0 : index
    %c0_7 = arith.constant 0 : index
    %16 = vector.load %arg5[%c0_6, %c0_7] : memref<32x96xbf16, #tpu.memory_space<vmem>>, vector<32x96xbf16>
    %cst_8 = arith.constant dense<0.000000e+00> : vector<128x96xf32>
    %17 = tpu.matmul %15, %16, %cst_8 {dimension_numbers = #tpu.dot_dimension_numbers<[1], [0], [0], [1], [0, 0, 1, 1], [], []>} : vector<128x32xbf16>, vector<32x96xbf16>, vector<128x96xf32> -> vector<128x96xf32>
    %18 = vector.extract_strided_slice %17 {offsets = [0, 0], sizes = [128, 8], strides = [1, 1]} : vector<128x96xf32> to vector<128x8xf32>
    %19 = arith.truncf %18 : vector<128x8xf32> to vector<128x8xbf16>
    %c0_9 = arith.constant 0 : index
    %c0_10 = arith.constant 0 : index
    %c0_11 = arith.constant 0 : index
    %c0_12 = arith.constant 0 : index
    %20 = vector.load %arg6[%c0_9, %c0_10, %c0_11, %c0_12] : memref<1x4x128x8xbf16, #tpu.memory_space<vmem>>, vector<1x1x128x8xbf16>
    %21 = vector.shape_cast %20 : vector<1x1x128x8xbf16> to vector<128x8xbf16>
    %22 = vector.shape_cast %19 : vector<128x8xbf16> to vector<1x1x128x8xbf16>
    tpu.vector_store %arg6[%c0_9, %c0_10, %c0_11, %c0_12], %22 {strides = array<i32>} : memref<1x4x128x8xbf16, #tpu.memory_space<vmem>>, vector<1x1x128x8xbf16>,
    %23 = vector.extract_strided_slice %17 {offsets = [0, 8], sizes = [128, 8], strides = [1, 1]} : vector<128x96xf32> to vector<128x8xf32>
    %24 = arith.truncf %23 : vector<128x8xf32> to vector<128x8xbf16>
    %c0_13 = arith.constant 0 : index
    %c0_14 = arith.constant 0 : index
    %c0_15 = arith.constant 0 : index
    %c0_16 = arith.constant 0 : index
    %25 = vector.load %arg7[%c0_13, %c0_14, %c0_15, %c0_16] : memref<1x4x128x8xbf16, #tpu.memory_space<vmem>>, vector<1x1x128x8xbf16>
    %26 = vector.shape_cast %25 : vector<1x1x128x8xbf16> to vector<128x8xbf16>
    %27 = vector.shape_cast %24 : vector<128x8xbf16> to vector<1x1x128x8xbf16>
    tpu.vector_store %arg7[%c0_13, %c0_14, %c0_15, %c0_16], %27 {strides = array<i32>} : memref<1x4x128x8xbf16, #tpu.memory_space<vmem>>, vector<1x1x128x8xbf16>,
    %28 = vector.extract_strided_slice %17 {offsets = [0, 16], sizes = [128, 8], strides = [1, 1]} : vector<128x96xf32> to vector<128x8xf32>
    %29 = arith.truncf %28 : vector<128x8xf32> to vector<128x8xbf16>
    %c0_17 = arith.constant 0 : index
    %c0_18 = arith.constant 0 : index
    %c0_19 = arith.constant 0 : index
    %c0_20 = arith.constant 0 : index
    %30 = vector.load %arg8[%c0_17, %c0_18, %c0_19, %c0_20] : memref<1x4x128x8xbf16, #tpu.memory_space<vmem>>, vector<1x1x128x8xbf16>
    %31 = vector.shape_cast %30 : vector<1x1x128x8xbf16> to vector<128x8xbf16>
    %32 = vector.shape_cast %29 : vector<128x8xbf16> to vector<1x1x128x8xbf16>
    tpu.vector_store %arg8[%c0_17, %c0_18, %c0_19, %c0_20], %32 {strides = array<i32>} : memref<1x4x128x8xbf16, #tpu.memory_space<vmem>>, vector<1x1x128x8xbf16>,
    %33 = vector.extract_strided_slice %17 {offsets = [0, 24], sizes = [128, 8], strides = [1, 1]} : vector<128x96xf32> to vector<128x8xf32>
    %34 = arith.truncf %33 : vector<128x8xf32> to vector<128x8xbf16>
    %c0_21 = arith.constant 0 : index
    %c1 = arith.constant 1 : index
    %c0_22 = arith.constant 0 : index
    %c0_23 = arith.constant 0 : index
    %35 = vector.load %arg6[%c0_21, %c1, %c0_22, %c0_23] : memref<1x4x128x8xbf16, #tpu.memory_space<vmem>>, vector<1x1x128x8xbf16>
    %36 = vector.shape_cast %35 : vector<1x1x128x8xbf16> to vector<128x8xbf16>
    %37 = vector.shape_cast %34 : vector<128x8xbf16> to vector<1x1x128x8xbf16>
    tpu.vector_store %arg6[%c0_21, %c1, %c0_22, %c0_23], %37 {strides = array<i32>} : memref<1x4x128x8xbf16, #tpu.memory_space<vmem>>, vector<1x1x128x8xbf16>,
    %38 = vector.extract_strided_slice %17 {offsets = [0, 32], sizes = [128, 8], strides = [1, 1]} : vector<128x96xf32> to vector<128x8xf32>
    %39 = arith.truncf %38 : vector<128x8xf32> to vector<128x8xbf16>
    %c0_24 = arith.constant 0 : index
    %c1_25 = arith.constant 1 : index
    %c0_26 = arith.constant 0 : index
    %c0_27 = arith.constant 0 : index
    %40 = vector.load %arg7[%c0_24, %c1_25, %c0_26, %c0_27] : memref<1x4x128x8xbf16, #tpu.memory_space<vmem>>, vector<1x1x128x8xbf16>
    %41 = vector.shape_cast %40 : vector<1x1x128x8xbf16> to vector<128x8xbf16>
    %42 = vector.shape_cast %39 : vector<128x8xbf16> to vector<1x1x128x8xbf16>
    tpu.vector_store %arg7[%c0_24, %c1_25, %c0_26, %c0_27], %42 {strides = array<i32>} : memref<1x4x128x8xbf16, #tpu.memory_space<vmem>>, vector<1x1x128x8xbf16>,
    %43 = vector.extract_strided_slice %17 {offsets = [0, 40], sizes = [128, 8], strides = [1, 1]} : vector<128x96xf32> to vector<128x8xf32>
    %44 = arith.truncf %43 : vector<128x8xf32> to vector<128x8xbf16>
    %c0_28 = arith.constant 0 : index
    %c1_29 = arith.constant 1 : index
    %c0_30 = arith.constant 0 : index
    %c0_31 = arith.constant 0 : index
    %45 = vector.load %arg8[%c0_28, %c1_29, %c0_30, %c0_31] : memref<1x4x128x8xbf16, #tpu.memory_space<vmem>>, vector<1x1x128x8xbf16>
    %46 = vector.shape_cast %45 : vector<1x1x128x8xbf16> to vector<128x8xbf16>
    %47 = vector.shape_cast %44 : vector<128x8xbf16> to vector<1x1x128x8xbf16>
    tpu.vector_store %arg8[%c0_28, %c1_29, %c0_30, %c0_31], %47 {strides = array<i32>} : memref<1x4x128x8xbf16, #tpu.memory_space<vmem>>, vector<1x1x128x8xbf16>,
    %48 = vector.extract_strided_slice %17 {offsets = [0, 48], sizes = [128, 8], strides = [1, 1]} : vector<128x96xf32> to vector<128x8xf32>
    %49 = arith.truncf %48 : vector<128x8xf32> to vector<128x8xbf16>
    %c0_32 = arith.constant 0 : index
    %c2 = arith.constant 2 : index
    %c0_33 = arith.constant 0 : index
    %c0_34 = arith.constant 0 : index
    %50 = vector.load %arg6[%c0_32, %c2, %c0_33, %c0_34] : memref<1x4x128x8xbf16, #tpu.memory_space<vmem>>, vector<1x1x128x8xbf16>
    %51 = vector.shape_cast %50 : vector<1x1x128x8xbf16> to vector<128x8xbf16>
    %52 = vector.shape_cast %49 : vector<128x8xbf16> to vector<1x1x128x8xbf16>
    tpu.vector_store %arg6[%c0_32, %c2, %c0_33, %c0_34], %52 {strides = array<i32>} : memref<1x4x128x8xbf16, #tpu.memory_space<vmem>>, vector<1x1x128x8xbf16>,
    %53 = vector.extract_strided_slice %17 {offsets = [0, 56], sizes = [128, 8], strides = [1, 1]} : vector<128x96xf32> to vector<128x8xf32>
    %54 = arith.truncf %53 : vector<128x8xf32> to vector<128x8xbf16>
    %c0_35 = arith.constant 0 : index
    %c2_36 = arith.constant 2 : index
    %c0_37 = arith.constant 0 : index
    %c0_38 = arith.constant 0 : index
    %55 = vector.load %arg7[%c0_35, %c2_36, %c0_37, %c0_38] : memref<1x4x128x8xbf16, #tpu.memory_space<vmem>>, vector<1x1x128x8xbf16>
    %56 = vector.shape_cast %55 : vector<1x1x128x8xbf16> to vector<128x8xbf16>
    %57 = vector.shape_cast %54 : vector<128x8xbf16> to vector<1x1x128x8xbf16>
    tpu.vector_store %arg7[%c0_35, %c2_36, %c0_37, %c0_38], %57 {strides = array<i32>} : memref<1x4x128x8xbf16, #tpu.memory_space<vmem>>, vector<1x1x128x8xbf16>,
    %58 = vector.extract_strided_slice %17 {offsets = [0, 64], sizes = [128, 8], strides = [1, 1]} : vector<128x96xf32> to vector<128x8xf32>
    %59 = arith.truncf %58 : vector<128x8xf32> to vector<128x8xbf16>
    %c0_39 = arith.constant 0 : index
    %c2_40 = arith.constant 2 : index
    %c0_41 = arith.constant 0 : index
    %c0_42 = arith.constant 0 : index
    %60 = vector.load %arg8[%c0_39, %c2_40, %c0_41, %c0_42] : memref<1x4x128x8xbf16, #tpu.memory_space<vmem>>, vector<1x1x128x8xbf16>
    %61 = vector.shape_cast %60 : vector<1x1x128x8xbf16> to vector<128x8xbf16>
    %62 = vector.shape_cast %59 : vector<128x8xbf16> to vector<1x1x128x8xbf16>
    tpu.vector_store %arg8[%c0_39, %c2_40, %c0_41, %c0_42], %62 {strides = array<i32>} : memref<1x4x128x8xbf16, #tpu.memory_space<vmem>>, vector<1x1x128x8xbf16>,
    %63 = vector.extract_strided_slice %17 {offsets = [0, 72], sizes = [128, 8], strides = [1, 1]} : vector<128x96xf32> to vector<128x8xf32>
    %64 = arith.truncf %63 : vector<128x8xf32> to vector<128x8xbf16>
    %c0_43 = arith.constant 0 : index
    %c3 = arith.constant 3 : index
    %c0_44 = arith.constant 0 : index
    %c0_45 = arith.constant 0 : index
    %65 = vector.load %arg6[%c0_43, %c3, %c0_44, %c0_45] : memref<1x4x128x8xbf16, #tpu.memory_space<vmem>>, vector<1x1x128x8xbf16>
    %66 = vector.shape_cast %65 : vector<1x1x128x8xbf16> to vector<128x8xbf16>
    %67 = vector.shape_cast %64 : vector<128x8xbf16> to vector<1x1x128x8xbf16>
    tpu.vector_store %arg6[%c0_43, %c3, %c0_44, %c0_45], %67 {strides = array<i32>} : memref<1x4x128x8xbf16, #tpu.memory_space<vmem>>, vector<1x1x128x8xbf16>,
    %68 = vector.extract_strided_slice %17 {offsets = [0, 80], sizes = [128, 8], strides = [1, 1]} : vector<128x96xf32> to vector<128x8xf32>
    %69 = arith.truncf %68 : vector<128x8xf32> to vector<128x8xbf16>
    %c0_46 = arith.constant 0 : index
    %c3_47 = arith.constant 3 : index
    %c0_48 = arith.constant 0 : index
    %c0_49 = arith.constant 0 : index
    %70 = vector.load %arg7[%c0_46, %c3_47, %c0_48, %c0_49] : memref<1x4x128x8xbf16, #tpu.memory_space<vmem>>, vector<1x1x128x8xbf16>
    %71 = vector.shape_cast %70 : vector<1x1x128x8xbf16> to vector<128x8xbf16>
    %72 = vector.shape_cast %69 : vector<128x8xbf16> to vector<1x1x128x8xbf16>
    tpu.vector_store %arg7[%c0_46, %c3_47, %c0_48, %c0_49], %72 {strides = array<i32>} : memref<1x4x128x8xbf16, #tpu.memory_space<vmem>>, vector<1x1x128x8xbf16>,
    %73 = vector.extract_strided_slice %17 {offsets = [0, 88], sizes = [128, 8], strides = [1, 1]} : vector<128x96xf32> to vector<128x8xf32>
    %74 = arith.truncf %73 : vector<128x8xf32> to vector<128x8xbf16>
    %c0_50 = arith.constant 0 : index
    %c3_51 = arith.constant 3 : index
    %c0_52 = arith.constant 0 : index
    %c0_53 = arith.constant 0 : index
    %75 = vector.load %arg8[%c0_50, %c3_51, %c0_52, %c0_53] : memref<1x4x128x8xbf16, #tpu.memory_space<vmem>>, vector<1x1x128x8xbf16>
    %76 = vector.shape_cast %75 : vector<1x1x128x8xbf16> to vector<128x8xbf16>
    %77 = vector.shape_cast %74 : vector<128x8xbf16> to vector<1x1x128x8xbf16>
    tpu.vector_store %arg8[%c0_50, %c3_51, %c0_52, %c0_53], %77 {strides = array<i32>} : memref<1x4x128x8xbf16, #tpu.memory_space<vmem>>, vector<1x1x128x8xbf16>,
    return
  }
  func.func @transform_0(%arg0: i32, %arg1: i32, %arg2: i32) -> (i32, i32, i32) {
    %c0_i32 = arith.constant 0 : i32
    %c0_i32_0 = arith.constant 0 : i32
    return %arg0, %arg1, %c0_i32 : i32, i32, i32
  }
  func.func @transform_1(%arg0: i32, %arg1: i32, %arg2: i32) -> (i32, i32) {
    %c0_i32 = arith.constant 0 : i32
    %c0_i32_0 = arith.constant 0 : i32
    %c0_i32_1 = arith.constant 0 : i32
    return %c0_i32, %c0_i32_0 : i32, i32
  }
  func.func @transform_2(%arg0: i32, %arg1: i32, %arg2: i32) -> (i32, i32) {
    %c0_i32 = arith.constant 0 : i32
    %c0_i32_0 = arith.constant 0 : i32
    return %c0_i32, %arg2 : i32, i32
  }
  func.func @transform_3(%arg0: i32, %arg1: i32, %arg2: i32) -> (i32, i32, i32, i32) {
    %c0_i32 = arith.constant 0 : i32
    %c0_i32_0 = arith.constant 0 : i32
    return %arg0, %arg2, %arg1, %c0_i32 : i32, i32, i32, i32
  }
  func.func @transform_4(%arg0: i32, %arg1: i32, %arg2: i32) -> (i32, i32, i32, i32) {
    %c0_i32 = arith.constant 0 : i32
    %c0_i32_0 = arith.constant 0 : i32
    return %arg0, %arg2, %arg1, %c0_i32 : i32, i32, i32, i32
  }
  func.func @transform_5(%arg0: i32, %arg1: i32, %arg2: i32) -> (i32, i32, i32, i32) {
    %c0_i32 = arith.constant 0 : i32
    %c0_i32_0 = arith.constant 0 : i32
    return %arg0, %arg2, %arg1, %c0_i32 : i32, i32, i32, i32
  }
}

</mosaic_0001>

<llo_original>
// kernel: tpu_custom_call.1
$region0: #{tpu_custom_call.1}
  #allocation0 [shape = 'u32[]', space=smem, size = 0x4, offset = 0x4, fixed_abs, tag = 'smem constant byte address 0x4 - core index']
  #allocation1 [shape = 'u32[144,128]{1,0:T(1,128)}', space=vmem, size = 0x12000, scoped, tag = 'internal scratch']
  %s0 = inlined_call_operand.vmem [shape: f32[2,256,32], index: 0, kind: input, shape index: {}]
  %s1 = inlined_call_operand.vmem [shape: f32[1,32], index: 1, kind: input, shape index: {}]
  %s2 = inlined_call_operand.vmem [shape: bf16[32,96], index: 2, kind: input, shape index: {}]
  %s3 = inlined_call_operand.vmem [shape: bf16[2,4,256,8], index: 3, kind: output, shape index: {0}]
  %s4 = inlined_call_operand.vmem [shape: bf16[2,4,256,8], index: 4, kind: output, shape index: {1}]
  %s5 = inlined_call_operand.vmem [shape: bf16[2,4,256,8], index: 5, kind: output, shape index: {2}]
  %6 = xla_tuple %s3, %s4, %s5
  %s7 = sld [smem:[#allocation0]]
  $region172: #{tpu_custom_call.1} parent=0
    _
  %s9 = ssub.s32 1, %s7
  %s10 = scalar_select 0, %s9, %s7
  $region1: #{tpu_custom_call.1} parent=0
    #allocation2 [shape = 'u8[262144]{0}', space=vmem, size = 0x40000, scoped, tag = 'output window, operand 0']
    #allocation3 [shape = 'u8[262144]{0}', space=vmem, size = 0x40000, scoped, tag = 'output window, operand 1']
    #allocation4 [shape = 'u8[262144]{0}', space=vmem, size = 0x40000, scoped, tag = 'output window, operand 2']
    loop: start=0, step=1, limit=6
    $region2: #{tpu_custom_call.1} parent=1 // loop_pre_header
      _
    $region3: #{tpu_custom_call.1} parent=1 // loop_header
      %s12 = sphi 0, %s16
      %p13 = scmp.ge.s32.totalorder %s12, 6
      %s19 = sphi 0, %s38
      %s20 = sphi 0, %s34
      %s21 = sphi 0, %s30
      %s22 = sphi 0, %s19
      %s23 = sphi 0, %s20
      %s24 = sphi 0, %s21
      %s25 = sphi 0, %s22
      %s26 = sphi 0, %s23
      %s27 = sphi 0, %s24
      %s43 = sphi 0, %s45
      %s46 = sphi 0, %s43
      %s47 = sphi 0, %s46
      %s63 = sphi 0, %s47
      %s67 = sphi 0, %s67
      %s69 = sphi 0, %s67
      %s70 = sphi 0, %s69
      %s84 = sphi 0, %s70
      %s90 = sphi 0, %s92
      %s93 = sphi 0, %s90
      %s94 = sphi 0, %s93
      %s110 = sphi 0, %s94
      %s120 = sphi 0, %s122
      %s123 = sphi 0, %s120
      %s124 = sphi 0, %s123
      %s140 = sphi 0, %s124
      %s150 = sphi 0, %s152
      %s153 = sphi 0, %s150
      %s154 = sphi 0, %s153
      %s170 = sphi 0, %s154
      %s180 = sphi 0, %s182
      %s183 = sphi 0, %s180
      %s184 = sphi 0, %s183
      %s200 = sphi 0, %s184
    $region4: #{tpu_custom_call.1} parent=1 // loop_header_branch
      %15 = sbr.rel (%p13) target = $region8
    $region5: #{tpu_custom_call.1} parent=1 // loop_body
      %s17 = ssub.s32 %s12, 1
      %s18 = ssub.s32 %s12, 2
      %s28 = sadd.s32 1, %s21
      %p29 = scmp.ge.s32.totalorder %s28, 1
      %s30 = scalar_select %p29, 0, %s28
      %s31 = sadd.s32 1, %s20
      %s32 = scalar_select %p29, %s31, %s20
      %p33 = scmp.ge.s32.totalorder %s32, 2
      %s34 = scalar_select %p33, 0, %s32
      %s35 = sadd.s32 1, %s19
      %s36 = scalar_select %p33, %s35, %s19
      %p37 = scmp.ge.s32.totalorder %s36, 2
      %s38 = scalar_select %p37, 0, %s36
      %s39 = ssub.s32 %s19, %s38
      %s40 = ssub.s32 %s20, %s34
      %s41 = sor.u32 %s39, %s40
      %p42 = scmp.eq.s32.totalorder %s41, 0
      %s44 = sadd.s32 %s43, 1
      %s45 = scalar_select %p42, %s43, %s44
      %p48 = pneg %p42
      %p49 = scmp.eq.s32.totalorder %s12, 3
      %p50 = por %p48, %p49
      %p51 = scmp.ne.s32.totalorder %s43, %s46
      %p52 = scmp.eq.s32.totalorder %s12, 0
      %p53 = por %p51, %p52
      %p54 = scmp.ne.s32.totalorder %s43, %s46
      %p55 = scmp.eq.s32.totalorder %s17, 3
      %p56 = por %p54, %p55
      %p57 = scmp.ne.s32.totalorder %s46, %s47
      %p58 = scmp.eq.s32.totalorder %s17, 0
      %p59 = por %p57, %p58
      %p60 = scmp.ne.s32.totalorder %s46, %s47
      %p61 = scmp.eq.s32.totalorder %s18, 3
      %p62 = por %p60, %p61
      %p64 = scmp.ne.s32.totalorder %s47, %s63
      %p65 = scmp.eq.s32.totalorder %s18, 0
      %p66 = por %p64, %p65
      %s68 = sadd.s32 %s67, 1
      %p71 = scmp.eq.s32.totalorder %s12, 3
      %p72 = scmp.ne.s32.totalorder %s67, %s69
      %p73 = scmp.eq.s32.totalorder %s12, 0
      %p74 = por %p72, %p73
      %p75 = scmp.ne.s32.totalorder %s67, %s69
      %p76 = scmp.eq.s32.totalorder %s17, 3
      %p77 = por %p75, %p76
      %p78 = scmp.ne.s32.totalorder %s69, %s70
      %p79 = scmp.eq.s32.totalorder %s17, 0
      %p80 = por %p78, %p79
      %p81 = scmp.ne.s32.totalorder %s69, %s70
      %p82 = scmp.eq.s32.totalorder %s18, 3
      %p83 = por %p81, %p82
      %p85 = scmp.ne.s32.totalorder %s70, %s84
      %p86 = scmp.eq.s32.totalorder %s18, 0
      %p87 = por %p85, %p86
      %s88 = ssub.s32 %s21, %s30
      %p89 = scmp.eq.s32.totalorder %s88, 0
      %s91 = sadd.s32 %s90, 1
      %s92 = scalar_select %p89, %s90, %s91
      %p95 = pneg %p89
      %p96 = scmp.eq.s32.totalorder %s12, 3
      %p97 = por %p95, %p96
      %p98 = scmp.ne.s32.totalorder %s90, %s93
      %p99 = scmp.eq.s32.totalorder %s12, 0
      %p100 = por %p98, %p99
      %p101 = scmp.ne.s32.totalorder %s90, %s93
      %p102 = scmp.eq.s32.totalorder %s17, 3
      %p103 = por %p101, %p102
      %p104 = scmp.ne.s32.totalorder %s93, %s94
      %p105 = scmp.eq.s32.totalorder %s17, 0
      %p106 = por %p104, %p105
      %p107 = scmp.ne.s32.totalorder %s93, %s94
      %p108 = scmp.eq.s32.totalorder %s18, 3
      %p109 = por %p107, %p108
      %p111 = scmp.ne.s32.totalorder %s94, %s110
      %p112 = scmp.eq.s32.totalorder %s18, 0
      %p113 = por %p111, %p112
      %s114 = ssub.s32 %s19, %s38
      %s115 = ssub.s32 %s21, %s30
      %s116 = sor.u32 %s114, %s115
      %s117 = ssub.s32 %s20, %s34
      %s118 = sor.u32 %s116, %s117
      %p119 = scmp.eq.s32.totalorder %s118, 0
      %s121 = sadd.s32 %s120, 1
      %s122 = scalar_select %p119, %s120, %s121
      %p125 = pneg %p119
      %p126 = scmp.eq.s32.totalorder %s12, 3
      %p127 = por %p125, %p126
      %p128 = scmp.ne.s32.totalorder %s120, %s123
      %p129 = scmp.eq.s32.totalorder %s12, 0
      %p130 = por %p128, %p129
      %p131 = scmp.ne.s32.totalorder %s120, %s123
      %p132 = scmp.eq.s32.totalorder %s17, 3
      %p133 = por %p131, %p132
      %p134 = scmp.ne.s32.totalorder %s123, %s124
      %p135 = scmp.eq.s32.totalorder %s17, 0
      %p136 = por %p134, %p135
      %p137 = scmp.ne.s32.totalorder %s123, %s124
      %p138 = scmp.eq.s32.totalorder %s18, 3
      %p139 = por %p137, %p138
      %p141 = scmp.ne.s32.totalorder %s124, %s140
      %p142 = scmp.eq.s32.totalorder %s18, 0
      %p143 = por %p141, %p142
      %s144 = ssub.s32 %s19, %s38
      %s145 = ssub.s32 %s21, %s30
      %s146 = sor.u32 %s144, %s145
      %s147 = ssub.s32 %s20, %s34
      %s148 = sor.u32 %s146, %s147
      %p149 = scmp.eq.s32.totalorder %s148, 0
      %s151 = sadd.s32 %s150, 1
      %s152 = scalar_select %p149, %s150, %s151
      %p155 = pneg %p149
      %p156 = scmp.eq.s32.totalorder %s12, 3
      %p157 = por %p155, %p156
      %p158 = scmp.ne.s32.totalorder %s150, %s153
      %p159 = scmp.eq.s32.totalorder %s12, 0
      %p160 = por %p158, %p159
      %p161 = scmp.ne.s32.totalorder %s150, %s153
      %p162 = scmp.eq.s32.totalorder %s17, 3
      %p163 = por %p161, %p162
      %p164 = scmp.ne.s32.totalorder %s153, %s154
      %p165 = scmp.eq.s32.totalorder %s17, 0
      %p166 = por %p164, %p165
      %p167 = scmp.ne.s32.totalorder %s153, %s154
      %p168 = scmp.eq.s32.totalorder %s18, 3
      %p169 = por %p167, %p168
      %p171 = scmp.ne.s32.totalorder %s154, %s170
      %p172 = scmp.eq.s32.totalorder %s18, 0
      %p173 = por %p171, %p172
      %s174 = ssub.s32 %s19, %s38
      %s175 = ssub.s32 %s21, %s30
      %s176 = sor.u32 %s174, %s175
      %s177 = ssub.s32 %s20, %s34
      %s178 = sor.u32 %s176, %s177
      %p179 = scmp.eq.s32.totalorder %s178, 0
      %s181 = sadd.s32 %s180, 1
      %s182 = scalar_select %p179, %s180, %s181
      %p185 = pneg %p179
      %p186 = scmp.eq.s32.totalorder %s12, 3
      %p187 = por %p185, %p186
      %p188 = scmp.ne.s32.totalorder %s180, %s183
      %p189 = scmp.eq.s32.totalorder %s12, 0
      %p190 = por %p188, %p189
      %p191 = scmp.ne.s32.totalorder %s180, %s183
      %p192 = scmp.eq.s32.totalorder %s17, 3
      %p193 = por %p191, %p192
      %p194 = scmp.ne.s32.totalorder %s183, %s184
      %p195 = scmp.eq.s32.totalorder %s17, 0
      %p196 = por %p194, %p195
      %p197 = scmp.ne.s32.totalorder %s183, %s184
      %p198 = scmp.eq.s32.totalorder %s18, 3
      %p199 = por %p197, %p198
      %p201 = scmp.ne.s32.totalorder %s184, %s200
      %p202 = scmp.eq.s32.totalorder %s18, 0
      %p203 = por %p201, %p202
      %p204 = scmp.le.s32.totalorder 1, %s12
      %p205 = scmp.lt.s32.totalorder %s12, 5
      %p206 = pnand %p204, %p205
      %p207 = pneg %p206
      // Predicated region
      $region9: #{tpu_custom_call.1} parent=5 // pred_check
        _
      $region10: #{tpu_custom_call.1} parent=5 // pred_check_branch
        %209 = sbr.rel (%p206) target = $region12
      $region11: #{tpu_custom_call.1} parent=5 // pred_region
        %s210 = ssub.s32 %s12, 1
        // Predicated region
        $region13: #{tpu_custom_call.1} parent=11 // pred_check
          %p211 = pneg %p80
        $region14: #{tpu_custom_call.1} parent=11 // pred_check_branch
          %213 = sbr.rel (%p211) target = $region16
        $region15: #{tpu_custom_call.1} parent=11 // pred_region
          _
        $region16: #{tpu_custom_call.1} parent=11 // pred_fallthru
          _
        // Predicated region
        $region17: #{tpu_custom_call.1} parent=11 // pred_check
          %p214 = pneg %p106
        $region18: #{tpu_custom_call.1} parent=11 // pred_check_branch
          %216 = sbr.rel (%p214) target = $region20
        $region19: #{tpu_custom_call.1} parent=11 // pred_region
          %p217 = scmp.lt.s32.totalorder %s24, 0
          %s218 = scalar_select %p217, %s24, 0
          %s219 = smul.addr %s218, 4
          %s220 = scalar_lea.vmem %s2, %s219
        $region20: #{tpu_custom_call.1} parent=11 // pred_fallthru
          _
      $region12: #{tpu_custom_call.1} parent=5 // pred_fallthru
        _
      %p221 = scmp.lt.s32.totalorder %s12, 4
      // Predicated region
      $region21: #{tpu_custom_call.1} parent=5 // pred_check
        %p222 = pneg %p221
      $region22: #{tpu_custom_call.1} parent=5 // pred_check_branch
        %224 = sbr.rel (%p222) target = $region24
      $region23: #{tpu_custom_call.1} parent=5 // pred_region
        // Predicated region
        $region25: #{tpu_custom_call.1} parent=23 // pred_check
          %p225 = pneg %p53
        $region26: #{tpu_custom_call.1} parent=23 // pred_check_branch
          %227 = sbr.rel (%p225) target = $region28
        $region27: #{tpu_custom_call.1} parent=23 // pred_region
          %s228 = smul.u32 16, %s20
          %p229 = scmp.lt.s32.totalorder %s19, 1
          %s230 = scalar_select %p229, %s19, 1
          %p231 = scmp.lt.s32.totalorder %s228, 31
          %s232 = scalar_select %p231, %s228, 31
          %s233 = smul.addr %s230, 32
          %s234 = sadd.s32 %s232, %s233
          %s235 = smul.addr %s234, 8
          %s236 = scalar_lea.vmem %s0, %s235
          %s237 = smul.u32 16, %s20
        $region28: #{tpu_custom_call.1} parent=23 // pred_fallthru
          _
      $region24: #{tpu_custom_call.1} parent=5 // pred_fallthru
        _
      %p238 = scmp.le.s32.totalorder 1, %s12
      %p239 = scmp.lt.s32.totalorder %s12, 5
      %p240 = pnand %p238, %p239
      %p241 = pneg %p240
      // Predicated region
      $region29: #{tpu_custom_call.1} parent=5 // pred_check
        _
      $region30: #{tpu_custom_call.1} parent=5 // pred_check_branch
        %243 = sbr.rel (%p240) target = $region32
      $region31: #{tpu_custom_call.1} parent=5 // pred_region
        %s244 = ssub.s32 %s12, 1
        %s245 = smul.u32 16, %s23
        %p246 = scmp.lt.s32.totalorder %s22, 1
        %s247 = scalar_select %p246, %s22, 1
        %p248 = scmp.lt.s32.totalorder %s245, 31
        %s249 = scalar_select %p248, %s245, 31
        %s250 = smul.addr %s247, 32
        %s251 = sadd.s32 %s249, %s250
        %s252 = smul.addr %s251, 8
        %s253 = scalar_lea.vmem %s0, %s252
        %p254 = pneg %p59
        %p255 = pneg %p56
        %p256 = pneg %p80
        %p257 = pneg %p77
        %p258 = scmp.lt.s32.totalorder %s24, 0
        %s259 = scalar_select %p258, %s24, 0
        %s260 = smul.addr %s259, 4
        %s261 = scalar_lea.vmem %s2, %s260
        %p262 = pneg %p106
        %p263 = pneg %p103
        %p264 = pneg %p136
        %p265 = pneg %p133
        %s266 = sand.u32 %s123, 1
        %s267 = sand.u32 %s123, 1
        %s268 = smul.addr %s267, 256
        %s269 = scalar_lea.vmem [#allocation2], %s268
        %p270 = pneg %p166
        %p271 = pneg %p163
        %s272 = sand.u32 %s153, 1
        %s273 = sand.u32 %s153, 1
        %s274 = smul.addr %s273, 256
        %s275 = scalar_lea.vmem [#allocation3], %s274
        %p276 = pneg %p196
        %p277 = pneg %p193
        %s278 = sand.u32 %s183, 1
        %s279 = sand.u32 %s183, 1
        %s280 = smul.addr %s279, 256
        %s281 = scalar_lea.vmem [#allocation4], %s280
        %s282 = smul.u32 16, %s23
        %p283 = scmp.lt.s32.totalorder %s22, 1
        %s284 = scalar_select %p283, %s22, 1
        %p285 = scmp.lt.s32.totalorder %s282, 31
        %s286 = scalar_select %p285, %s282, 31
        %s287 = smul.addr %s284, 32
        %s288 = sadd.s32 %s286, %s287
        %s289 = smul.addr %s288, 8
        %s290 = scalar_lea.vmem %s0, %s289
        %s291 = smul.u32 16, %s23
        %p292 = scmp.lt.s32.totalorder %s24, 0
        %s293 = scalar_select %p292, %s24, 0
        %s294 = smul.addr %s293, 4
        %s295 = scalar_lea.vmem %s2, %s294
        %s296 = smul.u32 4, %s24
        %s297 = smul.u32 16, %s23
        %s298 = smul.u32 4, %s24
        %s299 = smul.u32 16, %s23
        %s300 = smul.u32 4, %s24
        %s301 = smul.u32 16, %s23
        %v303 = vld [vmem:[%s290] sm:$0xff]
        %v304 = vld [vmem:[%s290 + $0x8] sm:$0xff]
        %v305 = vld [vmem:[%s290 + $0x10] sm:$0xff]
        %v306 = vld [vmem:[%s290 + $0x18] sm:$0xff]
        %v307 = vld [vmem:[%s290 + $0x20] sm:$0xff]
        %v308 = vld [vmem:[%s290 + $0x28] sm:$0xff]
        %v309 = vld [vmem:[%s290 + $0x30] sm:$0xff]
        %v310 = vld [vmem:[%s290 + $0x38] sm:$0xff]
        %v311 = vld [vmem:[%s290 + $0x40] sm:$0xff]
        %v312 = vld [vmem:[%s290 + $0x48] sm:$0xff]
        %v313 = vld [vmem:[%s290 + $0x50] sm:$0xff]
        %v314 = vld [vmem:[%s290 + $0x58] sm:$0xff]
        %v315 = vld [vmem:[%s290 + $0x60] sm:$0xff]
        %v316 = vld [vmem:[%s290 + $0x68] sm:$0xff]
        %v317 = vld [vmem:[%s290 + $0x70] sm:$0xff]
        %v318 = vld [vmem:[%s290 + $0x78] sm:$0xff]
        %v319 = vld [vmem:[%s1] sm:$0x1]
        %v320 = vmul.f32 %v303, %v303
        %v321 = vmul.f32 %v304, %v304
        %v322 = vmul.f32 %v305, %v305
        %v323 = vmul.f32 %v306, %v306
        %v324 = vmul.f32 %v307, %v307
        %v325 = vmul.f32 %v308, %v308
        %v326 = vmul.f32 %v309, %v309
        %v327 = vmul.f32 %v310, %v310
        %v328 = vmul.f32 %v311, %v311
        %v329 = vmul.f32 %v312, %v312
        %v330 = vmul.f32 %v313, %v313
        %v331 = vmul.f32 %v314, %v314
        %v332 = vmul.f32 %v315, %v315
        %v333 = vmul.f32 %v316, %v316
        %v334 = vmul.f32 %v317, %v317
        %v335 = vmul.f32 %v318, %v318
        %vm336 = vcmask 261120
        %v337 = vsel %vm336, %v320, 0.0
        %338 = vadd.xlane.f32.xlu0 %v337
        %v339 = vpop.xlane.xlu0 %338
        %v340 = vsel %vm336, %v321, 0.0
        %341 = vadd.xlane.f32.xlu0 %v340
        %v342 = vpop.xlane.xlu0 %341
        %v343 = vsel %vm336, %v322, 0.0
        %344 = vadd.xlane.f32.xlu0 %v343
        %v345 = vpop.xlane.xlu0 %344
        %v346 = vsel %vm336, %v323, 0.0
        %347 = vadd.xlane.f32.xlu0 %v346
        %v348 = vpop.xlane.xlu0 %347
        %v349 = vsel %vm336, %v324, 0.0
        %350 = vadd.xlane.f32.xlu0 %v349
        %v351 = vpop.xlane.xlu0 %350
        %v352 = vsel %vm336, %v325, 0.0
        %353 = vadd.xlane.f32.xlu0 %v352
        %v354 = vpop.xlane.xlu0 %353
        %v355 = vsel %vm336, %v326, 0.0
        %356 = vadd.xlane.f32.xlu0 %v355
        %v357 = vpop.xlane.xlu0 %356
        %v358 = vsel %vm336, %v327, 0.0
        %359 = vadd.xlane.f32.xlu0 %v358
        %v360 = vpop.xlane.xlu0 %359
        %v361 = vsel %vm336, %v328, 0.0
        %362 = vadd.xlane.f32.xlu0 %v361
        %v363 = vpop.xlane.xlu0 %362
        %v364 = vsel %vm336, %v329, 0.0
        %365 = vadd.xlane.f32.xlu0 %v364
        %v366 = vpop.xlane.xlu0 %365
        %v367 = vsel %vm336, %v330, 0.0
        %368 = vadd.xlane.f32.xlu0 %v367
        %v369 = vpop.xlane.xlu0 %368
        %v370 = vsel %vm336, %v331, 0.0
        %371 = vadd.xlane.f32.xlu0 %v370
        %v372 = vpop.xlane.xlu0 %371
        %v373 = vsel %vm336, %v332, 0.0
        %374 = vadd.xlane.f32.xlu0 %v373
        %v375 = vpop.xlane.xlu0 %374
        %v376 = vsel %vm336, %v333, 0.0
        %377 = vadd.xlane.f32.xlu0 %v376
        %v378 = vpop.xlane.xlu0 %377
        %v379 = vsel %vm336, %v334, 0.0
        %380 = vadd.xlane.f32.xlu0 %v379
        %v381 = vpop.xlane.xlu0 %380
        %v382 = vsel %vm336, %v335, 0.0
        %383 = vadd.xlane.f32.xlu0 %v382
        %v384 = vpop.xlane.xlu0 %383
        %v385 = vrcp.pop 32.0
        %v386 = vmul.f32 %v339, %v385
        %v387 = vmul.f32 %v342, %v385
        %v388 = vmul.f32 %v345, %v385
        %v389 = vmul.f32 %v348, %v385
        %v390 = vmul.f32 %v351, %v385
        %v391 = vmul.f32 %v354, %v385
        %v392 = vmul.f32 %v357, %v385
        %v393 = vmul.f32 %v360, %v385
        %v394 = vmul.f32 %v363, %v385
        %v395 = vmul.f32 %v366, %v385
        %v396 = vmul.f32 %v369, %v385
        %v397 = vmul.f32 %v372, %v385
        %v398 = vmul.f32 %v375, %v385
        %v399 = vmul.f32 %v378, %v385
        %v400 = vmul.f32 %v381, %v385
        %v401 = vmul.f32 %v384, %v385
        %v402 = vadd.f32 %v386, 1e-06
        %v403 = vadd.f32 %v387, 1e-06
        %v404 = vadd.f32 %v388, 1e-06
        %v405 = vadd.f32 %v389, 1e-06
        %v406 = vadd.f32 %v390, 1e-06
        %v407 = vadd.f32 %v391, 1e-06
        %v408 = vadd.f32 %v392, 1e-06
        %v409 = vadd.f32 %v393, 1e-06
        %v410 = vadd.f32 %v394, 1e-06
        %v411 = vadd.f32 %v395, 1e-06
        %v412 = vadd.f32 %v396, 1e-06
        %v413 = vadd.f32 %v397, 1e-06
        %v414 = vadd.f32 %v398, 1e-06
        %v415 = vadd.f32 %v399, 1e-06
        %v416 = vadd.f32 %v400, 1e-06
        %v417 = vadd.f32 %v401, 1e-06
        %v418 = vrsqrt.pop %v402
        %v419 = vrsqrt.pop %v403
        %v420 = vrsqrt.pop %v404
        %v421 = vrsqrt.pop %v405
        %v422 = vrsqrt.pop %v406
        %v423 = vrsqrt.pop %v407
        %v424 = vrsqrt.pop %v408
        %v425 = vrsqrt.pop %v409
        %v426 = vrsqrt.pop %v410
        %v427 = vrsqrt.pop %v411
        %v428 = vrsqrt.pop %v412
        %v429 = vrsqrt.pop %v413
        %v430 = vrsqrt.pop %v414
        %v431 = vrsqrt.pop %v415
        %v432 = vrsqrt.pop %v416
        %v433 = vrsqrt.pop %v417
        %v434 = vmul.f32 %v303, %v418
        %v435 = vmul.f32 %v304, %v419
        %v436 = vmul.f32 %v305, %v420
        %v437 = vmul.f32 %v306, %v421
        %v438 = vmul.f32 %v307, %v422
        %v439 = vmul.f32 %v308, %v423
        %v440 = vmul.f32 %v309, %v424
        %v441 = vmul.f32 %v310, %v425
        %v442 = vmul.f32 %v311, %v426
        %v443 = vmul.f32 %v312, %v427
        %v444 = vmul.f32 %v313, %v428
        %v445 = vmul.f32 %v314, %v429
        %v446 = vmul.f32 %v315, %v430
        %v447 = vmul.f32 %v316, %v431
        %v448 = vmul.f32 %v317, %v432
        %v449 = vmul.f32 %v318, %v433
        %v451 = vlaneseq
        %v452 = vshrl.u32 %v451, 7
        %v453 = vsub.s32 0, %v452
        %v454 = vrot.slane %v319, %v453
        %v456 = vmul.f32 %v434, %v454
        %v457 = vmul.f32 %v435, %v454
        %v458 = vmul.f32 %v436, %v454
        %v459 = vmul.f32 %v437, %v454
        %v460 = vmul.f32 %v438, %v454
        %v461 = vmul.f32 %v439, %v454
        %v462 = vmul.f32 %v440, %v454
        %v463 = vmul.f32 %v441, %v454
        %v464 = vmul.f32 %v442, %v454
        %v465 = vmul.f32 %v443, %v454
        %v466 = vmul.f32 %v444, %v454
        %v467 = vmul.f32 %v445, %v454
        %v468 = vmul.f32 %v446, %v454
        %v469 = vmul.f32 %v447, %v454
        %v470 = vmul.f32 %v448, %v454
        %v471 = vmul.f32 %v449, %v454
        %v472 = vpack.c.bf16 %v457, %v456
        %v473 = vpack.c.bf16 %v459, %v458
        %v474 = vpack.c.bf16 %v461, %v460
        %v475 = vpack.c.bf16 %v463, %v462
        %v476 = vpack.c.bf16 %v465, %v464
        %v477 = vpack.c.bf16 %v467, %v466
        %v478 = vpack.c.bf16 %v469, %v468
        %v479 = vpack.c.bf16 %v471, %v470
        %v480 = vld [vmem:[%s295] sm:$0xf]
        %v481 = vld [vmem:[%s295 + $0x4] sm:$0xf]
        %v482 = vld [vmem:[%s295 + $0x8] sm:$0xf]
        %v483 = vld [vmem:[%s295 + $0xc] sm:$0xf]
        %v488 = vunpack.c.l.b16 %v480
        %v489 = vunpack.c.l.b16 %v481
        %v490 = vunpack.c.l.b16 %v482
        %v491 = vunpack.c.l.b16 %v483
        %v492 = vpack.c.b16 %v489, %v488
        %v493 = vpack.c.b16 %v491, %v490
        %v497 = vsel %vm336, %v472, 0
        %v500 = vsel %vm336, %v473, 0
        %v503 = vsel %vm336, %v474, 0
        %v506 = vsel %vm336, %v475, 0
        %v509 = vsel %vm336, %v476, 0
        %v512 = vsel %vm336, %v477, 0
        %v515 = vsel %vm336, %v478, 0
        %v518 = vsel %vm336, %v479, 0
        %520 = vmatprep.subr.bf16.mxu0 0
        %521 = vmatpush1.bf16.msra.mxu0 %v492
        %522 = vmatprep.subr.bf16.mxu0 0
        %523 = vmatpush1.bf16.msra.mxu0 %v493
        %524 = vmatprep.subr.bf16.mxu0 0
        %525 = vmatpush1.bf16.msra.mxu0 0
        %526 = vmatprep.subr.bf16.mxu0 0
        %527 = vmatpush1.bf16.msra.mxu0 0
        %528 = vmatprep.subr.bf16.mxu0 0
        %529 = vmatpush1.bf16.msra.mxu0 0
        %530 = vmatprep.subr.bf16.mxu0 0
        %531 = vmatpush1.bf16.msra.mxu0 0
        %532 = vmatprep.subr.bf16.mxu0 0
        %533 = vmatpush1.bf16.msra.mxu0 0
        %534 = vmatprep.subr.bf16.mxu0 0
        %535 = vmatpush1.bf16.msra.mxu0 0
        %536 = vmatprep.subr.bf16.mxu0 0
        %537 = vmatpush1.bf16.msra.mxu0 0
        %538 = vmatprep.subr.bf16.mxu0 0
        %539 = vmatpush1.bf16.msra.mxu0 0
        %540 = vmatprep.subr.bf16.mxu0 0
        %541 = vmatpush1.bf16.msra.mxu0 0
        %542 = vmatprep.subr.bf16.mxu0 0
        %543 = vmatpush1.bf16.msra.mxu0 0
        %544 = vmatprep.subr.bf16.mxu0 0
        %545 = vmatpush1.bf16.msra.mxu0 0
        %546 = vmatprep.subr.bf16.mxu0 0
        %547 = vmatpush1.bf16.msra.mxu0 0
        %548 = vmatprep.subr.bf16.mxu0 0
        %549 = vmatpush1.bf16.msra.mxu0 0
        %550 = vmatprep.subr.bf16.mxu0 0
        %551 = vmatpush1.bf16.msra.mxu0 0
        %552 = vmatprep.mubr.bf16.mxu0 0
        %553 = vmatmul.mubr.bf16.gmra.mrb[0].mxu0 %v497
        %v554 = vpop.f32.mrb[0].mxu0
        %v555 = vadd.f32 0.0, %v554
        %v556 = vpop.f32.mrb[0].mxu0
        %v557 = vpop.f32.mrb[0].mxu0
        %v558 = vadd.f32 0.0, %v557
        %v559 = vpop.f32.mrb[0].mxu0
        %560 = vmatprep.mubr.bf16.mxu0 0
        %561 = vmatmul.mubr.bf16.gmra.mrb[0].mxu0 %v500
        %v562 = vpop.f32.mrb[0].mxu0
        %v563 = vadd.f32 0.0, %v562
        %v564 = vpop.f32.mrb[0].mxu0
        %v565 = vpop.f32.mrb[0].mxu0
        %v566 = vadd.f32 0.0, %v565
        %v567 = vpop.f32.mrb[0].mxu0
        %568 = vmatprep.mubr.bf16.mxu0 0
        %569 = vmatmul.mubr.bf16.gmra.mrb[0].mxu0 %v503
        %v570 = vpop.f32.mrb[0].mxu0
        %v571 = vadd.f32 0.0, %v570
        %v572 = vpop.f32.mrb[0].mxu0
        %v573 = vpop.f32.mrb[0].mxu0
        %v574 = vadd.f32 0.0, %v573
        %v575 = vpop.f32.mrb[0].mxu0
        %576 = vmatprep.mubr.bf16.mxu0 0
        %577 = vmatmul.mubr.bf16.gmra.mrb[0].mxu0 %v506
        %v578 = vpop.f32.mrb[0].mxu0
        %v579 = vadd.f32 0.0, %v578
        %v580 = vpop.f32.mrb[0].mxu0
        %v581 = vpop.f32.mrb[0].mxu0
        %v582 = vadd.f32 0.0, %v581
        %v583 = vpop.f32.mrb[0].mxu0
        %584 = vmatprep.mubr.bf16.mxu0 0
        %585 = vmatmul.mubr.bf16.gmra.mrb[0].mxu0 %v509
        %v586 = vpop.f32.mrb[0].mxu0
        %v587 = vadd.f32 0.0, %v586
        %v588 = vpop.f32.mrb[0].mxu0
        %v589 = vpop.f32.mrb[0].mxu0
        %v590 = vadd.f32 0.0, %v589
        %v591 = vpop.f32.mrb[0].mxu0
        %592 = vmatprep.mubr.bf16.mxu0 0
        %593 = vmatmul.mubr.bf16.gmra.mrb[0].mxu0 %v512
        %v594 = vpop.f32.mrb[0].mxu0
        %v595 = vadd.f32 0.0, %v594
        %v596 = vpop.f32.mrb[0].mxu0
        %v597 = vpop.f32.mrb[0].mxu0
        %v598 = vadd.f32 0.0, %v597
        %v599 = vpop.f32.mrb[0].mxu0
        %600 = vmatprep.mubr.bf16.mxu0 0
        %601 = vmatmul.mubr.bf16.gmra.mrb[0].mxu0 %v515
        %v602 = vpop.f32.mrb[0].mxu0
        %v603 = vadd.f32 0.0, %v602
        %v604 = vpop.f32.mrb[0].mxu0
        %v605 = vpop.f32.mrb[0].mxu0
        %v606 = vadd.f32 0.0, %v605
        %v607 = vpop.f32.mrb[0].mxu0
        %608 = vmatprep.mubr.bf16.mxu0 0
        %609 = vmatmul.mubr.bf16.gmra.mrb[0].mxu0 %v518
        %v610 = vpop.f32.mrb[0].mxu0
        %v611 = vadd.f32 0.0, %v610
        %v612 = vpop.f32.mrb[0].mxu0
        %v613 = vpop.f32.mrb[0].mxu0
        %v614 = vadd.f32 0.0, %v613
        %v615 = vpop.f32.mrb[0].mxu0
        %616 = vdwg.mxu0
        %v617 = vpack.c.bf16 %v558, %v555
        %v618 = vpack.c.bf16 %v566, %v563
        %v619 = vpack.c.bf16 %v574, %v571
        %v620 = vpack.c.bf16 %v582, %v579
        %v621 = vpack.c.bf16 %v590, %v587
        %v622 = vpack.c.bf16 %v598, %v595
        %v623 = vpack.c.bf16 %v606, %v603
        %v624 = vpack.c.bf16 %v614, %v611
        %v633 = vunpack.c.l.b16 %v617
        %v634 = vunpack.c.h.b16 %v617
        %v635 = vunpack.c.l.b16 %v618
        %v636 = vunpack.c.h.b16 %v618
        %v637 = vunpack.c.l.b16 %v619
        %v638 = vunpack.c.h.b16 %v619
        %v639 = vunpack.c.l.b16 %v620
        %v640 = vunpack.c.h.b16 %v620
        %v641 = vunpack.c.l.b16 %v621
        %v642 = vunpack.c.h.b16 %v621
        %v643 = vunpack.c.l.b16 %v622
        %v644 = vunpack.c.h.b16 %v622
        %v645 = vunpack.c.l.b16 %v623
        %v646 = vunpack.c.h.b16 %v623
        %v647 = vunpack.c.l.b16 %v624
        %v648 = vunpack.c.h.b16 %v624
        %v649 = vpack.c.b16 %v633, %v633
        %v650 = vpack.c.b16 %v634, %v634
        %v651 = vpack.c.b16 %v635, %v635
        %v652 = vpack.c.b16 %v636, %v636
        %v653 = vpack.c.b16 %v637, %v637
        %v654 = vpack.c.b16 %v638, %v638
        %v655 = vpack.c.b16 %v639, %v639
        %v656 = vpack.c.b16 %v640, %v640
        %v657 = vpack.c.b16 %v641, %v641
        %v658 = vpack.c.b16 %v642, %v642
        %v659 = vpack.c.b16 %v643, %v643
        %v660 = vpack.c.b16 %v644, %v644
        %v661 = vpack.c.b16 %v645, %v645
        %v662 = vpack.c.b16 %v646, %v646
        %v663 = vpack.c.b16 %v647, %v647
        %v664 = vpack.c.b16 %v648, %v648
        %vm681 = vcmask 60416
        %682 = vst.msk [vmem:[%s269] sm:$0xf] %vm681, %v649
        %683 = vst.msk [vmem:[%s269 + $0x4] sm:$0xf] %vm681, %v650
        %684 = vst.msk [vmem:[%s269 + $0x8] sm:$0xf] %vm681, %v651
        %685 = vst.msk [vmem:[%s269 + $0xc] sm:$0xf] %vm681, %v652
        %686 = vst.msk [vmem:[%s269 + $0x10] sm:$0xf] %vm681, %v653
        %687 = vst.msk [vmem:[%s269 + $0x14] sm:$0xf] %vm681, %v654
        %688 = vst.msk [vmem:[%s269 + $0x18] sm:$0xf] %vm681, %v655
        %689 = vst.msk [vmem:[%s269 + $0x1c] sm:$0xf] %vm681, %v656
        %690 = vst.msk [vmem:[%s269 + $0x20] sm:$0xf] %vm681, %v657
        %691 = vst.msk [vmem:[%s269 + $0x24] sm:$0xf] %vm681, %v658
        %692 = vst.msk [vmem:[%s269 + $0x28] sm:$0xf] %vm681, %v659
        %693 = vst.msk [vmem:[%s269 + $0x2c] sm:$0xf] %vm681, %v660
        %694 = vst.msk [vmem:[%s269 + $0x30] sm:$0xf] %vm681, %v661
        %695 = vst.msk [vmem:[%s269 + $0x34] sm:$0xf] %vm681, %v662
        %696 = vst.msk [vmem:[%s269 + $0x38] sm:$0xf] %vm681, %v663
        %697 = vst.msk [vmem:[%s269 + $0x3c] sm:$0xf] %vm681, %v664
        %698 = vrot.lane.b32.xlu0 %v649, 120
        %v699 = vpop.permute.xlu0 %698
        %700 = vrot.lane.b32.xlu0 %v650, 120
        %v701 = vpop.permute.xlu0 %700
        %702 = vrot.lane.b32.xlu0 %v651, 120
        %v703 = vpop.permute.xlu0 %702
        %704 = vrot.lane.b32.xlu0 %v652, 120
        %v705 = vpop.permute.xlu0 %704
        %706 = vrot.lane.b32.xlu0 %v653, 120
        %v707 = vpop.permute.xlu0 %706
        %708 = vrot.lane.b32.xlu0 %v654, 120
        %v709 = vpop.permute.xlu0 %708
        %710 = vrot.lane.b32.xlu0 %v655, 120
        %v711 = vpop.permute.xlu0 %710
        %712 = vrot.lane.b32.xlu0 %v656, 120
        %v713 = vpop.permute.xlu0 %712
        %714 = vrot.lane.b32.xlu0 %v657, 120
        %v715 = vpop.permute.xlu0 %714
        %716 = vrot.lane.b32.xlu0 %v658, 120
        %v717 = vpop.permute.xlu0 %716
        %718 = vrot.lane.b32.xlu0 %v659, 120
        %v719 = vpop.permute.xlu0 %718
        %720 = vrot.lane.b32.xlu0 %v660, 120
        %v721 = vpop.permute.xlu0 %720
        %722 = vrot.lane.b32.xlu0 %v661, 120
        %v723 = vpop.permute.xlu0 %722
        %724 = vrot.lane.b32.xlu0 %v662, 120
        %v725 = vpop.permute.xlu0 %724
        %726 = vrot.lane.b32.xlu0 %v663, 120
        %v727 = vpop.permute.xlu0 %726
        %728 = vrot.lane.b32.xlu0 %v664, 120
        %v729 = vpop.permute.xlu0 %728
        %746 = vst.msk [vmem:[%s275] sm:$0xf] %vm681, %v699
        %747 = vst.msk [vmem:[%s275 + $0x4] sm:$0xf] %vm681, %v701
        %748 = vst.msk [vmem:[%s275 + $0x8] sm:$0xf] %vm681, %v703
        %749 = vst.msk [vmem:[%s275 + $0xc] sm:$0xf] %vm681, %v705
        %750 = vst.msk [vmem:[%s275 + $0x10] sm:$0xf] %vm681, %v707
        %751 = vst.msk [vmem:[%s275 + $0x14] sm:$0xf] %vm681, %v709
        %752 = vst.msk [vmem:[%s275 + $0x18] sm:$0xf] %vm681, %v711
        %753 = vst.msk [vmem:[%s275 + $0x1c] sm:$0xf] %vm681, %v713
        %754 = vst.msk [vmem:[%s275 + $0x20] sm:$0xf] %vm681, %v715
        %755 = vst.msk [vmem:[%s275 + $0x24] sm:$0xf] %vm681, %v717
        %756 = vst.msk [vmem:[%s275 + $0x28] sm:$0xf] %vm681, %v719
        %757 = vst.msk [vmem:[%s275 + $0x2c] sm:$0xf] %vm681, %v721
        %758 = vst.msk [vmem:[%s275 + $0x30] sm:$0xf] %vm681, %v723
        %759 = vst.msk [vmem:[%s275 + $0x34] sm:$0xf] %vm681, %v725
        %760 = vst.msk [vmem:[%s275 + $0x38] sm:$0xf] %vm681, %v727
        %761 = vst.msk [vmem:[%s275 + $0x3c] sm:$0xf] %vm681, %v729
        %762 = vrot.lane.b32.xlu0 %v649, 112
        %v763 = vpop.permute.xlu0 %762
        %764 = vrot.lane.b32.xlu0 %v650, 112
        %v765 = vpop.permute.xlu0 %764
        %766 = vrot.lane.b32.xlu0 %v651, 112
        %v767 = vpop.permute.xlu0 %766
        %768 = vrot.lane.b32.xlu0 %v652, 112
        %v769 = vpop.permute.xlu0 %768
        %770 = vrot.lane.b32.xlu0 %v653, 112
        %v771 = vpop.permute.xlu0 %770
        %772 = vrot.lane.b32.xlu0 %v654, 112
        %v773 = vpop.permute.xlu0 %772
        %774 = vrot.lane.b32.xlu0 %v655, 112
        %v775 = vpop.permute.xlu0 %774
        %776 = vrot.lane.b32.xlu0 %v656, 112
        %v777 = vpop.permute.xlu0 %776
        %778 = vrot.lane.b32.xlu0 %v657, 112
        %v779 = vpop.permute.xlu0 %778
        %780 = vrot.lane.b32.xlu0 %v658, 112
        %v781 = vpop.permute.xlu0 %780
        %782 = vrot.lane.b32.xlu0 %v659, 112
        %v783 = vpop.permute.xlu0 %782
        %784 = vrot.lane.b32.xlu0 %v660, 112
        %v785 = vpop.permute.xlu0 %784
        %786 = vrot.lane.b32.xlu0 %v661, 112
        %v787 = vpop.permute.xlu0 %786
        %788 = vrot.lane.b32.xlu0 %v662, 112
        %v789 = vpop.permute.xlu0 %788
        %790 = vrot.lane.b32.xlu0 %v663, 112
        %v791 = vpop.permute.xlu0 %790
        %792 = vrot.lane.b32.xlu0 %v664, 112
        %v793 = vpop.permute.xlu0 %792
        %810 = vst.msk [vmem:[%s281] sm:$0xf] %vm681, %v763
        %811 = vst.msk [vmem:[%s281 + $0x4] sm:$0xf] %vm681, %v765
        %812 = vst.msk [vmem:[%s281 + $0x8] sm:$0xf] %vm681, %v767
        %813 = vst.msk [vmem:[%s281 + $0xc] sm:$0xf] %vm681, %v769
        %814 = vst.msk [vmem:[%s281 + $0x10] sm:$0xf] %vm681, %v771
        %815 = vst.msk [vmem:[%s281 + $0x14] sm:$0xf] %vm681, %v773
        %816 = vst.msk [vmem:[%s281 + $0x18] sm:$0xf] %vm681, %v775
        %817 = vst.msk [vmem:[%s281 + $0x1c] sm:$0xf] %vm681, %v777
        %818 = vst.msk [vmem:[%s281 + $0x20] sm:$0xf] %vm681, %v779
        %819 = vst.msk [vmem:[%s281 + $0x24] sm:$0xf] %vm681, %v781
        %820 = vst.msk [vmem:[%s281 + $0x28] sm:$0xf] %vm681, %v783
        %821 = vst.msk [vmem:[%s281 + $0x2c] sm:$0xf] %vm681, %v785
        %822 = vst.msk [vmem:[%s281 + $0x30] sm:$0xf] %vm681, %v787
        %823 = vst.msk [vmem:[%s281 + $0x34] sm:$0xf] %vm681, %v789
        %824 = vst.msk [vmem:[%s281 + $0x38] sm:$0xf] %vm681, %v791
        %825 = vst.msk [vmem:[%s281 + $0x3c] sm:$0xf] %vm681, %v793
        %826 = vrot.lane.b32.xlu0 %v649, 104
        %v827 = vpop.permute.xlu0 %826
        %828 = vrot.lane.b32.xlu0 %v650, 104
        %v829 = vpop.permute.xlu0 %828
        %830 = vrot.lane.b32.xlu0 %v651, 104
        %v831 = vpop.permute.xlu0 %830
        %832 = vrot.lane.b32.xlu0 %v652, 104
        %v833 = vpop.permute.xlu0 %832
        %834 = vrot.lane.b32.xlu0 %v653, 104
        %v835 = vpop.permute.xlu0 %834
        %836 = vrot.lane.b32.xlu0 %v654, 104
        %v837 = vpop.permute.xlu0 %836
        %838 = vrot.lane.b32.xlu0 %v655, 104
        %v839 = vpop.permute.xlu0 %838
        %840 = vrot.lane.b32.xlu0 %v656, 104
        %v841 = vpop.permute.xlu0 %840
        %842 = vrot.lane.b32.xlu0 %v657, 104
        %v843 = vpop.permute.xlu0 %842
        %844 = vrot.lane.b32.xlu0 %v658, 104
        %v845 = vpop.permute.xlu0 %844
        %846 = vrot.lane.b32.xlu0 %v659, 104
        %v847 = vpop.permute.xlu0 %846
        %848 = vrot.lane.b32.xlu0 %v660, 104
        %v849 = vpop.permute.xlu0 %848
        %850 = vrot.lane.b32.xlu0 %v661, 104
        %v851 = vpop.permute.xlu0 %850
        %852 = vrot.lane.b32.xlu0 %v662, 104
        %v853 = vpop.permute.xlu0 %852
        %854 = vrot.lane.b32.xlu0 %v663, 104
        %v855 = vpop.permute.xlu0 %854
        %856 = vrot.lane.b32.xlu0 %v664, 104
        %v857 = vpop.permute.xlu0 %856
        %s874 = scalar_lea.vmem %s269, 64 [#allocation2]
        %875 = vst.msk [vmem:[%s874] sm:$0xf] %vm681, %v827
        %876 = vst.msk [vmem:[%s874 + $0x4] sm:$0xf] %vm681, %v829
        %877 = vst.msk [vmem:[%s874 + $0x8] sm:$0xf] %vm681, %v831
        %878 = vst.msk [vmem:[%s874 + $0xc] sm:$0xf] %vm681, %v833
        %879 = vst.msk [vmem:[%s874 + $0x10] sm:$0xf] %vm681, %v835
        %880 = vst.msk [vmem:[%s874 + $0x14] sm:$0xf] %vm681, %v837
        %881 = vst.msk [vmem:[%s874 + $0x18] sm:$0xf] %vm681, %v839
        %882 = vst.msk [vmem:[%s874 + $0x1c] sm:$0xf] %vm681, %v841
        %883 = vst.msk [vmem:[%s874 + $0x20] sm:$0xf] %vm681, %v843
        %884 = vst.msk [vmem:[%s874 + $0x24] sm:$0xf] %vm681, %v845
        %885 = vst.msk [vmem:[%s874 + $0x28] sm:$0xf] %vm681, %v847
        %886 = vst.msk [vmem:[%s874 + $0x2c] sm:$0xf] %vm681, %v849
        %887 = vst.msk [vmem:[%s874 + $0x30] sm:$0xf] %vm681, %v851
        %888 = vst.msk [vmem:[%s874 + $0x34] sm:$0xf] %vm681, %v853
        %889 = vst.msk [vmem:[%s874 + $0x38] sm:$0xf] %vm681, %v855
        %890 = vst.msk [vmem:[%s874 + $0x3c] sm:$0xf] %vm681, %v857
        %891 = vrot.lane.b32.xlu0 %v649, 96
        %v892 = vpop.permute.xlu0 %891
        %893 = vrot.lane.b32.xlu0 %v650, 96
        %v894 = vpop.permute.xlu0 %893
        %895 = vrot.lane.b32.xlu0 %v651, 96
        %v896 = vpop.permute.xlu0 %895
        %897 = vrot.lane.b32.xlu0 %v652, 96
        %v898 = vpop.permute.xlu0 %897
        %899 = vrot.lane.b32.xlu0 %v653, 96
        %v900 = vpop.permute.xlu0 %899
        %901 = vrot.lane.b32.xlu0 %v654, 96
        %v902 = vpop.permute.xlu0 %901
        %903 = vrot.lane.b32.xlu0 %v655, 96
        %v904 = vpop.permute.xlu0 %903
        %905 = vrot.lane.b32.xlu0 %v656, 96
        %v906 = vpop.permute.xlu0 %905
        %907 = vrot.lane.b32.xlu0 %v657, 96
        %v908 = vpop.permute.xlu0 %907
        %909 = vrot.lane.b32.xlu0 %v658, 96
        %v910 = vpop.permute.xlu0 %909
        %911 = vrot.lane.b32.xlu0 %v659, 96
        %v912 = vpop.permute.xlu0 %911
        %913 = vrot.lane.b32.xlu0 %v660, 96
        %v914 = vpop.permute.xlu0 %913
        %915 = vrot.lane.b32.xlu0 %v661, 96
        %v916 = vpop.permute.xlu0 %915
        %917 = vrot.lane.b32.xlu0 %v662, 96
        %v918 = vpop.permute.xlu0 %917
        %919 = vrot.lane.b32.xlu0 %v663, 96
        %v920 = vpop.permute.xlu0 %919
        %921 = vrot.lane.b32.xlu0 %v664, 96
        %v922 = vpop.permute.xlu0 %921
        %s939 = scalar_lea.vmem %s275, 64 [#allocation3]
        %940 = vst.msk [vmem:[%s939] sm:$0xf] %vm681, %v892
        %941 = vst.msk [vmem:[%s939 + $0x4] sm:$0xf] %vm681, %v894
        %942 = vst.msk [vmem:[%s939 + $0x8] sm:$0xf] %vm681, %v896
        %943 = vst.msk [vmem:[%s939 + $0xc] sm:$0xf] %vm681, %v898
        %944 = vst.msk [vmem:[%s939 + $0x10] sm:$0xf] %vm681, %v900
        %945 = vst.msk [vmem:[%s939 + $0x14] sm:$0xf] %vm681, %v902
        %946 = vst.msk [vmem:[%s939 + $0x18] sm:$0xf] %vm681, %v904
        %947 = vst.msk [vmem:[%s939 + $0x1c] sm:$0xf] %vm681, %v906
        %948 = vst.msk [vmem:[%s939 + $0x20] sm:$0xf] %vm681, %v908
        %949 = vst.msk [vmem:[%s939 + $0x24] sm:$0xf] %vm681, %v910
        %950 = vst.msk [vmem:[%s939 + $0x28] sm:$0xf] %vm681, %v912
        %951 = vst.msk [vmem:[%s939 + $0x2c] sm:$0xf] %vm681, %v914
        %952 = vst.msk [vmem:[%s939 + $0x30] sm:$0xf] %vm681, %v916
        %953 = vst.msk [vmem:[%s939 + $0x34] sm:$0xf] %vm681, %v918
        %954 = vst.msk [vmem:[%s939 + $0x38] sm:$0xf] %vm681, %v920
        %955 = vst.msk [vmem:[%s939 + $0x3c] sm:$0xf] %vm681, %v922
        %956 = vrot.lane.b32.xlu0 %v649, 88
        %v957 = vpop.permute.xlu0 %956
        %958 = vrot.lane.b32.xlu0 %v650, 88
        %v959 = vpop.permute.xlu0 %958
        %960 = vrot.lane.b32.xlu0 %v651, 88
        %v961 = vpop.permute.xlu0 %960
        %962 = vrot.lane.b32.xlu0 %v652, 88
        %v963 = vpop.permute.xlu0 %962
        %964 = vrot.lane.b32.xlu0 %v653, 88
        %v965 = vpop.permute.xlu0 %964
        %966 = vrot.lane.b32.xlu0 %v654, 88
        %v967 = vpop.permute.xlu0 %966
        %968 = vrot.lane.b32.xlu0 %v655, 88
        %v969 = vpop.permute.xlu0 %968
        %970 = vrot.lane.b32.xlu0 %v656, 88
        %v971 = vpop.permute.xlu0 %970
        %972 = vrot.lane.b32.xlu0 %v657, 88
        %v973 = vpop.permute.xlu0 %972
        %974 = vrot.lane.b32.xlu0 %v658, 88
        %v975 = vpop.permute.xlu0 %974
        %976 = vrot.lane.b32.xlu0 %v659, 88
        %v977 = vpop.permute.xlu0 %976
        %978 = vrot.lane.b32.xlu0 %v660, 88
        %v979 = vpop.permute.xlu0 %978
        %980 = vrot.lane.b32.xlu0 %v661, 88
        %v981 = vpop.permute.xlu0 %980
        %982 = vrot.lane.b32.xlu0 %v662, 88
        %v983 = vpop.permute.xlu0 %982
        %984 = vrot.lane.b32.xlu0 %v663, 88
        %v985 = vpop.permute.xlu0 %984
        %986 = vrot.lane.b32.xlu0 %v664, 88
        %v987 = vpop.permute.xlu0 %986
        %s1004 = scalar_lea.vmem %s281, 64 [#allocation4]
        %1005 = vst.msk [vmem:[%s1004] sm:$0xf] %vm681, %v957
        %1006 = vst.msk [vmem:[%s1004 + $0x4] sm:$0xf] %vm681, %v959
        %1007 = vst.msk [vmem:[%s1004 + $0x8] sm:$0xf] %vm681, %v961
        %1008 = vst.msk [vmem:[%s1004 + $0xc] sm:$0xf] %vm681, %v963
        %1009 = vst.msk [vmem:[%s1004 + $0x10] sm:$0xf] %vm681, %v965
        %1010 = vst.msk [vmem:[%s1004 + $0x14] sm:$0xf] %vm681, %v967
        %1011 = vst.msk [vmem:[%s1004 + $0x18] sm:$0xf] %vm681, %v969
        %1012 = vst.msk [vmem:[%s1004 + $0x1c] sm:$0xf] %vm681, %v971
        %1013 = vst.msk [vmem:[%s1004 + $0x20] sm:$0xf] %vm681, %v973
        %1014 = vst.msk [vmem:[%s1004 + $0x24] sm:$0xf] %vm681, %v975
        %1015 = vst.msk [vmem:[%s1004 + $0x28] sm:$0xf] %vm681, %v977
        %1016 = vst.msk [vmem:[%s1004 + $0x2c] sm:$0xf] %vm681, %v979
        %1017 = vst.msk [vmem:[%s1004 + $0x30] sm:$0xf] %vm681, %v981
        %1018 = vst.msk [vmem:[%s1004 + $0x34] sm:$0xf] %vm681, %v983
        %1019 = vst.msk [vmem:[%s1004 + $0x38] sm:$0xf] %vm681, %v985
        %1020 = vst.msk [vmem:[%s1004 + $0x3c] sm:$0xf] %vm681, %v987
        %1021 = vrot.lane.b32.xlu0 %v649, 80
        %v1022 = vpop.permute.xlu0 %1021
        %1023 = vrot.lane.b32.xlu0 %v650, 80
        %v1024 = vpop.permute.xlu0 %1023
        %1025 = vrot.lane.b32.xlu0 %v651, 80
        %v1026 = vpop.permute.xlu0 %1025
        %1027 = vrot.lane.b32.xlu0 %v652, 80
        %v1028 = vpop.permute.xlu0 %1027
        %1029 = vrot.lane.b32.xlu0 %v653, 80
        %v1030 = vpop.permute.xlu0 %1029
        %1031 = vrot.lane.b32.xlu0 %v654, 80
        %v1032 = vpop.permute.xlu0 %1031
        %1033 = vrot.lane.b32.xlu0 %v655, 80
        %v1034 = vpop.permute.xlu0 %1033
        %1035 = vrot.lane.b32.xlu0 %v656, 80
        %v1036 = vpop.permute.xlu0 %1035
        %1037 = vrot.lane.b32.xlu0 %v657, 80
        %v1038 = vpop.permute.xlu0 %1037
        %1039 = vrot.lane.b32.xlu0 %v658, 80
        %v1040 = vpop.permute.xlu0 %1039
        %1041 = vrot.lane.b32.xlu0 %v659, 80
        %v1042 = vpop.permute.xlu0 %1041
        %1043 = vrot.lane.b32.xlu0 %v660, 80
        %v1044 = vpop.permute.xlu0 %1043
        %1045 = vrot.lane.b32.xlu0 %v661, 80
        %v1046 = vpop.permute.xlu0 %1045
        %1047 = vrot.lane.b32.xlu0 %v662, 80
        %v1048 = vpop.permute.xlu0 %1047
        %1049 = vrot.lane.b32.xlu0 %v663, 80
        %v1050 = vpop.permute.xlu0 %1049
        %1051 = vrot.lane.b32.xlu0 %v664, 80
        %v1052 = vpop.permute.xlu0 %1051
        %s1069 = scalar_lea.vmem %s269, 128 [#allocation2]
        %1070 = vst.msk [vmem:[%s1069] sm:$0xf] %vm681, %v1022
        %1071 = vst.msk [vmem:[%s1069 + $0x4] sm:$0xf] %vm681, %v1024
        %1072 = vst.msk [vmem:[%s1069 + $0x8] sm:$0xf] %vm681, %v1026
        %1073 = vst.msk [vmem:[%s1069 + $0xc] sm:$0xf] %vm681, %v1028
        %1074 = vst.msk [vmem:[%s1069 + $0x10] sm:$0xf] %vm681, %v1030
        %1075 = vst.msk [vmem:[%s1069 + $0x14] sm:$0xf] %vm681, %v1032
        %1076 = vst.msk [vmem:[%s1069 + $0x18] sm:$0xf] %vm681, %v1034
        %1077 = vst.msk [vmem:[%s1069 + $0x1c] sm:$0xf] %vm681, %v1036
        %1078 = vst.msk [vmem:[%s1069 + $0x20] sm:$0xf] %vm681, %v1038
        %1079 = vst.msk [vmem:[%s1069 + $0x24] sm:$0xf] %vm681, %v1040
        %1080 = vst.msk [vmem:[%s1069 + $0x28] sm:$0xf] %vm681, %v1042
        %1081 = vst.msk [vmem:[%s1069 + $0x2c] sm:$0xf] %vm681, %v1044
        %1082 = vst.msk [vmem:[%s1069 + $0x30] sm:$0xf] %vm681, %v1046
        %1083 = vst.msk [vmem:[%s1069 + $0x34] sm:$0xf] %vm681, %v1048
        %1084 = vst.msk [vmem:[%s1069 + $0x38] sm:$0xf] %vm681, %v1050
        %1085 = vst.msk [vmem:[%s1069 + $0x3c] sm:$0xf] %vm681, %v1052
        %1086 = vrot.lane.b32.xlu0 %v649, 72
        %v1087 = vpop.permute.xlu0 %1086
        %1088 = vrot.lane.b32.xlu0 %v650, 72
        %v1089 = vpop.permute.xlu0 %1088
        %1090 = vrot.lane.b32.xlu0 %v651, 72
        %v1091 = vpop.permute.xlu0 %1090
        %1092 = vrot.lane.b32.xlu0 %v652, 72
        %v1093 = vpop.permute.xlu0 %1092
        %1094 = vrot.lane.b32.xlu0 %v653, 72
        %v1095 = vpop.permute.xlu0 %1094
        %1096 = vrot.lane.b32.xlu0 %v654, 72
        %v1097 = vpop.permute.xlu0 %1096
        %1098 = vrot.lane.b32.xlu0 %v655, 72
        %v1099 = vpop.permute.xlu0 %1098
        %1100 = vrot.lane.b32.xlu0 %v656, 72
        %v1101 = vpop.permute.xlu0 %1100
        %1102 = vrot.lane.b32.xlu0 %v657, 72
        %v1103 = vpop.permute.xlu0 %1102
        %1104 = vrot.lane.b32.xlu0 %v658, 72
        %v1105 = vpop.permute.xlu0 %1104
        %1106 = vrot.lane.b32.xlu0 %v659, 72
        %v1107 = vpop.permute.xlu0 %1106
        %1108 = vrot.lane.b32.xlu0 %v660, 72
        %v1109 = vpop.permute.xlu0 %1108
        %1110 = vrot.lane.b32.xlu0 %v661, 72
        %v1111 = vpop.permute.xlu0 %1110
        %1112 = vrot.lane.b32.xlu0 %v662, 72
        %v1113 = vpop.permute.xlu0 %1112
        %1114 = vrot.lane.b32.xlu0 %v663, 72
        %v1115 = vpop.permute.xlu0 %1114
        %1116 = vrot.lane.b32.xlu0 %v664, 72
        %v1117 = vpop.permute.xlu0 %1116
        %s1134 = scalar_lea.vmem %s275, 128 [#allocation3]
        %1135 = vst.msk [vmem:[%s1134] sm:$0xf] %vm681, %v1087
        %1136 = vst.msk [vmem:[%s1134 + $0x4] sm:$0xf] %vm681, %v1089
        %1137 = vst.msk [vmem:[%s1134 + $0x8] sm:$0xf] %vm681, %v1091
        %1138 = vst.msk [vmem:[%s1134 + $0xc] sm:$0xf] %vm681, %v1093
        %1139 = vst.msk [vmem:[%s1134 + $0x10] sm:$0xf] %vm681, %v1095
        %1140 = vst.msk [vmem:[%s1134 + $0x14] sm:$0xf] %vm681, %v1097
        %1141 = vst.msk [vmem:[%s1134 + $0x18] sm:$0xf] %vm681, %v1099
        %1142 = vst.msk [vmem:[%s1134 + $0x1c] sm:$0xf] %vm681, %v1101
        %1143 = vst.msk [vmem:[%s1134 + $0x20] sm:$0xf] %vm681, %v1103
        %1144 = vst.msk [vmem:[%s1134 + $0x24] sm:$0xf] %vm681, %v1105
        %1145 = vst.msk [vmem:[%s1134 + $0x28] sm:$0xf] %vm681, %v1107
        %1146 = vst.msk [vmem:[%s1134 + $0x2c] sm:$0xf] %vm681, %v1109
        %1147 = vst.msk [vmem:[%s1134 + $0x30] sm:$0xf] %vm681, %v1111
        %1148 = vst.msk [vmem:[%s1134 + $0x34] sm:$0xf] %vm681, %v1113
        %1149 = vst.msk [vmem:[%s1134 + $0x38] sm:$0xf] %vm681, %v1115
        %1150 = vst.msk [vmem:[%s1134 + $0x3c] sm:$0xf] %vm681, %v1117
        %1151 = vrot.lane.b32.xlu0 %v649, 64
        %v1152 = vpop.permute.xlu0 %1151
        %1153 = vrot.lane.b32.xlu0 %v650, 64
        %v1154 = vpop.permute.xlu0 %1153
        %1155 = vrot.lane.b32.xlu0 %v651, 64
        %v1156 = vpop.permute.xlu0 %1155
        %1157 = vrot.lane.b32.xlu0 %v652, 64
        %v1158 = vpop.permute.xlu0 %1157
        %1159 = vrot.lane.b32.xlu0 %v653, 64
        %v1160 = vpop.permute.xlu0 %1159
        %1161 = vrot.lane.b32.xlu0 %v654, 64
        %v1162 = vpop.permute.xlu0 %1161
        %1163 = vrot.lane.b32.xlu0 %v655, 64
        %v1164 = vpop.permute.xlu0 %1163
        %1165 = vrot.lane.b32.xlu0 %v656, 64
        %v1166 = vpop.permute.xlu0 %1165
        %1167 = vrot.lane.b32.xlu0 %v657, 64
        %v1168 = vpop.permute.xlu0 %1167
        %1169 = vrot.lane.b32.xlu0 %v658, 64
        %v1170 = vpop.permute.xlu0 %1169
        %1171 = vrot.lane.b32.xlu0 %v659, 64
        %v1172 = vpop.permute.xlu0 %1171
        %1173 = vrot.lane.b32.xlu0 %v660, 64
        %v1174 = vpop.permute.xlu0 %1173
        %1175 = vrot.lane.b32.xlu0 %v661, 64
        %v1176 = vpop.permute.xlu0 %1175
        %1177 = vrot.lane.b32.xlu0 %v662, 64
        %v1178 = vpop.permute.xlu0 %1177
        %1179 = vrot.lane.b32.xlu0 %v663, 64
        %v1180 = vpop.permute.xlu0 %1179
        %1181 = vrot.lane.b32.xlu0 %v664, 64
        %v1182 = vpop.permute.xlu0 %1181
        %s1199 = scalar_lea.vmem %s281, 128 [#allocation4]
        %1200 = vst.msk [vmem:[%s1199] sm:$0xf] %vm681, %v1152
        %1201 = vst.msk [vmem:[%s1199 + $0x4] sm:$0xf] %vm681, %v1154
        %1202 = vst.msk [vmem:[%s1199 + $0x8] sm:$0xf] %vm681, %v1156
        %1203 = vst.msk [vmem:[%s1199 + $0xc] sm:$0xf] %vm681, %v1158
        %1204 = vst.msk [vmem:[%s1199 + $0x10] sm:$0xf] %vm681, %v1160
        %1205 = vst.msk [vmem:[%s1199 + $0x14] sm:$0xf] %vm681, %v1162
        %1206 = vst.msk [vmem:[%s1199 + $0x18] sm:$0xf] %vm681, %v1164
        %1207 = vst.msk [vmem:[%s1199 + $0x1c] sm:$0xf] %vm681, %v1166
        %1208 = vst.msk [vmem:[%s1199 + $0x20] sm:$0xf] %vm681, %v1168
        %1209 = vst.msk [vmem:[%s1199 + $0x24] sm:$0xf] %vm681, %v1170
        %1210 = vst.msk [vmem:[%s1199 + $0x28] sm:$0xf] %vm681, %v1172
        %1211 = vst.msk [vmem:[%s1199 + $0x2c] sm:$0xf] %vm681, %v1174
        %1212 = vst.msk [vmem:[%s1199 + $0x30] sm:$0xf] %vm681, %v1176
        %1213 = vst.msk [vmem:[%s1199 + $0x34] sm:$0xf] %vm681, %v1178
        %1214 = vst.msk [vmem:[%s1199 + $0x38] sm:$0xf] %vm681, %v1180
        %1215 = vst.msk [vmem:[%s1199 + $0x3c] sm:$0xf] %vm681, %v1182
        %1216 = vrot.lane.b32.xlu0 %v649, 56
        %v1217 = vpop.permute.xlu0 %1216
        %1218 = vrot.lane.b32.xlu0 %v650, 56
        %v1219 = vpop.permute.xlu0 %1218
        %1220 = vrot.lane.b32.xlu0 %v651, 56
        %v1221 = vpop.permute.xlu0 %1220
        %1222 = vrot.lane.b32.xlu0 %v652, 56
        %v1223 = vpop.permute.xlu0 %1222
        %1224 = vrot.lane.b32.xlu0 %v653, 56
        %v1225 = vpop.permute.xlu0 %1224
        %1226 = vrot.lane.b32.xlu0 %v654, 56
        %v1227 = vpop.permute.xlu0 %1226
        %1228 = vrot.lane.b32.xlu0 %v655, 56
        %v1229 = vpop.permute.xlu0 %1228
        %1230 = vrot.lane.b32.xlu0 %v656, 56
        %v1231 = vpop.permute.xlu0 %1230
        %1232 = vrot.lane.b32.xlu0 %v657, 56
        %v1233 = vpop.permute.xlu0 %1232
        %1234 = vrot.lane.b32.xlu0 %v658, 56
        %v1235 = vpop.permute.xlu0 %1234
        %1236 = vrot.lane.b32.xlu0 %v659, 56
        %v1237 = vpop.permute.xlu0 %1236
        %1238 = vrot.lane.b32.xlu0 %v660, 56
        %v1239 = vpop.permute.xlu0 %1238
        %1240 = vrot.lane.b32.xlu0 %v661, 56
        %v1241 = vpop.permute.xlu0 %1240
        %1242 = vrot.lane.b32.xlu0 %v662, 56
        %v1243 = vpop.permute.xlu0 %1242
        %1244 = vrot.lane.b32.xlu0 %v663, 56
        %v1245 = vpop.permute.xlu0 %1244
        %1246 = vrot.lane.b32.xlu0 %v664, 56
        %v1247 = vpop.permute.xlu0 %1246
        %s1264 = scalar_lea.vmem %s269, 192 [#allocation2]
        %1265 = vst.msk [vmem:[%s1264] sm:$0xf] %vm681, %v1217
        %1266 = vst.msk [vmem:[%s1264 + $0x4] sm:$0xf] %vm681, %v1219
        %1267 = vst.msk [vmem:[%s1264 + $0x8] sm:$0xf] %vm681, %v1221
        %1268 = vst.msk [vmem:[%s1264 + $0xc] sm:$0xf] %vm681, %v1223
        %1269 = vst.msk [vmem:[%s1264 + $0x10] sm:$0xf] %vm681, %v1225
        %1270 = vst.msk [vmem:[%s1264 + $0x14] sm:$0xf] %vm681, %v1227
        %1271 = vst.msk [vmem:[%s1264 + $0x18] sm:$0xf] %vm681, %v1229
        %1272 = vst.msk [vmem:[%s1264 + $0x1c] sm:$0xf] %vm681, %v1231
        %1273 = vst.msk [vmem:[%s1264 + $0x20] sm:$0xf] %vm681, %v1233
        %1274 = vst.msk [vmem:[%s1264 + $0x24] sm:$0xf] %vm681, %v1235
        %1275 = vst.msk [vmem:[%s1264 + $0x28] sm:$0xf] %vm681, %v1237
        %1276 = vst.msk [vmem:[%s1264 + $0x2c] sm:$0xf] %vm681, %v1239
        %1277 = vst.msk [vmem:[%s1264 + $0x30] sm:$0xf] %vm681, %v1241
        %1278 = vst.msk [vmem:[%s1264 + $0x34] sm:$0xf] %vm681, %v1243
        %1279 = vst.msk [vmem:[%s1264 + $0x38] sm:$0xf] %vm681, %v1245
        %1280 = vst.msk [vmem:[%s1264 + $0x3c] sm:$0xf] %vm681, %v1247
        %1281 = vrot.lane.b32.xlu0 %v649, 48
        %v1282 = vpop.permute.xlu0 %1281
        %1283 = vrot.lane.b32.xlu0 %v650, 48
        %v1284 = vpop.permute.xlu0 %1283
        %1285 = vrot.lane.b32.xlu0 %v651, 48
        %v1286 = vpop.permute.xlu0 %1285
        %1287 = vrot.lane.b32.xlu0 %v652, 48
        %v1288 = vpop.permute.xlu0 %1287
        %1289 = vrot.lane.b32.xlu0 %v653, 48
        %v1290 = vpop.permute.xlu0 %1289
        %1291 = vrot.lane.b32.xlu0 %v654, 48
        %v1292 = vpop.permute.xlu0 %1291
        %1293 = vrot.lane.b32.xlu0 %v655, 48
        %v1294 = vpop.permute.xlu0 %1293
        %1295 = vrot.lane.b32.xlu0 %v656, 48
        %v1296 = vpop.permute.xlu0 %1295
        %1297 = vrot.lane.b32.xlu0 %v657, 48
        %v1298 = vpop.permute.xlu0 %1297
        %1299 = vrot.lane.b32.xlu0 %v658, 48
        %v1300 = vpop.permute.xlu0 %1299
        %1301 = vrot.lane.b32.xlu0 %v659, 48
        %v1302 = vpop.permute.xlu0 %1301
        %1303 = vrot.lane.b32.xlu0 %v660, 48
        %v1304 = vpop.permute.xlu0 %1303
        %1305 = vrot.lane.b32.xlu0 %v661, 48
        %v1306 = vpop.permute.xlu0 %1305
        %1307 = vrot.lane.b32.xlu0 %v662, 48
        %v1308 = vpop.permute.xlu0 %1307
        %1309 = vrot.lane.b32.xlu0 %v663, 48
        %v1310 = vpop.permute.xlu0 %1309
        %1311 = vrot.lane.b32.xlu0 %v664, 48
        %v1312 = vpop.permute.xlu0 %1311
        %s1329 = scalar_lea.vmem %s275, 192 [#allocation3]
        %1330 = vst.msk [vmem:[%s1329] sm:$0xf] %vm681, %v1282
        %1331 = vst.msk [vmem:[%s1329 + $0x4] sm:$0xf] %vm681, %v1284
        %1332 = vst.msk [vmem:[%s1329 + $0x8] sm:$0xf] %vm681, %v1286
        %1333 = vst.msk [vmem:[%s1329 + $0xc] sm:$0xf] %vm681, %v1288
        %1334 = vst.msk [vmem:[%s1329 + $0x10] sm:$0xf] %vm681, %v1290
        %1335 = vst.msk [vmem:[%s1329 + $0x14] sm:$0xf] %vm681, %v1292
        %1336 = vst.msk [vmem:[%s1329 + $0x18] sm:$0xf] %vm681, %v1294
        %1337 = vst.msk [vmem:[%s1329 + $0x1c] sm:$0xf] %vm681, %v1296
        %1338 = vst.msk [vmem:[%s1329 + $0x20] sm:$0xf] %vm681, %v1298
        %1339 = vst.msk [vmem:[%s1329 + $0x24] sm:$0xf] %vm681, %v1300
        %1340 = vst.msk [vmem:[%s1329 + $0x28] sm:$0xf] %vm681, %v1302
        %1341 = vst.msk [vmem:[%s1329 + $0x2c] sm:$0xf] %vm681, %v1304
        %1342 = vst.msk [vmem:[%s1329 + $0x30] sm:$0xf] %vm681, %v1306
        %1343 = vst.msk [vmem:[%s1329 + $0x34] sm:$0xf] %vm681, %v1308
        %1344 = vst.msk [vmem:[%s1329 + $0x38] sm:$0xf] %vm681, %v1310
        %1345 = vst.msk [vmem:[%s1329 + $0x3c] sm:$0xf] %vm681, %v1312
        %1346 = vrot.lane.b32.xlu0 %v649, 40
        %v1347 = vpop.permute.xlu0 %1346
        %1348 = vrot.lane.b32.xlu0 %v650, 40
        %v1349 = vpop.permute.xlu0 %1348
        %1350 = vrot.lane.b32.xlu0 %v651, 40
        %v1351 = vpop.permute.xlu0 %1350
        %1352 = vrot.lane.b32.xlu0 %v652, 40
        %v1353 = vpop.permute.xlu0 %1352
        %1354 = vrot.lane.b32.xlu0 %v653, 40
        %v1355 = vpop.permute.xlu0 %1354
        %1356 = vrot.lane.b32.xlu0 %v654, 40
        %v1357 = vpop.permute.xlu0 %1356
        %1358 = vrot.lane.b32.xlu0 %v655, 40
        %v1359 = vpop.permute.xlu0 %1358
        %1360 = vrot.lane.b32.xlu0 %v656, 40
        %v1361 = vpop.permute.xlu0 %1360
        %1362 = vrot.lane.b32.xlu0 %v657, 40
        %v1363 = vpop.permute.xlu0 %1362
        %1364 = vrot.lane.b32.xlu0 %v658, 40
        %v1365 = vpop.permute.xlu0 %1364
        %1366 = vrot.lane.b32.xlu0 %v659, 40
        %v1367 = vpop.permute.xlu0 %1366
        %1368 = vrot.lane.b32.xlu0 %v660, 40
        %v1369 = vpop.permute.xlu0 %1368
        %1370 = vrot.lane.b32.xlu0 %v661, 40
        %v1371 = vpop.permute.xlu0 %1370
        %1372 = vrot.lane.b32.xlu0 %v662, 40
        %v1373 = vpop.permute.xlu0 %1372
        %1374 = vrot.lane.b32.xlu0 %v663, 40
        %v1375 = vpop.permute.xlu0 %1374
        %1376 = vrot.lane.b32.xlu0 %v664, 40
        %v1377 = vpop.permute.xlu0 %1376
        %s1394 = scalar_lea.vmem %s281, 192 [#allocation4]
        %1395 = vst.msk [vmem:[%s1394] sm:$0xf] %vm681, %v1347
        %1396 = vst.msk [vmem:[%s1394 + $0x4] sm:$0xf] %vm681, %v1349
        %1397 = vst.msk [vmem:[%s1394 + $0x8] sm:$0xf] %vm681, %v1351
        %1398 = vst.msk [vmem:[%s1394 + $0xc] sm:$0xf] %vm681, %v1353
        %1399 = vst.msk [vmem:[%s1394 + $0x10] sm:$0xf] %vm681, %v1355
        %1400 = vst.msk [vmem:[%s1394 + $0x14] sm:$0xf] %vm681, %v1357
        %1401 = vst.msk [vmem:[%s1394 + $0x18] sm:$0xf] %vm681, %v1359
        %1402 = vst.msk [vmem:[%s1394 + $0x1c] sm:$0xf] %vm681, %v1361
        %1403 = vst.msk [vmem:[%s1394 + $0x20] sm:$0xf] %vm681, %v1363
        %1404 = vst.msk [vmem:[%s1394 + $0x24] sm:$0xf] %vm681, %v1365
        %1405 = vst.msk [vmem:[%s1394 + $0x28] sm:$0xf] %vm681, %v1367
        %1406 = vst.msk [vmem:[%s1394 + $0x2c] sm:$0xf] %vm681, %v1369
        %1407 = vst.msk [vmem:[%s1394 + $0x30] sm:$0xf] %vm681, %v1371
        %1408 = vst.msk [vmem:[%s1394 + $0x34] sm:$0xf] %vm681, %v1373
        %1409 = vst.msk [vmem:[%s1394 + $0x38] sm:$0xf] %vm681, %v1375
        %1410 = vst.msk [vmem:[%s1394 + $0x3c] sm:$0xf] %vm681, %v1377
        %s1411 = sand.u32 %s123, 1
        %s1412 = sand.u32 %s123, 1
        %s1413 = smul.addr %s1412, 256
        %s1414 = scalar_lea.vmem [#allocation2], %s1413
        %s1415 = sand.u32 %s153, 1
        %s1416 = sand.u32 %s153, 1
        %s1417 = smul.addr %s1416, 256
        %s1418 = scalar_lea.vmem [#allocation3], %s1417
        %s1419 = sand.u32 %s183, 1
        %s1420 = sand.u32 %s183, 1
        %s1421 = smul.addr %s1420, 256
        %s1422 = scalar_lea.vmem [#allocation4], %s1421
        // Predicated region
        $region33: #{tpu_custom_call.1} parent=31 // pred_check
          %p1423 = pneg %p133
        $region34: #{tpu_custom_call.1} parent=31 // pred_check_branch
          %1425 = sbr.rel (%p1423) target = $region36
        $region35: #{tpu_custom_call.1} parent=31 // pred_region
          %s1426 = smul.u32 4, %s24
          %s1427 = smul.u32 16, %s23
          %s1428 = smul.addr %s1426, 32
          %s1429 = sadd.s32 %s1427, %s1428
          %s1430 = smul.addr %s22, 128
          %s1431 = sadd.s32 %s1429, %s1430
          %s1432 = smul.addr %s1431, 4
          %s1433 = scalar_lea.vmem %s3, %s1432
          // Predicated region
          $region37: #{tpu_custom_call.1} parent=35 // pred_check
            _
          $region38: #{tpu_custom_call.1} parent=35 // pred_check_branch
            %1435 = sbr.rel (0) target = $region40
          $region39: #{tpu_custom_call.1} parent=35 // pred_region
            // Predicated region
            $region41: #{tpu_custom_call.1} parent=39 // pred_check
              _
            $region42: #{tpu_custom_call.1} parent=39 // pred_check_branch
              %1437 = sbr.rel target = $region44
            $region43: #{tpu_custom_call.1} parent=39 // pred_region
              // Predicated region
              $region56: #{tpu_custom_call.1} parent=43 // pred_check
                _
              $region57: #{tpu_custom_call.1} parent=43 // pred_check_branch
                %1578 = sbr.rel (0) target = $region59
              $region58: #{tpu_custom_call.1} parent=43 // pred_region
                loop: start=0, step=1, limit=1
                $region60: #{tpu_custom_call.1} parent=58 // loop_pre_header
                  _
                $region61: #{tpu_custom_call.1} parent=58 // loop_header
                  %s1580 = sphi 0, %s1584
                  %p1581 = scmp.ge.s32.totalorder %s1580, 1
                  %s1585 = sphi %s1414, %s1414
                  %s1586 = sphi %s1433, %s1433
                $region62: #{tpu_custom_call.1} parent=58 // loop_header_branch
                  %1583 = sbr.rel (%p1581) target = $region66
                $region63: #{tpu_custom_call.1} parent=58 // loop_body
                  _
                $region64: #{tpu_custom_call.1} parent=58 // loop_footer
                  %s1584 = sadd.s32 1, %s1580
                $region65: #{tpu_custom_call.1} parent=58 // loop_footer_branch
                  %1579 = sbr.rel target = $region61
                $region66: #{tpu_custom_call.1} parent=58 // loop_exit
                  _
                loop: start=0, step=1, limit=1
                $region67: #{tpu_custom_call.1} parent=58 // loop_pre_header
                  _
                $region68: #{tpu_custom_call.1} parent=58 // loop_header
                  %s1589 = sphi 0, %s1593
                  %p1590 = scmp.ge.s32.totalorder %s1589, 1
                  %s1594 = sphi %s1414, %s1414
                  %s1595 = sphi %s1433, %s1433
                $region69: #{tpu_custom_call.1} parent=58 // loop_header_branch
                  %1592 = sbr.rel (%p1590) target = $region73
                $region70: #{tpu_custom_call.1} parent=58 // loop_body
                  %v1596 = vld [vmem:[%s1594] sm:$0xf]
                  %1597 = vst [vmem:[%s1595] sm:$0xf] %v1596
                  %v1598 = vld [vmem:[%s1594 + $0x4] sm:$0xf]
                  %1599 = vst [vmem:[%s1595 + $0x4] sm:$0xf] %v1598
                  %v1600 = vld [vmem:[%s1594 + $0x8] sm:$0xf]
                  %1601 = vst [vmem:[%s1595 + $0x8] sm:$0xf] %v1600
                  %v1602 = vld [vmem:[%s1594 + $0xc] sm:$0xf]
                  %1603 = vst [vmem:[%s1595 + $0xc] sm:$0xf] %v1602
                  %v1604 = vld [vmem:[%s1594 + $0x10] sm:$0xf]
                  %1605 = vst [vmem:[%s1595 + $0x10] sm:$0xf] %v1604
                  %v1606 = vld [vmem:[%s1594 + $0x14] sm:$0xf]
                  %1607 = vst [vmem:[%s1595 + $0x14] sm:$0xf] %v1606
                  %v1608 = vld [vmem:[%s1594 + $0x18] sm:$0xf]
                  %1609 = vst [vmem:[%s1595 + $0x18] sm:$0xf] %v1608
                  %v1610 = vld [vmem:[%s1594 + $0x1c] sm:$0xf]
                  %1611 = vst [vmem:[%s1595 + $0x1c] sm:$0xf] %v1610
                  %v1612 = vld [vmem:[%s1594 + $0x20] sm:$0xf]
                  %1613 = vst [vmem:[%s1595 + $0x20] sm:$0xf] %v1612
                  %v1614 = vld [vmem:[%s1594 + $0x24] sm:$0xf]
                  %1615 = vst [vmem:[%s1595 + $0x24] sm:$0xf] %v1614
                  %v1616 = vld [vmem:[%s1594 + $0x28] sm:$0xf]
                  %1617 = vst [vmem:[%s1595 + $0x28] sm:$0xf] %v1616
                  %v1618 = vld [vmem:[%s1594 + $0x2c] sm:$0xf]
                  %1619 = vst [vmem:[%s1595 + $0x2c] sm:$0xf] %v1618
                  %v1620 = vld [vmem:[%s1594 + $0x30] sm:$0xf]
                  %1621 = vst [vmem:[%s1595 + $0x30] sm:$0xf] %v1620
                  %v1622 = vld [vmem:[%s1594 + $0x34] sm:$0xf]
                  %1623 = vst [vmem:[%s1595 + $0x34] sm:$0xf] %v1622
                  %v1624 = vld [vmem:[%s1594 + $0x38] sm:$0xf]
                  %1625 = vst [vmem:[%s1595 + $0x38] sm:$0xf] %v1624
                  %v1626 = vld [vmem:[%s1594 + $0x3c] sm:$0xf]
                  %1627 = vst [vmem:[%s1595 + $0x3c] sm:$0xf] %v1626
                  %v1628 = vld [vmem:[%s1594 + $0x40] sm:$0xf]
                  %1629 = vst [vmem:[%s1595 + $0x80] sm:$0xf] %v1628
                  %v1630 = vld [vmem:[%s1594 + $0x44] sm:$0xf]
                  %1631 = vst [vmem:[%s1595 + $0x84] sm:$0xf] %v1630
                  %v1632 = vld [vmem:[%s1594 + $0x48] sm:$0xf]
                  %1633 = vst [vmem:[%s1595 + $0x88] sm:$0xf] %v1632
                  %v1634 = vld [vmem:[%s1594 + $0x4c] sm:$0xf]
                  %1635 = vst [vmem:[%s1595 + $0x8c] sm:$0xf] %v1634
                  %v1636 = vld [vmem:[%s1594 + $0x50] sm:$0xf]
                  %1637 = vst [vmem:[%s1595 + $0x90] sm:$0xf] %v1636
                  %v1638 = vld [vmem:[%s1594 + $0x54] sm:$0xf]
                  %1639 = vst [vmem:[%s1595 + $0x94] sm:$0xf] %v1638
                  %v1640 = vld [vmem:[%s1594 + $0x58] sm:$0xf]
                  %1641 = vst [vmem:[%s1595 + $0x98] sm:$0xf] %v1640
                  %v1642 = vld [vmem:[%s1594 + $0x5c] sm:$0xf]
                  %1643 = vst [vmem:[%s1595 + $0x9c] sm:$0xf] %v1642
                  %v1644 = vld [vmem:[%s1594 + $0x60] sm:$0xf]
                  %1645 = vst [vmem:[%s1595 + $0xa0] sm:$0xf] %v1644
                  %v1646 = vld [vmem:[%s1594 + $0x64] sm:$0xf]
                  %1647 = vst [vmem:[%s1595 + $0xa4] sm:$0xf] %v1646
                  %v1648 = vld [vmem:[%s1594 + $0x68] sm:$0xf]
                  %1649 = vst [vmem:[%s1595 + $0xa8] sm:$0xf] %v1648
                  %v1650 = vld [vmem:[%s1594 + $0x6c] sm:$0xf]
                  %1651 = vst [vmem:[%s1595 + $0xac] sm:$0xf] %v1650
                  %v1652 = vld [vmem:[%s1594 + $0x70] sm:$0xf]
                  %1653 = vst [vmem:[%s1595 + $0xb0] sm:$0xf] %v1652
                  %v1654 = vld [vmem:[%s1594 + $0x74] sm:$0xf]
                  %1655 = vst [vmem:[%s1595 + $0xb4] sm:$0xf] %v1654
                  %v1656 = vld [vmem:[%s1594 + $0x78] sm:$0xf]
                  %1657 = vst [vmem:[%s1595 + $0xb8] sm:$0xf] %v1656
                  %v1658 = vld [vmem:[%s1594 + $0x7c] sm:$0xf]
                  %1659 = vst [vmem:[%s1595 + $0xbc] sm:$0xf] %v1658
                  %v1660 = vld [vmem:[%s1594 + $0x80] sm:$0xf]
                  %1661 = vst [vmem:[%s1595 + $0x100] sm:$0xf] %v1660
                  %v1662 = vld [vmem:[%s1594 + $0x84] sm:$0xf]
                  %1663 = vst [vmem:[%s1595 + $0x104] sm:$0xf] %v1662
                  %v1664 = vld [vmem:[%s1594 + $0x88] sm:$0xf]
                  %1665 = vst [vmem:[%s1595 + $0x108] sm:$0xf] %v1664
                  %v1666 = vld [vmem:[%s1594 + $0x8c] sm:$0xf]
                  %1667 = vst [vmem:[%s1595 + $0x10c] sm:$0xf] %v1666
                  %v1668 = vld [vmem:[%s1594 + $0x90] sm:$0xf]
                  %1669 = vst [vmem:[%s1595 + $0x110] sm:$0xf] %v1668
                  %v1670 = vld [vmem:[%s1594 + $0x94] sm:$0xf]
                  %1671 = vst [vmem:[%s1595 + $0x114] sm:$0xf] %v1670
                  %v1672 = vld [vmem:[%s1594 + $0x98] sm:$0xf]
                  %1673 = vst [vmem:[%s1595 + $0x118] sm:$0xf] %v1672
                  %v1674 = vld [vmem:[%s1594 + $0x9c] sm:$0xf]
                  %1675 = vst [vmem:[%s1595 + $0x11c] sm:$0xf] %v1674
                  %v1676 = vld [vmem:[%s1594 + $0xa0] sm:$0xf]
                  %1677 = vst [vmem:[%s1595 + $0x120] sm:$0xf] %v1676
                  %v1678 = vld [vmem:[%s1594 + $0xa4] sm:$0xf]
                  %1679 = vst [vmem:[%s1595 + $0x124] sm:$0xf] %v1678
                  %v1680 = vld [vmem:[%s1594 + $0xa8] sm:$0xf]
                  %1681 = vst [vmem:[%s1595 + $0x128] sm:$0xf] %v1680
                  %v1682 = vld [vmem:[%s1594 + $0xac] sm:$0xf]
                  %1683 = vst [vmem:[%s1595 + $0x12c] sm:$0xf] %v1682
                  %v1684 = vld [vmem:[%s1594 + $0xb0] sm:$0xf]
                  %1685 = vst [vmem:[%s1595 + $0x130] sm:$0xf] %v1684
                  %v1686 = vld [vmem:[%s1594 + $0xb4] sm:$0xf]
                  %1687 = vst [vmem:[%s1595 + $0x134] sm:$0xf] %v1686
                  %v1688 = vld [vmem:[%s1594 + $0xb8] sm:$0xf]
                  %1689 = vst [vmem:[%s1595 + $0x138] sm:$0xf] %v1688
                  %v1690 = vld [vmem:[%s1594 + $0xbc] sm:$0xf]
                  %1691 = vst [vmem:[%s1595 + $0x13c] sm:$0xf] %v1690
                  %v1692 = vld [vmem:[%s1594 + $0xc0] sm:$0xf]
                  %1693 = vst [vmem:[%s1595 + $0x180] sm:$0xf] %v1692
                  %v1694 = vld [vmem:[%s1594 + $0xc4] sm:$0xf]
                  %1695 = vst [vmem:[%s1595 + $0x184] sm:$0xf] %v1694
                  %v1696 = vld [vmem:[%s1594 + $0xc8] sm:$0xf]
                  %1697 = vst [vmem:[%s1595 + $0x188] sm:$0xf] %v1696
                  %v1698 = vld [vmem:[%s1594 + $0xcc] sm:$0xf]
                  %1699 = vst [vmem:[%s1595 + $0x18c] sm:$0xf] %v1698
                  %v1700 = vld [vmem:[%s1594 + $0xd0] sm:$0xf]
                  %1701 = vst [vmem:[%s1595 + $0x190] sm:$0xf] %v1700
                  %v1702 = vld [vmem:[%s1594 + $0xd4] sm:$0xf]
                  %1703 = vst [vmem:[%s1595 + $0x194] sm:$0xf] %v1702
                  %v1704 = vld [vmem:[%s1594 + $0xd8] sm:$0xf]
                  %1705 = vst [vmem:[%s1595 + $0x198] sm:$0xf] %v1704
                  %v1706 = vld [vmem:[%s1594 + $0xdc] sm:$0xf]
                  %1707 = vst [vmem:[%s1595 + $0x19c] sm:$0xf] %v1706
                  %v1708 = vld [vmem:[%s1594 + $0xe0] sm:$0xf]
                  %1709 = vst [vmem:[%s1595 + $0x1a0] sm:$0xf] %v1708
                  %v1710 = vld [vmem:[%s1594 + $0xe4] sm:$0xf]
                  %1711 = vst [vmem:[%s1595 + $0x1a4] sm:$0xf] %v1710
                  %v1712 = vld [vmem:[%s1594 + $0xe8] sm:$0xf]
                  %1713 = vst [vmem:[%s1595 + $0x1a8] sm:$0xf] %v1712
                  %v1714 = vld [vmem:[%s1594 + $0xec] sm:$0xf]
                  %1715 = vst [vmem:[%s1595 + $0x1ac] sm:$0xf] %v1714
                  %v1716 = vld [vmem:[%s1594 + $0xf0] sm:$0xf]
                  %1717 = vst [vmem:[%s1595 + $0x1b0] sm:$0xf] %v1716
                  %v1718 = vld [vmem:[%s1594 + $0xf4] sm:$0xf]
                  %1719 = vst [vmem:[%s1595 + $0x1b4] sm:$0xf] %v1718
                  %v1720 = vld [vmem:[%s1594 + $0xf8] sm:$0xf]
                  %1721 = vst [vmem:[%s1595 + $0x1b8] sm:$0xf] %v1720
                  %v1722 = vld [vmem:[%s1594 + $0xfc] sm:$0xf]
                  %1723 = vst [vmem:[%s1595 + $0x1bc] sm:$0xf] %v1722
                $region71: #{tpu_custom_call.1} parent=58 // loop_footer
                  %s1593 = sadd.s32 1, %s1589
                $region72: #{tpu_custom_call.1} parent=58 // loop_footer_branch
                  %1588 = sbr.rel target = $region68
                $region73: #{tpu_custom_call.1} parent=58 // loop_exit
                  _
              $region59: #{tpu_custom_call.1} parent=43 // pred_fallthru
                _
            $region44: #{tpu_custom_call.1} parent=39 // pred_fallthru
              _
            // Predicated region
            $region45: #{tpu_custom_call.1} parent=39 // pred_check
              _
            $region46: #{tpu_custom_call.1} parent=39 // pred_check_branch
              %1439 = sbr.rel (0) target = $region48
            $region47: #{tpu_custom_call.1} parent=39 // pred_region
              loop: start=0, step=1, limit=1
              $region49: #{tpu_custom_call.1} parent=47 // loop_pre_header
                _
              $region50: #{tpu_custom_call.1} parent=47 // loop_header
                %s1442 = sphi 0, %s1446
                %p1443 = scmp.ge.s32.totalorder %s1442, 1
                %s1447 = sphi %s1414, %s1414
                %s1448 = sphi %s1433, %s1433
              $region51: #{tpu_custom_call.1} parent=47 // loop_header_branch
                %1445 = sbr.rel (%p1443) target = $region55
              $region52: #{tpu_custom_call.1} parent=47 // loop_body
                %v1449 = vld [vmem:[%s1447] sm:$0xf]
                %1450 = vst [vmem:[%s1448] sm:$0xf] %v1449
                %v1451 = vld [vmem:[%s1447 + $0x4] sm:$0xf]
                %1452 = vst [vmem:[%s1448 + $0x4] sm:$0xf] %v1451
                %v1453 = vld [vmem:[%s1447 + $0x8] sm:$0xf]
                %1454 = vst [vmem:[%s1448 + $0x8] sm:$0xf] %v1453
                %v1455 = vld [vmem:[%s1447 + $0xc] sm:$0xf]
                %1456 = vst [vmem:[%s1448 + $0xc] sm:$0xf] %v1455
                %v1457 = vld [vmem:[%s1447 + $0x10] sm:$0xf]
                %1458 = vst [vmem:[%s1448 + $0x10] sm:$0xf] %v1457
                %v1459 = vld [vmem:[%s1447 + $0x14] sm:$0xf]
                %1460 = vst [vmem:[%s1448 + $0x14] sm:$0xf] %v1459
                %v1461 = vld [vmem:[%s1447 + $0x18] sm:$0xf]
                %1462 = vst [vmem:[%s1448 + $0x18] sm:$0xf] %v1461
                %v1463 = vld [vmem:[%s1447 + $0x1c] sm:$0xf]
                %1464 = vst [vmem:[%s1448 + $0x1c] sm:$0xf] %v1463
                %v1465 = vld [vmem:[%s1447 + $0x20] sm:$0xf]
                %1466 = vst [vmem:[%s1448 + $0x20] sm:$0xf] %v1465
                %v1467 = vld [vmem:[%s1447 + $0x24] sm:$0xf]
                %1468 = vst [vmem:[%s1448 + $0x24] sm:$0xf] %v1467
                %v1469 = vld [vmem:[%s1447 + $0x28] sm:$0xf]
                %1470 = vst [vmem:[%s1448 + $0x28] sm:$0xf] %v1469
                %v1471 = vld [vmem:[%s1447 + $0x2c] sm:$0xf]
                %1472 = vst [vmem:[%s1448 + $0x2c] sm:$0xf] %v1471
                %v1473 = vld [vmem:[%s1447 + $0x30] sm:$0xf]
                %1474 = vst [vmem:[%s1448 + $0x30] sm:$0xf] %v1473
                %v1475 = vld [vmem:[%s1447 + $0x34] sm:$0xf]
                %1476 = vst [vmem:[%s1448 + $0x34] sm:$0xf] %v1475
                %v1477 = vld [vmem:[%s1447 + $0x38] sm:$0xf]
                %1478 = vst [vmem:[%s1448 + $0x38] sm:$0xf] %v1477
                %v1479 = vld [vmem:[%s1447 + $0x3c] sm:$0xf]
                %1480 = vst [vmem:[%s1448 + $0x3c] sm:$0xf] %v1479
                %v1481 = vld [vmem:[%s1447 + $0x40] sm:$0xf]
                %1482 = vst [vmem:[%s1448 + $0x80] sm:$0xf] %v1481
                %v1483 = vld [vmem:[%s1447 + $0x44] sm:$0xf]
                %1484 = vst [vmem:[%s1448 + $0x84] sm:$0xf] %v1483
                %v1485 = vld [vmem:[%s1447 + $0x48] sm:$0xf]
                %1486 = vst [vmem:[%s1448 + $0x88] sm:$0xf] %v1485
                %v1487 = vld [vmem:[%s1447 + $0x4c] sm:$0xf]
                %1488 = vst [vmem:[%s1448 + $0x8c] sm:$0xf] %v1487
                %v1489 = vld [vmem:[%s1447 + $0x50] sm:$0xf]
                %1490 = vst [vmem:[%s1448 + $0x90] sm:$0xf] %v1489
                %v1491 = vld [vmem:[%s1447 + $0x54] sm:$0xf]
                %1492 = vst [vmem:[%s1448 + $0x94] sm:$0xf] %v1491
                %v1493 = vld [vmem:[%s1447 + $0x58] sm:$0xf]
                %1494 = vst [vmem:[%s1448 + $0x98] sm:$0xf] %v1493
                %v1495 = vld [vmem:[%s1447 + $0x5c] sm:$0xf]
                %1496 = vst [vmem:[%s1448 + $0x9c] sm:$0xf] %v1495
                %v1497 = vld [vmem:[%s1447 + $0x60] sm:$0xf]
                %1498 = vst [vmem:[%s1448 + $0xa0] sm:$0xf] %v1497
                %v1499 = vld [vmem:[%s1447 + $0x64] sm:$0xf]
                %1500 = vst [vmem:[%s1448 + $0xa4] sm:$0xf] %v1499
                %v1501 = vld [vmem:[%s1447 + $0x68] sm:$0xf]
                %1502 = vst [vmem:[%s1448 + $0xa8] sm:$0xf] %v1501
                %v1503 = vld [vmem:[%s1447 + $0x6c] sm:$0xf]
                %1504 = vst [vmem:[%s1448 + $0xac] sm:$0xf] %v1503
                %v1505 = vld [vmem:[%s1447 + $0x70] sm:$0xf]
                %1506 = vst [vmem:[%s1448 + $0xb0] sm:$0xf] %v1505
                %v1507 = vld [vmem:[%s1447 + $0x74] sm:$0xf]
                %1508 = vst [vmem:[%s1448 + $0xb4] sm:$0xf] %v1507
                %v1509 = vld [vmem:[%s1447 + $0x78] sm:$0xf]
                %1510 = vst [vmem:[%s1448 + $0xb8] sm:$0xf] %v1509
                %v1511 = vld [vmem:[%s1447 + $0x7c] sm:$0xf]
                %1512 = vst [vmem:[%s1448 + $0xbc] sm:$0xf] %v1511
                %v1513 = vld [vmem:[%s1447 + $0x80] sm:$0xf]
                %1514 = vst [vmem:[%s1448 + $0x100] sm:$0xf] %v1513
                %v1515 = vld [vmem:[%s1447 + $0x84] sm:$0xf]
                %1516 = vst [vmem:[%s1448 + $0x104] sm:$0xf] %v1515
                %v1517 = vld [vmem:[%s1447 + $0x88] sm:$0xf]
                %1518 = vst [vmem:[%s1448 + $0x108] sm:$0xf] %v1517
                %v1519 = vld [vmem:[%s1447 + $0x8c] sm:$0xf]
                %1520 = vst [vmem:[%s1448 + $0x10c] sm:$0xf] %v1519
                %v1521 = vld [vmem:[%s1447 + $0x90] sm:$0xf]
                %1522 = vst [vmem:[%s1448 + $0x110] sm:$0xf] %v1521
                %v1523 = vld [vmem:[%s1447 + $0x94] sm:$0xf]
                %1524 = vst [vmem:[%s1448 + $0x114] sm:$0xf] %v1523
                %v1525 = vld [vmem:[%s1447 + $0x98] sm:$0xf]
                %1526 = vst [vmem:[%s1448 + $0x118] sm:$0xf] %v1525
                %v1527 = vld [vmem:[%s1447 + $0x9c] sm:$0xf]
                %1528 = vst [vmem:[%s1448 + $0x11c] sm:$0xf] %v1527
                %v1529 = vld [vmem:[%s1447 + $0xa0] sm:$0xf]
                %1530 = vst [vmem:[%s1448 + $0x120] sm:$0xf] %v1529
                %v1531 = vld [vmem:[%s1447 + $0xa4] sm:$0xf]
                %1532 = vst [vmem:[%s1448 + $0x124] sm:$0xf] %v1531
                %v1533 = vld [vmem:[%s1447 + $0xa8] sm:$0xf]
                %1534 = vst [vmem:[%s1448 + $0x128] sm:$0xf] %v1533
                %v1535 = vld [vmem:[%s1447 + $0xac] sm:$0xf]
                %1536 = vst [vmem:[%s1448 + $0x12c] sm:$0xf] %v1535
                %v1537 = vld [vmem:[%s1447 + $0xb0] sm:$0xf]
                %1538 = vst [vmem:[%s1448 + $0x130] sm:$0xf] %v1537
                %v1539 = vld [vmem:[%s1447 + $0xb4] sm:$0xf]
                %1540 = vst [vmem:[%s1448 + $0x134] sm:$0xf] %v1539
                %v1541 = vld [vmem:[%s1447 + $0xb8] sm:$0xf]
                %1542 = vst [vmem:[%s1448 + $0x138] sm:$0xf] %v1541
                %v1543 = vld [vmem:[%s1447 + $0xbc] sm:$0xf]
                %1544 = vst [vmem:[%s1448 + $0x13c] sm:$0xf] %v1543
                %v1545 = vld [vmem:[%s1447 + $0xc0] sm:$0xf]
                %1546 = vst [vmem:[%s1448 + $0x180] sm:$0xf] %v1545
                %v1547 = vld [vmem:[%s1447 + $0xc4] sm:$0xf]
                %1548 = vst [vmem:[%s1448 + $0x184] sm:$0xf] %v1547
                %v1549 = vld [vmem:[%s1447 + $0xc8] sm:$0xf]
                %1550 = vst [vmem:[%s1448 + $0x188] sm:$0xf] %v1549
                %v1551 = vld [vmem:[%s1447 + $0xcc] sm:$0xf]
                %1552 = vst [vmem:[%s1448 + $0x18c] sm:$0xf] %v1551
                %v1553 = vld [vmem:[%s1447 + $0xd0] sm:$0xf]
                %1554 = vst [vmem:[%s1448 + $0x190] sm:$0xf] %v1553
                %v1555 = vld [vmem:[%s1447 + $0xd4] sm:$0xf]
                %1556 = vst [vmem:[%s1448 + $0x194] sm:$0xf] %v1555
                %v1557 = vld [vmem:[%s1447 + $0xd8] sm:$0xf]
                %1558 = vst [vmem:[%s1448 + $0x198] sm:$0xf] %v1557
                %v1559 = vld [vmem:[%s1447 + $0xdc] sm:$0xf]
                %1560 = vst [vmem:[%s1448 + $0x19c] sm:$0xf] %v1559
                %v1561 = vld [vmem:[%s1447 + $0xe0] sm:$0xf]
                %1562 = vst [vmem:[%s1448 + $0x1a0] sm:$0xf] %v1561
                %v1563 = vld [vmem:[%s1447 + $0xe4] sm:$0xf]
                %1564 = vst [vmem:[%s1448 + $0x1a4] sm:$0xf] %v1563
                %v1565 = vld [vmem:[%s1447 + $0xe8] sm:$0xf]
                %1566 = vst [vmem:[%s1448 + $0x1a8] sm:$0xf] %v1565
                %v1567 = vld [vmem:[%s1447 + $0xec] sm:$0xf]
                %1568 = vst [vmem:[%s1448 + $0x1ac] sm:$0xf] %v1567
                %v1569 = vld [vmem:[%s1447 + $0xf0] sm:$0xf]
                %1570 = vst [vmem:[%s1448 + $0x1b0] sm:$0xf] %v1569
                %v1571 = vld [vmem:[%s1447 + $0xf4] sm:$0xf]
                %1572 = vst [vmem:[%s1448 + $0x1b4] sm:$0xf] %v1571
                %v1573 = vld [vmem:[%s1447 + $0xf8] sm:$0xf]
                %1574 = vst [vmem:[%s1448 + $0x1b8] sm:$0xf] %v1573
                %v1575 = vld [vmem:[%s1447 + $0xfc] sm:$0xf]
                %1576 = vst [vmem:[%s1448 + $0x1bc] sm:$0xf] %v1575
              $region53: #{tpu_custom_call.1} parent=47 // loop_footer
                %s1446 = sadd.s32 1, %s1442
              $region54: #{tpu_custom_call.1} parent=47 // loop_footer_branch
                %1441 = sbr.rel target = $region50
              $region55: #{tpu_custom_call.1} parent=47 // loop_exit
                _
            $region48: #{tpu_custom_call.1} parent=39 // pred_fallthru
              _
          $region40: #{tpu_custom_call.1} parent=35 // pred_fallthru
            _
          %1724 = vnop
        $region36: #{tpu_custom_call.1} parent=31 // pred_fallthru
          _
        // Predicated region
        $region74: #{tpu_custom_call.1} parent=31 // pred_check
          %p1725 = pneg %p163
        $region75: #{tpu_custom_call.1} parent=31 // pred_check_branch
          %1727 = sbr.rel (%p1725) target = $region77
        $region76: #{tpu_custom_call.1} parent=31 // pred_region
          %s1728 = smul.u32 4, %s24
          %s1729 = smul.u32 16, %s23
          %s1730 = smul.addr %s1728, 32
          %s1731 = sadd.s32 %s1729, %s1730
          %s1732 = smul.addr %s22, 128
          %s1733 = sadd.s32 %s1731, %s1732
          %s1734 = smul.addr %s1733, 4
          %s1735 = scalar_lea.vmem %s4, %s1734
          // Predicated region
          $region78: #{tpu_custom_call.1} parent=76 // pred_check
            _
          $region79: #{tpu_custom_call.1} parent=76 // pred_check_branch
            %1737 = sbr.rel (0) target = $region81
          $region80: #{tpu_custom_call.1} parent=76 // pred_region
            // Predicated region
            $region82: #{tpu_custom_call.1} parent=80 // pred_check
              _
            $region83: #{tpu_custom_call.1} parent=80 // pred_check_branch
              %1739 = sbr.rel target = $region85
            $region84: #{tpu_custom_call.1} parent=80 // pred_region
              // Predicated region
              $region97: #{tpu_custom_call.1} parent=84 // pred_check
                _
              $region98: #{tpu_custom_call.1} parent=84 // pred_check_branch
                %1880 = sbr.rel (0) target = $region100
              $region99: #{tpu_custom_call.1} parent=84 // pred_region
                loop: start=0, step=1, limit=1
                $region101: #{tpu_custom_call.1} parent=99 // loop_pre_header
                  _
                $region102: #{tpu_custom_call.1} parent=99 // loop_header
                  %s1882 = sphi 0, %s1886
                  %p1883 = scmp.ge.s32.totalorder %s1882, 1
                  %s1887 = sphi %s1418, %s1418
                  %s1888 = sphi %s1735, %s1735
                $region103: #{tpu_custom_call.1} parent=99 // loop_header_branch
                  %1885 = sbr.rel (%p1883) target = $region107
                $region104: #{tpu_custom_call.1} parent=99 // loop_body
                  _
                $region105: #{tpu_custom_call.1} parent=99 // loop_footer
                  %s1886 = sadd.s32 1, %s1882
                $region106: #{tpu_custom_call.1} parent=99 // loop_footer_branch
                  %1881 = sbr.rel target = $region102
                $region107: #{tpu_custom_call.1} parent=99 // loop_exit
                  _
                loop: start=0, step=1, limit=1
                $region108: #{tpu_custom_call.1} parent=99 // loop_pre_header
                  _
                $region109: #{tpu_custom_call.1} parent=99 // loop_header
                  %s1891 = sphi 0, %s1895
                  %p1892 = scmp.ge.s32.totalorder %s1891, 1
                  %s1896 = sphi %s1418, %s1418
                  %s1897 = sphi %s1735, %s1735
                $region110: #{tpu_custom_call.1} parent=99 // loop_header_branch
                  %1894 = sbr.rel (%p1892) target = $region114
                $region111: #{tpu_custom_call.1} parent=99 // loop_body
                  %v1898 = vld [vmem:[%s1896] sm:$0xf]
                  %1899 = vst [vmem:[%s1897] sm:$0xf] %v1898
                  %v1900 = vld [vmem:[%s1896 + $0x4] sm:$0xf]
                  %1901 = vst [vmem:[%s1897 + $0x4] sm:$0xf] %v1900
                  %v1902 = vld [vmem:[%s1896 + $0x8] sm:$0xf]
                  %1903 = vst [vmem:[%s1897 + $0x8] sm:$0xf] %v1902
                  %v1904 = vld [vmem:[%s1896 + $0xc] sm:$0xf]
                  %1905 = vst [vmem:[%s1897 + $0xc] sm:$0xf] %v1904
                  %v1906 = vld [vmem:[%s1896 + $0x10] sm:$0xf]
                  %1907 = vst [vmem:[%s1897 + $0x10] sm:$0xf] %v1906
                  %v1908 = vld [vmem:[%s1896 + $0x14] sm:$0xf]
                  %1909 = vst [vmem:[%s1897 + $0x14] sm:$0xf] %v1908
                  %v1910 = vld [vmem:[%s1896 + $0x18] sm:$0xf]
                  %1911 = vst [vmem:[%s1897 + $0x18] sm:$0xf] %v1910
                  %v1912 = vld [vmem:[%s1896 + $0x1c] sm:$0xf]
                  %1913 = vst [vmem:[%s1897 + $0x1c] sm:$0xf] %v1912
                  %v1914 = vld [vmem:[%s1896 + $0x20] sm:$0xf]
                  %1915 = vst [vmem:[%s1897 + $0x20] sm:$0xf] %v1914
                  %v1916 = vld [vmem:[%s1896 + $0x24] sm:$0xf]
                  %1917 = vst [vmem:[%s1897 + $0x24] sm:$0xf] %v1916
                  %v1918 = vld [vmem:[%s1896 + $0x28] sm:$0xf]
                  %1919 = vst [vmem:[%s1897 + $0x28] sm:$0xf] %v1918
                  %v1920 = vld [vmem:[%s1896 + $0x2c] sm:$0xf]
                  %1921 = vst [vmem:[%s1897 + $0x2c] sm:$0xf] %v1920
                  %v1922 = vld [vmem:[%s1896 + $0x30] sm:$0xf]
                  %1923 = vst [vmem:[%s1897 + $0x30] sm:$0xf] %v1922
                  %v1924 = vld [vmem:[%s1896 + $0x34] sm:$0xf]
                  %1925 = vst [vmem:[%s1897 + $0x34] sm:$0xf] %v1924
                  %v1926 = vld [vmem:[%s1896 + $0x38] sm:$0xf]
                  %1927 = vst [vmem:[%s1897 + $0x38] sm:$0xf] %v1926
                  %v1928 = vld [vmem:[%s1896 + $0x3c] sm:$0xf]
                  %1929 = vst [vmem:[%s1897 + $0x3c] sm:$0xf] %v1928
                  %v1930 = vld [vmem:[%s1896 + $0x40] sm:$0xf]
                  %1931 = vst [vmem:[%s1897 + $0x80] sm:$0xf] %v1930
                  %v1932 = vld [vmem:[%s1896 + $0x44] sm:$0xf]
                  %1933 = vst [vmem:[%s1897 + $0x84] sm:$0xf] %v1932
                  %v1934 = vld [vmem:[%s1896 + $0x48] sm:$0xf]
                  %1935 = vst [vmem:[%s1897 + $0x88] sm:$0xf] %v1934
                  %v1936 = vld [vmem:[%s1896 + $0x4c] sm:$0xf]
                  %1937 = vst [vmem:[%s1897 + $0x8c] sm:$0xf] %v1936
                  %v1938 = vld [vmem:[%s1896 + $0x50] sm:$0xf]
                  %1939 = vst [vmem:[%s1897 + $0x90] sm:$0xf] %v1938
                  %v1940 = vld [vmem:[%s1896 + $0x54] sm:$0xf]
                  %1941 = vst [vmem:[%s1897 + $0x94] sm:$0xf] %v1940
                  %v1942 = vld [vmem:[%s1896 + $0x58] sm:$0xf]
                  %1943 = vst [vmem:[%s1897 + $0x98] sm:$0xf] %v1942
                  %v1944 = vld [vmem:[%s1896 + $0x5c] sm:$0xf]
                  %1945 = vst [vmem:[%s1897 + $0x9c] sm:$0xf] %v1944
                  %v1946 = vld [vmem:[%s1896 + $0x60] sm:$0xf]
                  %1947 = vst [vmem:[%s1897 + $0xa0] sm:$0xf] %v1946
                  %v1948 = vld [vmem:[%s1896 + $0x64] sm:$0xf]
                  %1949 = vst [vmem:[%s1897 + $0xa4] sm:$0xf] %v1948
                  %v1950 = vld [vmem:[%s1896 + $0x68] sm:$0xf]
                  %1951 = vst [vmem:[%s1897 + $0xa8] sm:$0xf] %v1950
                  %v1952 = vld [vmem:[%s1896 + $0x6c] sm:$0xf]
                  %1953 = vst [vmem:[%s1897 + $0xac] sm:$0xf] %v1952
                  %v1954 = vld [vmem:[%s1896 + $0x70] sm:$0xf]
                  %1955 = vst [vmem:[%s1897 + $0xb0] sm:$0xf] %v1954
                  %v1956 = vld [vmem:[%s1896 + $0x74] sm:$0xf]
                  %1957 = vst [vmem:[%s1897 + $0xb4] sm:$0xf] %v1956
                  %v1958 = vld [vmem:[%s1896 + $0x78] sm:$0xf]
                  %1959 = vst [vmem:[%s1897 + $0xb8] sm:$0xf] %v1958
                  %v1960 = vld [vmem:[%s1896 + $0x7c] sm:$0xf]
                  %1961 = vst [vmem:[%s1897 + $0xbc] sm:$0xf] %v1960
                  %v1962 = vld [vmem:[%s1896 + $0x80] sm:$0xf]
                  %1963 = vst [vmem:[%s1897 + $0x100] sm:$0xf] %v1962
                  %v1964 = vld [vmem:[%s1896 + $0x84] sm:$0xf]
                  %1965 = vst [vmem:[%s1897 + $0x104] sm:$0xf] %v1964
                  %v1966 = vld [vmem:[%s1896 + $0x88] sm:$0xf]
                  %1967 = vst [vmem:[%s1897 + $0x108] sm:$0xf] %v1966
                  %v1968 = vld [vmem:[%s1896 + $0x8c] sm:$0xf]
                  %1969 = vst [vmem:[%s1897 + $0x10c] sm:$0xf] %v1968
                  %v1970 = vld [vmem:[%s1896 + $0x90] sm:$0xf]
                  %1971 = vst [vmem:[%s1897 + $0x110] sm:$0xf] %v1970
                  %v1972 = vld [vmem:[%s1896 + $0x94] sm:$0xf]
                  %1973 = vst [vmem:[%s1897 + $0x114] sm:$0xf] %v1972
                  %v1974 = vld [vmem:[%s1896 + $0x98] sm:$0xf]
                  %1975 = vst [vmem:[%s1897 + $0x118] sm:$0xf] %v1974
                  %v1976 = vld [vmem:[%s1896 + $0x9c] sm:$0xf]
                  %1977 = vst [vmem:[%s1897 + $0x11c] sm:$0xf] %v1976
                  %v1978 = vld [vmem:[%s1896 + $0xa0] sm:$0xf]
                  %1979 = vst [vmem:[%s1897 + $0x120] sm:$0xf] %v1978
                  %v1980 = vld [vmem:[%s1896 + $0xa4] sm:$0xf]
                  %1981 = vst [vmem:[%s1897 + $0x124] sm:$0xf] %v1980
                  %v1982 = vld [vmem:[%s1896 + $0xa8] sm:$0xf]
                  %1983 = vst [vmem:[%s1897 + $0x128] sm:$0xf] %v1982
                  %v1984 = vld [vmem:[%s1896 + $0xac] sm:$0xf]
                  %1985 = vst [vmem:[%s1897 + $0x12c] sm:$0xf] %v1984
                  %v1986 = vld [vmem:[%s1896 + $0xb0] sm:$0xf]
                  %1987 = vst [vmem:[%s1897 + $0x130] sm:$0xf] %v1986
                  %v1988 = vld [vmem:[%s1896 + $0xb4] sm:$0xf]
                  %1989 = vst [vmem:[%s1897 + $0x134] sm:$0xf] %v1988
                  %v1990 = vld [vmem:[%s1896 + $0xb8] sm:$0xf]
                  %1991 = vst [vmem:[%s1897 + $0x138] sm:$0xf] %v1990
                  %v1992 = vld [vmem:[%s1896 + $0xbc] sm:$0xf]
                  %1993 = vst [vmem:[%s1897 + $0x13c] sm:$0xf] %v1992
                  %v1994 = vld [vmem:[%s1896 + $0xc0] sm:$0xf]
                  %1995 = vst [vmem:[%s1897 + $0x180] sm:$0xf] %v1994
                  %v1996 = vld [vmem:[%s1896 + $0xc4] sm:$0xf]
                  %1997 = vst [vmem:[%s1897 + $0x184] sm:$0xf] %v1996
                  %v1998 = vld [vmem:[%s1896 + $0xc8] sm:$0xf]
                  %1999 = vst [vmem:[%s1897 + $0x188] sm:$0xf] %v1998
                  %v2000 = vld [vmem:[%s1896 + $0xcc] sm:$0xf]
                  %2001 = vst [vmem:[%s1897 + $0x18c] sm:$0xf] %v2000
                  %v2002 = vld [vmem:[%s1896 + $0xd0] sm:$0xf]
                  %2003 = vst [vmem:[%s1897 + $0x190] sm:$0xf] %v2002
                  %v2004 = vld [vmem:[%s1896 + $0xd4] sm:$0xf]
                  %2005 = vst [vmem:[%s1897 + $0x194] sm:$0xf] %v2004
                  %v2006 = vld [vmem:[%s1896 + $0xd8] sm:$0xf]
                  %2007 = vst [vmem:[%s1897 + $0x198] sm:$0xf] %v2006
                  %v2008 = vld [vmem:[%s1896 + $0xdc] sm:$0xf]
                  %2009 = vst [vmem:[%s1897 + $0x19c] sm:$0xf] %v2008
                  %v2010 = vld [vmem:[%s1896 + $0xe0] sm:$0xf]
                  %2011 = vst [vmem:[%s1897 + $0x1a0] sm:$0xf] %v2010
                  %v2012 = vld [vmem:[%s1896 + $0xe4] sm:$0xf]
                  %2013 = vst [vmem:[%s1897 + $0x1a4] sm:$0xf] %v2012
                  %v2014 = vld [vmem:[%s1896 + $0xe8] sm:$0xf]
                  %2015 = vst [vmem:[%s1897 + $0x1a8] sm:$0xf] %v2014
                  %v2016 = vld [vmem:[%s1896 + $0xec] sm:$0xf]
                  %2017 = vst [vmem:[%s1897 + $0x1ac] sm:$0xf] %v2016
                  %v2018 = vld [vmem:[%s1896 + $0xf0] sm:$0xf]
                  %2019 = vst [vmem:[%s1897 + $0x1b0] sm:$0xf] %v2018
                  %v2020 = vld [vmem:[%s1896 + $0xf4] sm:$0xf]
                  %2021 = vst [vmem:[%s1897 + $0x1b4] sm:$0xf] %v2020
                  %v2022 = vld [vmem:[%s1896 + $0xf8] sm:$0xf]
                  %2023 = vst [vmem:[%s1897 + $0x1b8] sm:$0xf] %v2022
                  %v2024 = vld [vmem:[%s1896 + $0xfc] sm:$0xf]
                  %2025 = vst [vmem:[%s1897 + $0x1bc] sm:$0xf] %v2024
                $region112: #{tpu_custom_call.1} parent=99 // loop_footer
                  %s1895 = sadd.s32 1, %s1891
                $region113: #{tpu_custom_call.1} parent=99 // loop_footer_branch
                  %1890 = sbr.rel target = $region109
                $region114: #{tpu_custom_call.1} parent=99 // loop_exit
                  _
              $region100: #{tpu_custom_call.1} parent=84 // pred_fallthru
                _
            $region85: #{tpu_custom_call.1} parent=80 // pred_fallthru
              _
            // Predicated region
            $region86: #{tpu_custom_call.1} parent=80 // pred_check
              _
            $region87: #{tpu_custom_call.1} parent=80 // pred_check_branch
              %1741 = sbr.rel (0) target = $region89
            $region88: #{tpu_custom_call.1} parent=80 // pred_region
              loop: start=0, step=1, limit=1
              $region90: #{tpu_custom_call.1} parent=88 // loop_pre_header
                _
              $region91: #{tpu_custom_call.1} parent=88 // loop_header
                %s1744 = sphi 0, %s1748
                %p1745 = scmp.ge.s32.totalorder %s1744, 1
                %s1749 = sphi %s1418, %s1418
                %s1750 = sphi %s1735, %s1735
              $region92: #{tpu_custom_call.1} parent=88 // loop_header_branch
                %1747 = sbr.rel (%p1745) target = $region96
              $region93: #{tpu_custom_call.1} parent=88 // loop_body
                %v1751 = vld [vmem:[%s1749] sm:$0xf]
                %1752 = vst [vmem:[%s1750] sm:$0xf] %v1751
                %v1753 = vld [vmem:[%s1749 + $0x4] sm:$0xf]
                %1754 = vst [vmem:[%s1750 + $0x4] sm:$0xf] %v1753
                %v1755 = vld [vmem:[%s1749 + $0x8] sm:$0xf]
                %1756 = vst [vmem:[%s1750 + $0x8] sm:$0xf] %v1755
                %v1757 = vld [vmem:[%s1749 + $0xc] sm:$0xf]
                %1758 = vst [vmem:[%s1750 + $0xc] sm:$0xf] %v1757
                %v1759 = vld [vmem:[%s1749 + $0x10] sm:$0xf]
                %1760 = vst [vmem:[%s1750 + $0x10] sm:$0xf] %v1759
                %v1761 = vld [vmem:[%s1749 + $0x14] sm:$0xf]
                %1762 = vst [vmem:[%s1750 + $0x14] sm:$0xf] %v1761
                %v1763 = vld [vmem:[%s1749 + $0x18] sm:$0xf]
                %1764 = vst [vmem:[%s1750 + $0x18] sm:$0xf] %v1763
                %v1765 = vld [vmem:[%s1749 + $0x1c] sm:$0xf]
                %1766 = vst [vmem:[%s1750 + $0x1c] sm:$0xf] %v1765
                %v1767 = vld [vmem:[%s1749 + $0x20] sm:$0xf]
                %1768 = vst [vmem:[%s1750 + $0x20] sm:$0xf] %v1767
                %v1769 = vld [vmem:[%s1749 + $0x24] sm:$0xf]
                %1770 = vst [vmem:[%s1750 + $0x24] sm:$0xf] %v1769
                %v1771 = vld [vmem:[%s1749 + $0x28] sm:$0xf]
                %1772 = vst [vmem:[%s1750 + $0x28] sm:$0xf] %v1771
                %v1773 = vld [vmem:[%s1749 + $0x2c] sm:$0xf]
                %1774 = vst [vmem:[%s1750 + $0x2c] sm:$0xf] %v1773
                %v1775 = vld [vmem:[%s1749 + $0x30] sm:$0xf]
                %1776 = vst [vmem:[%s1750 + $0x30] sm:$0xf] %v1775
                %v1777 = vld [vmem:[%s1749 + $0x34] sm:$0xf]
                %1778 = vst [vmem:[%s1750 + $0x34] sm:$0xf] %v1777
                %v1779 = vld [vmem:[%s1749 + $0x38] sm:$0xf]
                %1780 = vst [vmem:[%s1750 + $0x38] sm:$0xf] %v1779
                %v1781 = vld [vmem:[%s1749 + $0x3c] sm:$0xf]
                %1782 = vst [vmem:[%s1750 + $0x3c] sm:$0xf] %v1781
                %v1783 = vld [vmem:[%s1749 + $0x40] sm:$0xf]
                %1784 = vst [vmem:[%s1750 + $0x80] sm:$0xf] %v1783
                %v1785 = vld [vmem:[%s1749 + $0x44] sm:$0xf]
                %1786 = vst [vmem:[%s1750 + $0x84] sm:$0xf] %v1785
                %v1787 = vld [vmem:[%s1749 + $0x48] sm:$0xf]
                %1788 = vst [vmem:[%s1750 + $0x88] sm:$0xf] %v1787
                %v1789 = vld [vmem:[%s1749 + $0x4c] sm:$0xf]
                %1790 = vst [vmem:[%s1750 + $0x8c] sm:$0xf] %v1789
                %v1791 = vld [vmem:[%s1749 + $0x50] sm:$0xf]
                %1792 = vst [vmem:[%s1750 + $0x90] sm:$0xf] %v1791
                %v1793 = vld [vmem:[%s1749 + $0x54] sm:$0xf]
                %1794 = vst [vmem:[%s1750 + $0x94] sm:$0xf] %v1793
                %v1795 = vld [vmem:[%s1749 + $0x58] sm:$0xf]
                %1796 = vst [vmem:[%s1750 + $0x98] sm:$0xf] %v1795
                %v1797 = vld [vmem:[%s1749 + $0x5c] sm:$0xf]
                %1798 = vst [vmem:[%s1750 + $0x9c] sm:$0xf] %v1797
                %v1799 = vld [vmem:[%s1749 + $0x60] sm:$0xf]
                %1800 = vst [vmem:[%s1750 + $0xa0] sm:$0xf] %v1799
                %v1801 = vld [vmem:[%s1749 + $0x64] sm:$0xf]
                %1802 = vst [vmem:[%s1750 + $0xa4] sm:$0xf] %v1801
                %v1803 = vld [vmem:[%s1749 + $0x68] sm:$0xf]
                %1804 = vst [vmem:[%s1750 + $0xa8] sm:$0xf] %v1803
                %v1805 = vld [vmem:[%s1749 + $0x6c] sm:$0xf]
                %1806 = vst [vmem:[%s1750 + $0xac] sm:$0xf] %v1805
                %v1807 = vld [vmem:[%s1749 + $0x70] sm:$0xf]
                %1808 = vst [vmem:[%s1750 + $0xb0] sm:$0xf] %v1807
                %v1809 = vld [vmem:[%s1749 + $0x74] sm:$0xf]
                %1810 = vst [vmem:[%s1750 + $0xb4] sm:$0xf] %v1809
                %v1811 = vld [vmem:[%s1749 + $0x78] sm:$0xf]
                %1812 = vst [vmem:[%s1750 + $0xb8] sm:$0xf] %v1811
                %v1813 = vld [vmem:[%s1749 + $0x7c] sm:$0xf]
                %1814 = vst [vmem:[%s1750 + $0xbc] sm:$0xf] %v1813
                %v1815 = vld [vmem:[%s1749 + $0x80] sm:$0xf]
                %1816 = vst [vmem:[%s1750 + $0x100] sm:$0xf] %v1815
                %v1817 = vld [vmem:[%s1749 + $0x84] sm:$0xf]
                %1818 = vst [vmem:[%s1750 + $0x104] sm:$0xf] %v1817
                %v1819 = vld [vmem:[%s1749 + $0x88] sm:$0xf]
                %1820 = vst [vmem:[%s1750 + $0x108] sm:$0xf] %v1819
                %v1821 = vld [vmem:[%s1749 + $0x8c] sm:$0xf]
                %1822 = vst [vmem:[%s1750 + $0x10c] sm:$0xf] %v1821
                %v1823 = vld [vmem:[%s1749 + $0x90] sm:$0xf]
                %1824 = vst [vmem:[%s1750 + $0x110] sm:$0xf] %v1823
                %v1825 = vld [vmem:[%s1749 + $0x94] sm:$0xf]
                %1826 = vst [vmem:[%s1750 + $0x114] sm:$0xf] %v1825
                %v1827 = vld [vmem:[%s1749 + $0x98] sm:$0xf]
                %1828 = vst [vmem:[%s1750 + $0x118] sm:$0xf] %v1827
                %v1829 = vld [vmem:[%s1749 + $0x9c] sm:$0xf]
                %1830 = vst [vmem:[%s1750 + $0x11c] sm:$0xf] %v1829
                %v1831 = vld [vmem:[%s1749 + $0xa0] sm:$0xf]
                %1832 = vst [vmem:[%s1750 + $0x120] sm:$0xf] %v1831
                %v1833 = vld [vmem:[%s1749 + $0xa4] sm:$0xf]
                %1834 = vst [vmem:[%s1750 + $0x124] sm:$0xf] %v1833
                %v1835 = vld [vmem:[%s1749 + $0xa8] sm:$0xf]
                %1836 = vst [vmem:[%s1750 + $0x128] sm:$0xf] %v1835
                %v1837 = vld [vmem:[%s1749 + $0xac] sm:$0xf]
                %1838 = vst [vmem:[%s1750 + $0x12c] sm:$0xf] %v1837
                %v1839 = vld [vmem:[%s1749 + $0xb0] sm:$0xf]
                %1840 = vst [vmem:[%s1750 + $0x130] sm:$0xf] %v1839
                %v1841 = vld [vmem:[%s1749 + $0xb4] sm:$0xf]
                %1842 = vst [vmem:[%s1750 + $0x134] sm:$0xf] %v1841
                %v1843 = vld [vmem:[%s1749 + $0xb8] sm:$0xf]
                %1844 = vst [vmem:[%s1750 + $0x138] sm:$0xf] %v1843
                %v1845 = vld [vmem:[%s1749 + $0xbc] sm:$0xf]
                %1846 = vst [vmem:[%s1750 + $0x13c] sm:$0xf] %v1845
                %v1847 = vld [vmem:[%s1749 + $0xc0] sm:$0xf]
                %1848 = vst [vmem:[%s1750 + $0x180] sm:$0xf] %v1847
                %v1849 = vld [vmem:[%s1749 + $0xc4] sm:$0xf]
                %1850 = vst [vmem:[%s1750 + $0x184] sm:$0xf] %v1849
                %v1851 = vld [vmem:[%s1749 + $0xc8] sm:$0xf]
                %1852 = vst [vmem:[%s1750 + $0x188] sm:$0xf] %v1851
                %v1853 = vld [vmem:[%s1749 + $0xcc] sm:$0xf]
                %1854 = vst [vmem:[%s1750 + $0x18c] sm:$0xf] %v1853
                %v1855 = vld [vmem:[%s1749 + $0xd0] sm:$0xf]
                %1856 = vst [vmem:[%s1750 + $0x190] sm:$0xf] %v1855
                %v1857 = vld [vmem:[%s1749 + $0xd4] sm:$0xf]
                %1858 = vst [vmem:[%s1750 + $0x194] sm:$0xf] %v1857
                %v1859 = vld [vmem:[%s1749 + $0xd8] sm:$0xf]
                %1860 = vst [vmem:[%s1750 + $0x198] sm:$0xf] %v1859
                %v1861 = vld [vmem:[%s1749 + $0xdc] sm:$0xf]
                %1862 = vst [vmem:[%s1750 + $0x19c] sm:$0xf] %v1861
                %v1863 = vld [vmem:[%s1749 + $0xe0] sm:$0xf]
                %1864 = vst [vmem:[%s1750 + $0x1a0] sm:$0xf] %v1863
                %v1865 = vld [vmem:[%s1749 + $0xe4] sm:$0xf]
                %1866 = vst [vmem:[%s1750 + $0x1a4] sm:$0xf] %v1865
                %v1867 = vld [vmem:[%s1749 + $0xe8] sm:$0xf]
                %1868 = vst [vmem:[%s1750 + $0x1a8] sm:$0xf] %v1867
                %v1869 = vld [vmem:[%s1749 + $0xec] sm:$0xf]
                %1870 = vst [vmem:[%s1750 + $0x1ac] sm:$0xf] %v1869
                %v1871 = vld [vmem:[%s1749 + $0xf0] sm:$0xf]
                %1872 = vst [vmem:[%s1750 + $0x1b0] sm:$0xf] %v1871
                %v1873 = vld [vmem:[%s1749 + $0xf4] sm:$0xf]
                %1874 = vst [vmem:[%s1750 + $0x1b4] sm:$0xf] %v1873
                %v1875 = vld [vmem:[%s1749 + $0xf8] sm:$0xf]
                %1876 = vst [vmem:[%s1750 + $0x1b8] sm:$0xf] %v1875
                %v1877 = vld [vmem:[%s1749 + $0xfc] sm:$0xf]
                %1878 = vst [vmem:[%s1750 + $0x1bc] sm:$0xf] %v1877
              $region94: #{tpu_custom_call.1} parent=88 // loop_footer
                %s1748 = sadd.s32 1, %s1744
              $region95: #{tpu_custom_call.1} parent=88 // loop_footer_branch
                %1743 = sbr.rel target = $region91
              $region96: #{tpu_custom_call.1} parent=88 // loop_exit
                _
            $region89: #{tpu_custom_call.1} parent=80 // pred_fallthru
              _
          $region81: #{tpu_custom_call.1} parent=76 // pred_fallthru
            _
          %2026 = vnop
        $region77: #{tpu_custom_call.1} parent=31 // pred_fallthru
          _
        // Predicated region
        $region115: #{tpu_custom_call.1} parent=31 // pred_check
          %p2027 = pneg %p193
        $region116: #{tpu_custom_call.1} parent=31 // pred_check_branch
          %2029 = sbr.rel (%p2027) target = $region118
        $region117: #{tpu_custom_call.1} parent=31 // pred_region
          %s2030 = smul.u32 4, %s24
          %s2031 = smul.u32 16, %s23
          %s2032 = smul.addr %s2030, 32
          %s2033 = sadd.s32 %s2031, %s2032
          %s2034 = smul.addr %s22, 128
          %s2035 = sadd.s32 %s2033, %s2034
          %s2036 = smul.addr %s2035, 4
          %s2037 = scalar_lea.vmem %s5, %s2036
          // Predicated region
          $region119: #{tpu_custom_call.1} parent=117 // pred_check
            _
          $region120: #{tpu_custom_call.1} parent=117 // pred_check_branch
            %2039 = sbr.rel (0) target = $region122
          $region121: #{tpu_custom_call.1} parent=117 // pred_region
            // Predicated region
            $region123: #{tpu_custom_call.1} parent=121 // pred_check
              _
            $region124: #{tpu_custom_call.1} parent=121 // pred_check_branch
              %2041 = sbr.rel target = $region126
            $region125: #{tpu_custom_call.1} parent=121 // pred_region
              // Predicated region
              $region138: #{tpu_custom_call.1} parent=125 // pred_check
                _
              $region139: #{tpu_custom_call.1} parent=125 // pred_check_branch
                %2182 = sbr.rel (0) target = $region141
              $region140: #{tpu_custom_call.1} parent=125 // pred_region
                loop: start=0, step=1, limit=1
                $region142: #{tpu_custom_call.1} parent=140 // loop_pre_header
                  _
                $region143: #{tpu_custom_call.1} parent=140 // loop_header
                  %s2184 = sphi 0, %s2188
                  %p2185 = scmp.ge.s32.totalorder %s2184, 1
                  %s2189 = sphi %s1422, %s1422
                  %s2190 = sphi %s2037, %s2037
                $region144: #{tpu_custom_call.1} parent=140 // loop_header_branch
                  %2187 = sbr.rel (%p2185) target = $region148
                $region145: #{tpu_custom_call.1} parent=140 // loop_body
                  _
                $region146: #{tpu_custom_call.1} parent=140 // loop_footer
                  %s2188 = sadd.s32 1, %s2184
                $region147: #{tpu_custom_call.1} parent=140 // loop_footer_branch
                  %2183 = sbr.rel target = $region143
                $region148: #{tpu_custom_call.1} parent=140 // loop_exit
                  _
                loop: start=0, step=1, limit=1
                $region149: #{tpu_custom_call.1} parent=140 // loop_pre_header
                  _
                $region150: #{tpu_custom_call.1} parent=140 // loop_header
                  %s2193 = sphi 0, %s2197
                  %p2194 = scmp.ge.s32.totalorder %s2193, 1
                  %s2198 = sphi %s1422, %s1422
                  %s2199 = sphi %s2037, %s2037
                $region151: #{tpu_custom_call.1} parent=140 // loop_header_branch
                  %2196 = sbr.rel (%p2194) target = $region155
                $region152: #{tpu_custom_call.1} parent=140 // loop_body
                  %v2200 = vld [vmem:[%s2198] sm:$0xf]
                  %2201 = vst [vmem:[%s2199] sm:$0xf] %v2200
                  %v2202 = vld [vmem:[%s2198 + $0x4] sm:$0xf]
                  %2203 = vst [vmem:[%s2199 + $0x4] sm:$0xf] %v2202
                  %v2204 = vld [vmem:[%s2198 + $0x8] sm:$0xf]
                  %2205 = vst [vmem:[%s2199 + $0x8] sm:$0xf] %v2204
                  %v2206 = vld [vmem:[%s2198 + $0xc] sm:$0xf]
                  %2207 = vst [vmem:[%s2199 + $0xc] sm:$0xf] %v2206
                  %v2208 = vld [vmem:[%s2198 + $0x10] sm:$0xf]
                  %2209 = vst [vmem:[%s2199 + $0x10] sm:$0xf] %v2208
                  %v2210 = vld [vmem:[%s2198 + $0x14] sm:$0xf]
                  %2211 = vst [vmem:[%s2199 + $0x14] sm:$0xf] %v2210
                  %v2212 = vld [vmem:[%s2198 + $0x18] sm:$0xf]
                  %2213 = vst [vmem:[%s2199 + $0x18] sm:$0xf] %v2212
                  %v2214 = vld [vmem:[%s2198 + $0x1c] sm:$0xf]
                  %2215 = vst [vmem:[%s2199 + $0x1c] sm:$0xf] %v2214
                  %v2216 = vld [vmem:[%s2198 + $0x20] sm:$0xf]
                  %2217 = vst [vmem:[%s2199 + $0x20] sm:$0xf] %v2216
                  %v2218 = vld [vmem:[%s2198 + $0x24] sm:$0xf]
                  %2219 = vst [vmem:[%s2199 + $0x24] sm:$0xf] %v2218
                  %v2220 = vld [vmem:[%s2198 + $0x28] sm:$0xf]
                  %2221 = vst [vmem:[%s2199 + $0x28] sm:$0xf] %v2220
                  %v2222 = vld [vmem:[%s2198 + $0x2c] sm:$0xf]
                  %2223 = vst [vmem:[%s2199 + $0x2c] sm:$0xf] %v2222
                  %v2224 = vld [vmem:[%s2198 + $0x30] sm:$0xf]
                  %2225 = vst [vmem:[%s2199 + $0x30] sm:$0xf] %v2224
                  %v2226 = vld [vmem:[%s2198 + $0x34] sm:$0xf]
                  %2227 = vst [vmem:[%s2199 + $0x34] sm:$0xf] %v2226
                  %v2228 = vld [vmem:[%s2198 + $0x38] sm:$0xf]
                  %2229 = vst [vmem:[%s2199 + $0x38] sm:$0xf] %v2228
                  %v2230 = vld [vmem:[%s2198 + $0x3c] sm:$0xf]
                  %2231 = vst [vmem:[%s2199 + $0x3c] sm:$0xf] %v2230
                  %v2232 = vld [vmem:[%s2198 + $0x40] sm:$0xf]
                  %2233 = vst [vmem:[%s2199 + $0x80] sm:$0xf] %v2232
                  %v2234 = vld [vmem:[%s2198 + $0x44] sm:$0xf]
                  %2235 = vst [vmem:[%s2199 + $0x84] sm:$0xf] %v2234
                  %v2236 = vld [vmem:[%s2198 + $0x48] sm:$0xf]
                  %2237 = vst [vmem:[%s2199 + $0x88] sm:$0xf] %v2236
                  %v2238 = vld [vmem:[%s2198 + $0x4c] sm:$0xf]
                  %2239 = vst [vmem:[%s2199 + $0x8c] sm:$0xf] %v2238
                  %v2240 = vld [vmem:[%s2198 + $0x50] sm:$0xf]
                  %2241 = vst [vmem:[%s2199 + $0x90] sm:$0xf] %v2240
                  %v2242 = vld [vmem:[%s2198 + $0x54] sm:$0xf]
                  %2243 = vst [vmem:[%s2199 + $0x94] sm:$0xf] %v2242
                  %v2244 = vld [vmem:[%s2198 + $0x58] sm:$0xf]
                  %2245 = vst [vmem:[%s2199 + $0x98] sm:$0xf] %v2244
                  %v2246 = vld [vmem:[%s2198 + $0x5c] sm:$0xf]
                  %2247 = vst [vmem:[%s2199 + $0x9c] sm:$0xf] %v2246
                  %v2248 = vld [vmem:[%s2198 + $0x60] sm:$0xf]
                  %2249 = vst [vmem:[%s2199 + $0xa0] sm:$0xf] %v2248
                  %v2250 = vld [vmem:[%s2198 + $0x64] sm:$0xf]
                  %2251 = vst [vmem:[%s2199 + $0xa4] sm:$0xf] %v2250
                  %v2252 = vld [vmem:[%s2198 + $0x68] sm:$0xf]
                  %2253 = vst [vmem:[%s2199 + $0xa8] sm:$0xf] %v2252
                  %v2254 = vld [vmem:[%s2198 + $0x6c] sm:$0xf]
                  %2255 = vst [vmem:[%s2199 + $0xac] sm:$0xf] %v2254
                  %v2256 = vld [vmem:[%s2198 + $0x70] sm:$0xf]
                  %2257 = vst [vmem:[%s2199 + $0xb0] sm:$0xf] %v2256
                  %v2258 = vld [vmem:[%s2198 + $0x74] sm:$0xf]
                  %2259 = vst [vmem:[%s2199 + $0xb4] sm:$0xf] %v2258
                  %v2260 = vld [vmem:[%s2198 + $0x78] sm:$0xf]
                  %2261 = vst [vmem:[%s2199 + $0xb8] sm:$0xf] %v2260
                  %v2262 = vld [vmem:[%s2198 + $0x7c] sm:$0xf]
                  %2263 = vst [vmem:[%s2199 + $0xbc] sm:$0xf] %v2262
                  %v2264 = vld [vmem:[%s2198 + $0x80] sm:$0xf]
                  %2265 = vst [vmem:[%s2199 + $0x100] sm:$0xf] %v2264
                  %v2266 = vld [vmem:[%s2198 + $0x84] sm:$0xf]
                  %2267 = vst [vmem:[%s2199 + $0x104] sm:$0xf] %v2266
                  %v2268 = vld [vmem:[%s2198 + $0x88] sm:$0xf]
                  %2269 = vst [vmem:[%s2199 + $0x108] sm:$0xf] %v2268
                  %v2270 = vld [vmem:[%s2198 + $0x8c] sm:$0xf]
                  %2271 = vst [vmem:[%s2199 + $0x10c] sm:$0xf] %v2270
                  %v2272 = vld [vmem:[%s2198 + $0x90] sm:$0xf]
                  %2273 = vst [vmem:[%s2199 + $0x110] sm:$0xf] %v2272
                  %v2274 = vld [vmem:[%s2198 + $0x94] sm:$0xf]
                  %2275 = vst [vmem:[%s2199 + $0x114] sm:$0xf] %v2274
                  %v2276 = vld [vmem:[%s2198 + $0x98] sm:$0xf]
                  %2277 = vst [vmem:[%s2199 + $0x118] sm:$0xf] %v2276
                  %v2278 = vld [vmem:[%s2198 + $0x9c] sm:$0xf]
                  %2279 = vst [vmem:[%s2199 + $0x11c] sm:$0xf] %v2278
                  %v2280 = vld [vmem:[%s2198 + $0xa0] sm:$0xf]
                  %2281 = vst [vmem:[%s2199 + $0x120] sm:$0xf] %v2280
                  %v2282 = vld [vmem:[%s2198 + $0xa4] sm:$0xf]
                  %2283 = vst [vmem:[%s2199 + $0x124] sm:$0xf] %v2282
                  %v2284 = vld [vmem:[%s2198 + $0xa8] sm:$0xf]
                  %2285 = vst [vmem:[%s2199 + $0x128] sm:$0xf] %v2284
                  %v2286 = vld [vmem:[%s2198 + $0xac] sm:$0xf]
                  %2287 = vst [vmem:[%s2199 + $0x12c] sm:$0xf] %v2286
                  %v2288 = vld [vmem:[%s2198 + $0xb0] sm:$0xf]
                  %2289 = vst [vmem:[%s2199 + $0x130] sm:$0xf] %v2288
                  %v2290 = vld [vmem:[%s2198 + $0xb4] sm:$0xf]
                  %2291 = vst [vmem:[%s2199 + $0x134] sm:$0xf] %v2290
                  %v2292 = vld [vmem:[%s2198 + $0xb8] sm:$0xf]
                  %2293 = vst [vmem:[%s2199 + $0x138] sm:$0xf] %v2292
                  %v2294 = vld [vmem:[%s2198 + $0xbc] sm:$0xf]
                  %2295 = vst [vmem:[%s2199 + $0x13c] sm:$0xf] %v2294
                  %v2296 = vld [vmem:[%s2198 + $0xc0] sm:$0xf]
                  %2297 = vst [vmem:[%s2199 + $0x180] sm:$0xf] %v2296
                  %v2298 = vld [vmem:[%s2198 + $0xc4] sm:$0xf]
                  %2299 = vst [vmem:[%s2199 + $0x184] sm:$0xf] %v2298
                  %v2300 = vld [vmem:[%s2198 + $0xc8] sm:$0xf]
                  %2301 = vst [vmem:[%s2199 + $0x188] sm:$0xf] %v2300
                  %v2302 = vld [vmem:[%s2198 + $0xcc] sm:$0xf]
                  %2303 = vst [vmem:[%s2199 + $0x18c] sm:$0xf] %v2302
                  %v2304 = vld [vmem:[%s2198 + $0xd0] sm:$0xf]
                  %2305 = vst [vmem:[%s2199 + $0x190] sm:$0xf] %v2304
                  %v2306 = vld [vmem:[%s2198 + $0xd4] sm:$0xf]
                  %2307 = vst [vmem:[%s2199 + $0x194] sm:$0xf] %v2306
                  %v2308 = vld [vmem:[%s2198 + $0xd8] sm:$0xf]
                  %2309 = vst [vmem:[%s2199 + $0x198] sm:$0xf] %v2308
                  %v2310 = vld [vmem:[%s2198 + $0xdc] sm:$0xf]
                  %2311 = vst [vmem:[%s2199 + $0x19c] sm:$0xf] %v2310
                  %v2312 = vld [vmem:[%s2198 + $0xe0] sm:$0xf]
                  %2313 = vst [vmem:[%s2199 + $0x1a0] sm:$0xf] %v2312
                  %v2314 = vld [vmem:[%s2198 + $0xe4] sm:$0xf]
                  %2315 = vst [vmem:[%s2199 + $0x1a4] sm:$0xf] %v2314
                  %v2316 = vld [vmem:[%s2198 + $0xe8] sm:$0xf]
                  %2317 = vst [vmem:[%s2199 + $0x1a8] sm:$0xf] %v2316
                  %v2318 = vld [vmem:[%s2198 + $0xec] sm:$0xf]
                  %2319 = vst [vmem:[%s2199 + $0x1ac] sm:$0xf] %v2318
                  %v2320 = vld [vmem:[%s2198 + $0xf0] sm:$0xf]
                  %2321 = vst [vmem:[%s2199 + $0x1b0] sm:$0xf] %v2320
                  %v2322 = vld [vmem:[%s2198 + $0xf4] sm:$0xf]
                  %2323 = vst [vmem:[%s2199 + $0x1b4] sm:$0xf] %v2322
                  %v2324 = vld [vmem:[%s2198 + $0xf8] sm:$0xf]
                  %2325 = vst [vmem:[%s2199 + $0x1b8] sm:$0xf] %v2324
                  %v2326 = vld [vmem:[%s2198 + $0xfc] sm:$0xf]
                  %2327 = vst [vmem:[%s2199 + $0x1bc] sm:$0xf] %v2326
                $region153: #{tpu_custom_call.1} parent=140 // loop_footer
                  %s2197 = sadd.s32 1, %s2193
                $region154: #{tpu_custom_call.1} parent=140 // loop_footer_branch
                  %2192 = sbr.rel target = $region150
                $region155: #{tpu_custom_call.1} parent=140 // loop_exit
                  _
              $region141: #{tpu_custom_call.1} parent=125 // pred_fallthru
                _
            $region126: #{tpu_custom_call.1} parent=121 // pred_fallthru
              _
            // Predicated region
            $region127: #{tpu_custom_call.1} parent=121 // pred_check
              _
            $region128: #{tpu_custom_call.1} parent=121 // pred_check_branch
              %2043 = sbr.rel (0) target = $region130
            $region129: #{tpu_custom_call.1} parent=121 // pred_region
              loop: start=0, step=1, limit=1
              $region131: #{tpu_custom_call.1} parent=129 // loop_pre_header
                _
              $region132: #{tpu_custom_call.1} parent=129 // loop_header
                %s2046 = sphi 0, %s2050
                %p2047 = scmp.ge.s32.totalorder %s2046, 1
                %s2051 = sphi %s1422, %s1422
                %s2052 = sphi %s2037, %s2037
              $region133: #{tpu_custom_call.1} parent=129 // loop_header_branch
                %2049 = sbr.rel (%p2047) target = $region137
              $region134: #{tpu_custom_call.1} parent=129 // loop_body
                %v2053 = vld [vmem:[%s2051] sm:$0xf]
                %2054 = vst [vmem:[%s2052] sm:$0xf] %v2053
                %v2055 = vld [vmem:[%s2051 + $0x4] sm:$0xf]
                %2056 = vst [vmem:[%s2052 + $0x4] sm:$0xf] %v2055
                %v2057 = vld [vmem:[%s2051 + $0x8] sm:$0xf]
                %2058 = vst [vmem:[%s2052 + $0x8] sm:$0xf] %v2057
                %v2059 = vld [vmem:[%s2051 + $0xc] sm:$0xf]
                %2060 = vst [vmem:[%s2052 + $0xc] sm:$0xf] %v2059
                %v2061 = vld [vmem:[%s2051 + $0x10] sm:$0xf]
                %2062 = vst [vmem:[%s2052 + $0x10] sm:$0xf] %v2061
                %v2063 = vld [vmem:[%s2051 + $0x14] sm:$0xf]
                %2064 = vst [vmem:[%s2052 + $0x14] sm:$0xf] %v2063
                %v2065 = vld [vmem:[%s2051 + $0x18] sm:$0xf]
                %2066 = vst [vmem:[%s2052 + $0x18] sm:$0xf] %v2065
                %v2067 = vld [vmem:[%s2051 + $0x1c] sm:$0xf]
                %2068 = vst [vmem:[%s2052 + $0x1c] sm:$0xf] %v2067
                %v2069 = vld [vmem:[%s2051 + $0x20] sm:$0xf]
                %2070 = vst [vmem:[%s2052 + $0x20] sm:$0xf] %v2069
                %v2071 = vld [vmem:[%s2051 + $0x24] sm:$0xf]
                %2072 = vst [vmem:[%s2052 + $0x24] sm:$0xf] %v2071
                %v2073 = vld [vmem:[%s2051 + $0x28] sm:$0xf]
                %2074 = vst [vmem:[%s2052 + $0x28] sm:$0xf] %v2073
                %v2075 = vld [vmem:[%s2051 + $0x2c] sm:$0xf]
                %2076 = vst [vmem:[%s2052 + $0x2c] sm:$0xf] %v2075
                %v2077 = vld [vmem:[%s2051 + $0x30] sm:$0xf]
                %2078 = vst [vmem:[%s2052 + $0x30] sm:$0xf] %v2077
                %v2079 = vld [vmem:[%s2051 + $0x34] sm:$0xf]
                %2080 = vst [vmem:[%s2052 + $0x34] sm:$0xf] %v2079
                %v2081 = vld [vmem:[%s2051 + $0x38] sm:$0xf]
                %2082 = vst [vmem:[%s2052 + $0x38] sm:$0xf] %v2081
                %v2083 = vld [vmem:[%s2051 + $0x3c] sm:$0xf]
                %2084 = vst [vmem:[%s2052 + $0x3c] sm:$0xf] %v2083
                %v2085 = vld [vmem:[%s2051 + $0x40] sm:$0xf]
                %2086 = vst [vmem:[%s2052 + $0x80] sm:$0xf] %v2085
                %v2087 = vld [vmem:[%s2051 + $0x44] sm:$0xf]
                %2088 = vst [vmem:[%s2052 + $0x84] sm:$0xf] %v2087
                %v2089 = vld [vmem:[%s2051 + $0x48] sm:$0xf]
                %2090 = vst [vmem:[%s2052 + $0x88] sm:$0xf] %v2089
                %v2091 = vld [vmem:[%s2051 + $0x4c] sm:$0xf]
                %2092 = vst [vmem:[%s2052 + $0x8c] sm:$0xf] %v2091
                %v2093 = vld [vmem:[%s2051 + $0x50] sm:$0xf]
                %2094 = vst [vmem:[%s2052 + $0x90] sm:$0xf] %v2093
                %v2095 = vld [vmem:[%s2051 + $0x54] sm:$0xf]
                %2096 = vst [vmem:[%s2052 + $0x94] sm:$0xf] %v2095
                %v2097 = vld [vmem:[%s2051 + $0x58] sm:$0xf]
                %2098 = vst [vmem:[%s2052 + $0x98] sm:$0xf] %v2097
                %v2099 = vld [vmem:[%s2051 + $0x5c] sm:$0xf]
                %2100 = vst [vmem:[%s2052 + $0x9c] sm:$0xf] %v2099
                %v2101 = vld [vmem:[%s2051 + $0x60] sm:$0xf]
                %2102 = vst [vmem:[%s2052 + $0xa0] sm:$0xf] %v2101
                %v2103 = vld [vmem:[%s2051 + $0x64] sm:$0xf]
                %2104 = vst [vmem:[%s2052 + $0xa4] sm:$0xf] %v2103
                %v2105 = vld [vmem:[%s2051 + $0x68] sm:$0xf]
                %2106 = vst [vmem:[%s2052 + $0xa8] sm:$0xf] %v2105
                %v2107 = vld [vmem:[%s2051 + $0x6c] sm:$0xf]
                %2108 = vst [vmem:[%s2052 + $0xac] sm:$0xf] %v2107
                %v2109 = vld [vmem:[%s2051 + $0x70] sm:$0xf]
                %2110 = vst [vmem:[%s2052 + $0xb0] sm:$0xf] %v2109
                %v2111 = vld [vmem:[%s2051 + $0x74] sm:$0xf]
                %2112 = vst [vmem:[%s2052 + $0xb4] sm:$0xf] %v2111
                %v2113 = vld [vmem:[%s2051 + $0x78] sm:$0xf]
                %2114 = vst [vmem:[%s2052 + $0xb8] sm:$0xf] %v2113
                %v2115 = vld [vmem:[%s2051 + $0x7c] sm:$0xf]
                %2116 = vst [vmem:[%s2052 + $0xbc] sm:$0xf] %v2115
                %v2117 = vld [vmem:[%s2051 + $0x80] sm:$0xf]
                %2118 = vst [vmem:[%s2052 + $0x100] sm:$0xf] %v2117
                %v2119 = vld [vmem:[%s2051 + $0x84] sm:$0xf]
                %2120 = vst [vmem:[%s2052 + $0x104] sm:$0xf] %v2119
                %v2121 = vld [vmem:[%s2051 + $0x88] sm:$0xf]
                %2122 = vst [vmem:[%s2052 + $0x108] sm:$0xf] %v2121
                %v2123 = vld [vmem:[%s2051 + $0x8c] sm:$0xf]
                %2124 = vst [vmem:[%s2052 + $0x10c] sm:$0xf] %v2123
                %v2125 = vld [vmem:[%s2051 + $0x90] sm:$0xf]
                %2126 = vst [vmem:[%s2052 + $0x110] sm:$0xf] %v2125
                %v2127 = vld [vmem:[%s2051 + $0x94] sm:$0xf]
                %2128 = vst [vmem:[%s2052 + $0x114] sm:$0xf] %v2127
                %v2129 = vld [vmem:[%s2051 + $0x98] sm:$0xf]
                %2130 = vst [vmem:[%s2052 + $0x118] sm:$0xf] %v2129
                %v2131 = vld [vmem:[%s2051 + $0x9c] sm:$0xf]
                %2132 = vst [vmem:[%s2052 + $0x11c] sm:$0xf] %v2131
                %v2133 = vld [vmem:[%s2051 + $0xa0] sm:$0xf]
                %2134 = vst [vmem:[%s2052 + $0x120] sm:$0xf] %v2133
                %v2135 = vld [vmem:[%s2051 + $0xa4] sm:$0xf]
                %2136 = vst [vmem:[%s2052 + $0x124] sm:$0xf] %v2135
                %v2137 = vld [vmem:[%s2051 + $0xa8] sm:$0xf]
                %2138 = vst [vmem:[%s2052 + $0x128] sm:$0xf] %v2137
                %v2139 = vld [vmem:[%s2051 + $0xac] sm:$0xf]
                %2140 = vst [vmem:[%s2052 + $0x12c] sm:$0xf] %v2139
                %v2141 = vld [vmem:[%s2051 + $0xb0] sm:$0xf]
                %2142 = vst [vmem:[%s2052 + $0x130] sm:$0xf] %v2141
                %v2143 = vld [vmem:[%s2051 + $0xb4] sm:$0xf]
                %2144 = vst [vmem:[%s2052 + $0x134] sm:$0xf] %v2143
                %v2145 = vld [vmem:[%s2051 + $0xb8] sm:$0xf]
                %2146 = vst [vmem:[%s2052 + $0x138] sm:$0xf] %v2145
                %v2147 = vld [vmem:[%s2051 + $0xbc] sm:$0xf]
                %2148 = vst [vmem:[%s2052 + $0x13c] sm:$0xf] %v2147
                %v2149 = vld [vmem:[%s2051 + $0xc0] sm:$0xf]
                %2150 = vst [vmem:[%s2052 + $0x180] sm:$0xf] %v2149
                %v2151 = vld [vmem:[%s2051 + $0xc4] sm:$0xf]
                %2152 = vst [vmem:[%s2052 + $0x184] sm:$0xf] %v2151
                %v2153 = vld [vmem:[%s2051 + $0xc8] sm:$0xf]
                %2154 = vst [vmem:[%s2052 + $0x188] sm:$0xf] %v2153
                %v2155 = vld [vmem:[%s2051 + $0xcc] sm:$0xf]
                %2156 = vst [vmem:[%s2052 + $0x18c] sm:$0xf] %v2155
                %v2157 = vld [vmem:[%s2051 + $0xd0] sm:$0xf]
                %2158 = vst [vmem:[%s2052 + $0x190] sm:$0xf] %v2157
                %v2159 = vld [vmem:[%s2051 + $0xd4] sm:$0xf]
                %2160 = vst [vmem:[%s2052 + $0x194] sm:$0xf] %v2159
                %v2161 = vld [vmem:[%s2051 + $0xd8] sm:$0xf]
                %2162 = vst [vmem:[%s2052 + $0x198] sm:$0xf] %v2161
                %v2163 = vld [vmem:[%s2051 + $0xdc] sm:$0xf]
                %2164 = vst [vmem:[%s2052 + $0x19c] sm:$0xf] %v2163
                %v2165 = vld [vmem:[%s2051 + $0xe0] sm:$0xf]
                %2166 = vst [vmem:[%s2052 + $0x1a0] sm:$0xf] %v2165
                %v2167 = vld [vmem:[%s2051 + $0xe4] sm:$0xf]
                %2168 = vst [vmem:[%s2052 + $0x1a4] sm:$0xf] %v2167
                %v2169 = vld [vmem:[%s2051 + $0xe8] sm:$0xf]
                %2170 = vst [vmem:[%s2052 + $0x1a8] sm:$0xf] %v2169
                %v2171 = vld [vmem:[%s2051 + $0xec] sm:$0xf]
                %2172 = vst [vmem:[%s2052 + $0x1ac] sm:$0xf] %v2171
                %v2173 = vld [vmem:[%s2051 + $0xf0] sm:$0xf]
                %2174 = vst [vmem:[%s2052 + $0x1b0] sm:$0xf] %v2173
                %v2175 = vld [vmem:[%s2051 + $0xf4] sm:$0xf]
                %2176 = vst [vmem:[%s2052 + $0x1b4] sm:$0xf] %v2175
                %v2177 = vld [vmem:[%s2051 + $0xf8] sm:$0xf]
                %2178 = vst [vmem:[%s2052 + $0x1b8] sm:$0xf] %v2177
                %v2179 = vld [vmem:[%s2051 + $0xfc] sm:$0xf]
                %2180 = vst [vmem:[%s2052 + $0x1bc] sm:$0xf] %v2179
              $region135: #{tpu_custom_call.1} parent=129 // loop_footer
                %s2050 = sadd.s32 1, %s2046
              $region136: #{tpu_custom_call.1} parent=129 // loop_footer_branch
                %2045 = sbr.rel target = $region132
              $region137: #{tpu_custom_call.1} parent=129 // loop_exit
                _
            $region130: #{tpu_custom_call.1} parent=121 // pred_fallthru
              _
          $region122: #{tpu_custom_call.1} parent=117 // pred_fallthru
            _
          %2328 = vnop
        $region118: #{tpu_custom_call.1} parent=31 // pred_fallthru
          _
      $region32: #{tpu_custom_call.1} parent=5 // pred_fallthru
        _
      %p2329 = scmp.le.s32.totalorder 2, %s12
      // Predicated region
      $region156: #{tpu_custom_call.1} parent=5 // pred_check
        %p2330 = pneg %p2329
      $region157: #{tpu_custom_call.1} parent=5 // pred_check_branch
        %2332 = sbr.rel (%p2330) target = $region159
      $region158: #{tpu_custom_call.1} parent=5 // pred_region
        %s2333 = ssub.s32 %s12, 2
        // Predicated region
        $region160: #{tpu_custom_call.1} parent=158 // pred_check
          %p2334 = pneg %p139
        $region161: #{tpu_custom_call.1} parent=158 // pred_check_branch
          %2336 = sbr.rel (%p2334) target = $region163
        $region162: #{tpu_custom_call.1} parent=158 // pred_region
          %s2337 = sand.u32 %s124, 1
          %s2338 = sand.u32 %s124, 1
          %s2339 = smul.addr %s2338, 256
          %s2340 = scalar_lea.vmem [#allocation2], %s2339
        $region163: #{tpu_custom_call.1} parent=158 // pred_fallthru
          _
        // Predicated region
        $region164: #{tpu_custom_call.1} parent=158 // pred_check
          %p2341 = pneg %p169
        $region165: #{tpu_custom_call.1} parent=158 // pred_check_branch
          %2343 = sbr.rel (%p2341) target = $region167
        $region166: #{tpu_custom_call.1} parent=158 // pred_region
          %s2344 = sand.u32 %s154, 1
          %s2345 = sand.u32 %s154, 1
          %s2346 = smul.addr %s2345, 256
          %s2347 = scalar_lea.vmem [#allocation3], %s2346
        $region167: #{tpu_custom_call.1} parent=158 // pred_fallthru
          _
        // Predicated region
        $region168: #{tpu_custom_call.1} parent=158 // pred_check
          %p2348 = pneg %p199
        $region169: #{tpu_custom_call.1} parent=158 // pred_check_branch
          %2350 = sbr.rel (%p2348) target = $region171
        $region170: #{tpu_custom_call.1} parent=158 // pred_region
          %s2351 = sand.u32 %s184, 1
          %s2352 = sand.u32 %s184, 1
          %s2353 = smul.addr %s2352, 256
          %s2354 = scalar_lea.vmem [#allocation4], %s2353
        $region171: #{tpu_custom_call.1} parent=158 // pred_fallthru
          _
      $region159: #{tpu_custom_call.1} parent=5 // pred_fallthru
        _
    $region6: #{tpu_custom_call.1} parent=1 // loop_footer
      %s16 = sadd.s32 1, %s12
    $region7: #{tpu_custom_call.1} parent=1 // loop_footer_branch
      %11 = sbr.rel target = $region3
    $region8: #{tpu_custom_call.1} parent=1 // loop_exit
      _

</llo_original>
